<compile_context>
chip_gen: v7x
topology: tpu7x:2x2x1
jax: 0.10.0
libtpu: 0.0.40
codegen_flags: <defaults>
</compile_context>

<pallas_src>
import functools

import jax
import jax.numpy as jnp
import numpy as np
from jax.experimental import pallas as pl
from jax.experimental.pallas import tpu as pltpu


# ---------------------------------------------------------------------------
# In-kernel helpers
# ---------------------------------------------------------------------------
def _write_taps3x3(slab_ref, x, ch_off):
    """Write the nine 3x3 'SAME' taps of x into slab_ref[:, :, ch_off:ch_off+9*cin].

    x        : (H, W, cin) bfloat16 value.
    K-order  : (ky, kx, cin) — matches w.reshape(9*cin, cout) of HWIO weights.
    Out-of-image taps are explicit zeros inside the stored values, so no
    separate slab zeroing is needed (and nothing is gated on program_id).
    Three full-height stores of width 3*cin (one per ky) instead of nine
    width-cin masked stores.
    """
    H, W, cin = x.shape
    zcol = jnp.zeros((H, 1, cin), x.dtype)
    # kx shifts packed along channels: [col c-1 | col c | col c+1]
    row3 = jnp.concatenate(
        [jnp.concatenate([zcol, x[:, :W - 1, :]], axis=1),        # kx = 0
         x,                                                        # kx = 1
         jnp.concatenate([x[:, 1:, :], zcol], axis=1)], axis=-1)   # kx = 2
    zrow = jnp.zeros((1, W, 3 * cin), x.dtype)
    # ky = 0 taps come from image row r-1 (dest row 0 is zero padding).
    slab_ref[:, :, ch_off:ch_off + 3 * cin] = jnp.concatenate(
        [zrow, row3[:H - 1]], axis=0)
    # ky = 1 taps come from image row r.
    slab_ref[:, :, ch_off + 3 * cin:ch_off + 6 * cin] = row3
    # ky = 2 taps come from image row r+1 (dest row H-1 is zero padding).
    slab_ref[:, :, ch_off + 6 * cin:ch_off + 9 * cin] = jnp.concatenate(
        [row3[1:], zrow], axis=0)


def _im2col_matmul(slab_ref, w_ref, b_ref):
    """(H*W, K) @ (K, Cout) on the MXU, f32 accumulation, + bias row."""
    Hs, Ws, K = slab_ref.shape
    lhs = slab_ref[...].reshape(Hs * Ws, K)            # bf16, free relayout
    return jnp.dot(lhs, w_ref[...],
                   preferred_element_type=jnp.float32) + b_ref[...]


# ---------------------------------------------------------------------------
# Fused ConvRNNStack kernel: conv stack + ConvGRU for one batch element
# ---------------------------------------------------------------------------
def _fused_convgru_kernel(x_ref, h_ref,
                          w1_ref, b1_ref, w2_ref, b2_ref, wg_ref, bg_ref,
                          o_ref,
                          slab1, slab2, slabg, *, C, F, gate_dtype):
    H, W, _ = x_ref.shape[1:]

    # conv stack with ReLU ("for conv in convs: x = act_fn(conv(x))")
    _write_taps3x3(slab1, x_ref[0].astype(jnp.bfloat16), 0)
    a = jnp.maximum(_im2col_matmul(slab1, w1_ref, b1_ref), 0.0)     # (H*W, F)
    _write_taps3x3(slab2, a.astype(jnp.bfloat16).reshape(H, W, F), 0)
    a = jnp.maximum(_im2col_matmul(slab2, w2_ref, b2_ref), 0.0)     # (H*W, F)

    # Fused GRU gate matmul: LHS = [im2col(a) | im2col(h)], N = 4C lane-dense.
    h = h_ref[0]                                                    # (H, W, C) f32
    _write_taps3x3(slabg, a.astype(jnp.bfloat16).reshape(H, W, F), 0)
    _write_taps3x3(slabg, h.astype(jnp.bfloat16), 9 * F)
    g = _im2col_matmul(slabg, wg_ref, bg_ref).astype(gate_dtype)    # (H*W, 4C)
    # cols [0:2C] = gx+gh for z,r ; [2C:3C] = gx_n ; [3C:4C] = gh_n

    hf = h.reshape(H * W, C).astype(gate_dtype)
    z = jax.nn.sigmoid(g[:, :C])
    r = jax.nn.sigmoid(g[:, C:2 * C])
    n = jnp.tanh(g[:, 2 * C:3 * C] + r * g[:, 3 * C:])
    h_new = (1.0 - z) * n + z * hf
    o_ref[0] = h_new.reshape(H, W, C).astype(o_ref.dtype)


# ---------------------------------------------------------------------------
# Wrapper: one pallas_call for the whole ConvRNNStack forward
# ---------------------------------------------------------------------------
def conv_rnn_stack_forward(params, x_nchw, hidden_nchw):
    """x: (B, Cin, H, W), hidden: (B, C, H, W)  ->  new hidden (B, C, H, W)."""
    x = jnp.transpose(x_nchw, (0, 2, 3, 1))       # NCHW -> NHWC
    h = jnp.transpose(hidden_nchw, (0, 2, 3, 1))
    B, H, W, Cin = x.shape
    C = h.shape[-1]
    (w1, b1), (w2, b2) = params["convs"]
    F = w1.shape[-1]
    # (H, W, K) <-> (H*W, K) in-kernel reshapes are free relayouts only when W
    # is a multiple of the sublane tile (8 for f32, 16 preferred for bf16).
    assert W % 8 == 0 and H % 8 == 0, "W (and H) must be multiples of 8"

    def wflat(w):   # (3,3,ci,co) -> (9*ci, co), bf16 MXU operand, (ky,kx,ci) rows
        return w.reshape(9 * w.shape[2], w.shape[3]).astype(jnp.bfloat16)

    def brow(b):
        return b.reshape(1, -1).astype(jnp.float32)

    # Pack the two gate convs into one RHS of shape (9F + 9C, 4C):
    #   rows [0:9F)   (a-taps):  [ Wx_zr | Wx_n |  0   ]
    #   rows [9F:9F+9C) (h-taps):[ Wh_zr |  0   | Wh_n ]
    wx, wh = wflat(params["gru_wx"]), wflat(params["gru_wh"])
    wg = jnp.concatenate([
        jnp.concatenate([wx[:, :2 * C], wx[:, 2 * C:],
                         jnp.zeros((9 * F, C), jnp.bfloat16)], axis=1),
        jnp.concatenate([wh[:, :2 * C],
                         jnp.zeros((9 * C, C), jnp.bfloat16),
                         wh[:, 2 * C:]], axis=1),
    ], axis=0)
    bx = params["gru_bx"].astype(jnp.float32)
    bh = params["gru_bh"].astype(jnp.float32)
    bg = jnp.concatenate([bx[:2 * C] + bh[:2 * C], bx[2 * C:], bh[2 * C:]]
                         ).reshape(1, 4 * C)

    # bf16 gate math only where the VPU/EUP have native bf16 paths.
    kind = jax.devices()[0].device_kind.lower()
    gate_dtype = jnp.bfloat16 if ("v6" in kind or "v7" in kind) else jnp.float32

    # Raise the scoped-VMEM limit well above the default (device-derived).
    try:
        cap = pltpu.get_tpu_info().vmem_capacity_bytes
        vmem_limit = min(int(0.75 * cap), 100 * 1024 * 1024)
    except Exception:
        vmem_limit = None

    def wspec(shape):
        return pl.BlockSpec(shape, lambda i: (0, 0))

    kern = functools.partial(_fused_convgru_kernel, C=C, F=F,
                             gate_dtype=gate_dtype)

    out = pl.pallas_call(
        kern,
        out_shape=jax.ShapeDtypeStruct((B, H, W, C), h.dtype),
        grid=(B,),
        in_specs=[
            pl.BlockSpec((1, H, W, Cin), lambda i: (i, 0, 0, 0)),
            pl.BlockSpec((1, H, W, C), lambda i: (i, 0, 0, 0)),
            wspec((9 * Cin, F)), wspec((1, F)),
            wspec((9 * F, F)), wspec((1, F)),
            wspec((9 * F + 9 * C, 4 * C)), wspec((1, 4 * C)),
        ],
        out_specs=pl.BlockSpec((1, H, W, C), lambda i: (i, 0, 0, 0)),
        scratch_shapes=[
            pltpu.VMEM((H, W, 9 * Cin), jnp.bfloat16),        # conv1 im2col
            pltpu.VMEM((H, W, 9 * F), jnp.bfloat16),          # conv2 im2col
            pltpu.VMEM((H, W, 9 * F + 9 * C), jnp.bfloat16),  # fused gate im2col
        ],
        input_output_aliases={1: 0},          # h_in aliases h_out (RIM step)
        compiler_params=pltpu.CompilerParams(
            dimension_semantics=("parallel",),
            vmem_limit_bytes=vmem_limit),
    )(x, h, wflat(w1), brow(b1), wflat(w2), brow(b2), wg, bg)
    return jnp.transpose(out, (0, 3, 1, 2))       # NHWC -> NCHW


# ---------------------------------------------------------------------------
# Pure-JAX reference (float32) for correctness check
# ---------------------------------------------------------------------------
def _conv_ref(x_nhwc, w, b):
    y = jax.lax.conv_general_dilated(
        x_nhwc, w, window_strides=(1, 1), padding="SAME",
        dimension_numbers=("NHWC", "HWIO", "NHWC"))
    return y + b


def conv_rnn_stack_reference(params, x_nchw, hidden_nchw):
    x = jnp.transpose(x_nchw, (0, 2, 3, 1))
    h = jnp.transpose(hidden_nchw, (0, 2, 3, 1))
    for (w, b) in params["convs"]:
        x = jax.nn.relu(_conv_ref(x, w, b))
    C = h.shape[-1]
    gx = _conv_ref(x, params["gru_wx"], params["gru_bx"])
    gh = _conv_ref(h, params["gru_wh"], params["gru_bh"])
    z = jax.nn.sigmoid(gx[..., :C] + gh[..., :C])
    r = jax.nn.sigmoid(gx[..., C:2 * C] + gh[..., C:2 * C])
    n = jnp.tanh(gx[..., 2 * C:] + r * gh[..., 2 * C:])
    h_new = (1.0 - z) * n + z * h
    return jnp.transpose(h_new, (0, 3, 1, 2))


# ---------------------------------------------------------------------------
# Parameter construction (deterministic, synthetic)
# ---------------------------------------------------------------------------
def make_params(key, cin, feat, chid):
    keys = jax.random.split(key, 8)

    def conv_init(kw, kb, ci, co):
        scale = 1.0 / np.sqrt(9 * ci)
        w = jax.random.uniform(kw, (3, 3, ci, co), jnp.float32, -scale, scale)
        b = jax.random.uniform(kb, (co,), jnp.float32, -scale, scale)
        return w, b

    convs = [conv_init(keys[0], keys[1], cin, feat),
             conv_init(keys[2], keys[3], feat, feat)]
    gru_wx, gru_bx = conv_init(keys[4], keys[5], feat, 3 * chid)
    gru_wh, gru_bh = conv_init(keys[6], keys[7], chid, 3 * chid)
    return {
        "convs": convs,
        "gru_wx": gru_wx, "gru_bx": gru_bx,
        "gru_wh": gru_wh, "gru_bh": gru_bh,
    }


# ---------------------------------------------------------------------------
if __name__ == "__main__":
    B, Cin, H, W = 2, 4, 16, 16
    FEAT = 32      # conv-stack feature channels
    CHID = 32      # hidden-state channels of the ConvGRU (4*CHID = 128 lanes)

    key = jax.random.PRNGKey(0)
    kx, kh, kp = jax.random.split(key, 3)
    x = jax.random.normal(kx, (B, Cin, H, W), jnp.float32)
    hidden = jax.random.normal(kh, (B, CHID, H, W), jnp.float32)
    params = make_params(kp, Cin, FEAT, CHID)

    fwd = jax.jit(conv_rnn_stack_forward)
    out = fwd(params, x, hidden)
    out = jax.block_until_ready(out)

    # Tolerance covers bf16 matmul operands (f32 accumulate) and (on v6e/v7x)
    # bf16 gate elementwise math.
    ref = conv_rnn_stack_reference(params, x, hidden)
    np.testing.assert_allclose(np.asarray(out), np.asarray(ref),
                               rtol=5e-2, atol=5e-2)
    print("KERNEL_OK")
</pallas_src>

<mosaic_0001>
module attributes {stable_mosaic.version = 11 : i64} {
  func.func @_fused_convgru_kernel(%arg0: i32, %arg1: memref<1x16x16x4xf32, #tpu.memory_space<vmem>>, %arg2: memref<1x16x16x32xf32, #tpu.memory_space<vmem>>, %arg3: memref<36x32xbf16, #tpu.memory_space<vmem>>, %arg4: memref<1x32xf32, #tpu.memory_space<vmem>>, %arg5: memref<288x32xbf16, #tpu.memory_space<vmem>>, %arg6: memref<1x32xf32, #tpu.memory_space<vmem>>, %arg7: memref<576x128xbf16, #tpu.memory_space<vmem>>, %arg8: memref<1x128xf32, #tpu.memory_space<vmem>>, %arg9: memref<1x16x16x32xf32, #tpu.memory_space<vmem>>, %arg10: memref<16x16x36xbf16, #tpu.memory_space<vmem>>, %arg11: memref<16x16x288xbf16, #tpu.memory_space<vmem>>, %arg12: memref<16x16x576xbf16, #tpu.memory_space<vmem>>) attributes {dimension_semantics = [#tpu.dimension_semantics<parallel>], iteration_bounds = array<i64: 2>, scalar_prefetch = 0 : i64, scratch_operands = 3 : i64, tpu.core_type = #tpu.core_type<tc>, window_params = [{transform_indices = @transform_0, window_bounds = array<i64: 1, 16, 16, 4>}, {transform_indices = @transform_1, window_bounds = array<i64: 1, 16, 16, 32>}, {pipeline_mode = #tpu.pipeline_mode<synchronous>, transform_indices = @transform_2, window_bounds = array<i64: 36, 32>}, {pipeline_mode = #tpu.pipeline_mode<synchronous>, transform_indices = @transform_3, window_bounds = array<i64: 1, 32>}, {pipeline_mode = #tpu.pipeline_mode<synchronous>, transform_indices = @transform_4, window_bounds = array<i64: 288, 32>}, {pipeline_mode = #tpu.pipeline_mode<synchronous>, transform_indices = @transform_5, window_bounds = array<i64: 1, 32>}, {pipeline_mode = #tpu.pipeline_mode<synchronous>, transform_indices = @transform_6, window_bounds = array<i64: 576, 128>}, {pipeline_mode = #tpu.pipeline_mode<synchronous>, transform_indices = @transform_7, window_bounds = array<i64: 1, 128>}, {transform_indices = @transform_8, window_bounds = array<i64: 1, 16, 16, 32>}]} {
    %c0 = arith.constant 0 : index
    %c0_0 = arith.constant 0 : index
    %c0_1 = arith.constant 0 : index
    %c0_2 = arith.constant 0 : index
    %0 = vector.load %arg1[%c0, %c0_0, %c0_1, %c0_2] : memref<1x16x16x4xf32, #tpu.memory_space<vmem>>, vector<1x16x16x4xf32>
    %1 = vector.shape_cast %0 : vector<1x16x16x4xf32> to vector<16x16x4xf32>
    %2 = arith.truncf %1 : vector<16x16x4xf32> to vector<16x16x4xbf16>
    %cst = arith.constant 0.000000e+00 : bf16
    %3 = vector.broadcast %cst : bf16 to vector<16x1x4xbf16>
    %4 = vector.extract_strided_slice %2 {offsets = [0, 0, 0], sizes = [16, 15, 4], strides = [1, 1, 1]} : vector<16x16x4xbf16> to vector<16x15x4xbf16>
    %5 = tpu.concatenate %3, %4 in 1 : vector<16x1x4xbf16>, vector<16x15x4xbf16> -> vector<16x16x4xbf16>
    %6 = vector.extract_strided_slice %2 {offsets = [0, 1, 0], sizes = [16, 15, 4], strides = [1, 1, 1]} : vector<16x16x4xbf16> to vector<16x15x4xbf16>
    %7 = tpu.concatenate %6, %3 in 1 : vector<16x15x4xbf16>, vector<16x1x4xbf16> -> vector<16x16x4xbf16>
    %8 = tpu.concatenate %5, %2, %7 in 2 : vector<16x16x4xbf16>, vector<16x16x4xbf16>, vector<16x16x4xbf16> -> vector<16x16x12xbf16>
    %cst_3 = arith.constant 0.000000e+00 : bf16
    %9 = vector.broadcast %cst_3 : bf16 to vector<1x16x12xbf16>
    %10 = vector.extract_strided_slice %8 {offsets = [0, 0, 0], sizes = [15, 16, 12], strides = [1, 1, 1]} : vector<16x16x12xbf16> to vector<15x16x12xbf16>
    %11 = tpu.concatenate %9, %10 in 0 : vector<1x16x12xbf16>, vector<15x16x12xbf16> -> vector<16x16x12xbf16>
    %c0_4 = arith.constant 0 : index
    %c0_5 = arith.constant 0 : index
    %c0_6 = arith.constant 0 : index
    %12 = vector.load %arg10[%c0_4, %c0_5, %c0_6] : memref<16x16x36xbf16, #tpu.memory_space<vmem>>, vector<16x16x12xbf16>
    tpu.vector_store %arg10[%c0_4, %c0_5, %c0_6], %11 {strides = array<i32>} : memref<16x16x36xbf16, #tpu.memory_space<vmem>>, vector<16x16x12xbf16>,
    %c0_7 = arith.constant 0 : index
    %c0_8 = arith.constant 0 : index
    %c12 = arith.constant 12 : index
    %13 = vector.load %arg10[%c0_7, %c0_8, %c12] : memref<16x16x36xbf16, #tpu.memory_space<vmem>>, vector<16x16x12xbf16>
    tpu.vector_store %arg10[%c0_7, %c0_8, %c12], %8 {strides = array<i32>} : memref<16x16x36xbf16, #tpu.memory_space<vmem>>, vector<16x16x12xbf16>,
    %14 = vector.extract_strided_slice %8 {offsets = [1, 0, 0], sizes = [15, 16, 12], strides = [1, 1, 1]} : vector<16x16x12xbf16> to vector<15x16x12xbf16>
    %15 = tpu.concatenate %14, %9 in 0 : vector<15x16x12xbf16>, vector<1x16x12xbf16> -> vector<16x16x12xbf16>
    %c0_9 = arith.constant 0 : index
    %c0_10 = arith.constant 0 : index
    %c24 = arith.constant 24 : index
    %16 = vector.load %arg10[%c0_9, %c0_10, %c24] : memref<16x16x36xbf16, #tpu.memory_space<vmem>>, vector<16x16x12xbf16>
    tpu.vector_store %arg10[%c0_9, %c0_10, %c24], %15 {strides = array<i32>} : memref<16x16x36xbf16, #tpu.memory_space<vmem>>, vector<16x16x12xbf16>,
    %c0_11 = arith.constant 0 : index
    %c0_12 = arith.constant 0 : index
    %c0_13 = arith.constant 0 : index
    %17 = vector.load %arg10[%c0_11, %c0_12, %c0_13] : memref<16x16x36xbf16, #tpu.memory_space<vmem>>, vector<16x16x36xbf16>
    %18 = vector.shape_cast %17 : vector<16x16x36xbf16> to vector<256x36xbf16>
    %c0_14 = arith.constant 0 : index
    %c0_15 = arith.constant 0 : index
    %19 = vector.load %arg3[%c0_14, %c0_15] : memref<36x32xbf16, #tpu.memory_space<vmem>>, vector<36x32xbf16>
    %cst_16 = arith.constant dense<0.000000e+00> : vector<256x32xf32>
    %20 = tpu.matmul %18, %19, %cst_16 {dimension_numbers = #tpu.dot_dimension_numbers<[1], [0], [0], [1], [0, 0, 1, 1], [], []>} : vector<256x36xbf16>, vector<36x32xbf16>, vector<256x32xf32> -> vector<256x32xf32>
    %c0_17 = arith.constant 0 : index
    %c0_18 = arith.constant 0 : index
    %21 = vector.load %arg4[%c0_17, %c0_18] : memref<1x32xf32, #tpu.memory_space<vmem>>, vector<1x32xf32>
    %22 = vector.broadcast %21 : vector<1x32xf32> to vector<256x32xf32>
    %23 = arith.addf %20, %22 : vector<256x32xf32>
    %cst_19 = arith.constant 0.000000e+00 : f32
    %24 = vector.broadcast %cst_19 : f32 to vector<256x32xf32>
    %25 = arith.maximumf %23, %24 : vector<256x32xf32>
    %26 = arith.truncf %25 : vector<256x32xf32> to vector<256x32xbf16>
    %27 = vector.shape_cast %26 : vector<256x32xbf16> to vector<16x16x32xbf16>
    %cst_20 = arith.constant 0.000000e+00 : bf16
    %28 = vector.broadcast %cst_20 : bf16 to vector<16x1x32xbf16>
    %29 = vector.extract_strided_slice %27 {offsets = [0, 0, 0], sizes = [16, 15, 32], strides = [1, 1, 1]} : vector<16x16x32xbf16> to vector<16x15x32xbf16>
    %30 = tpu.concatenate %28, %29 in 1 : vector<16x1x32xbf16>, vector<16x15x32xbf16> -> vector<16x16x32xbf16>
    %31 = vector.extract_strided_slice %27 {offsets = [0, 1, 0], sizes = [16, 15, 32], strides = [1, 1, 1]} : vector<16x16x32xbf16> to vector<16x15x32xbf16>
    %32 = tpu.concatenate %31, %28 in 1 : vector<16x15x32xbf16>, vector<16x1x32xbf16> -> vector<16x16x32xbf16>
    %33 = tpu.concatenate %30, %27, %32 in 2 : vector<16x16x32xbf16>, vector<16x16x32xbf16>, vector<16x16x32xbf16> -> vector<16x16x96xbf16>
    %cst_21 = arith.constant 0.000000e+00 : bf16
    %34 = vector.broadcast %cst_21 : bf16 to vector<1x16x96xbf16>
    %35 = vector.extract_strided_slice %33 {offsets = [0, 0, 0], sizes = [15, 16, 96], strides = [1, 1, 1]} : vector<16x16x96xbf16> to vector<15x16x96xbf16>
    %36 = tpu.concatenate %34, %35 in 0 : vector<1x16x96xbf16>, vector<15x16x96xbf16> -> vector<16x16x96xbf16>
    %c0_22 = arith.constant 0 : index
    %c0_23 = arith.constant 0 : index
    %c0_24 = arith.constant 0 : index
    %37 = vector.load %arg11[%c0_22, %c0_23, %c0_24] : memref<16x16x288xbf16, #tpu.memory_space<vmem>>, vector<16x16x96xbf16>
    tpu.vector_store %arg11[%c0_22, %c0_23, %c0_24], %36 {strides = array<i32>} : memref<16x16x288xbf16, #tpu.memory_space<vmem>>, vector<16x16x96xbf16>,
    %c0_25 = arith.constant 0 : index
    %c0_26 = arith.constant 0 : index
    %c96 = arith.constant 96 : index
    %38 = vector.load %arg11[%c0_25, %c0_26, %c96] : memref<16x16x288xbf16, #tpu.memory_space<vmem>>, vector<16x16x96xbf16>
    tpu.vector_store %arg11[%c0_25, %c0_26, %c96], %33 {strides = array<i32>} : memref<16x16x288xbf16, #tpu.memory_space<vmem>>, vector<16x16x96xbf16>,
    %39 = vector.extract_strided_slice %33 {offsets = [1, 0, 0], sizes = [15, 16, 96], strides = [1, 1, 1]} : vector<16x16x96xbf16> to vector<15x16x96xbf16>
    %40 = tpu.concatenate %39, %34 in 0 : vector<15x16x96xbf16>, vector<1x16x96xbf16> -> vector<16x16x96xbf16>
    %c0_27 = arith.constant 0 : index
    %c0_28 = arith.constant 0 : index
    %c192 = arith.constant 192 : index
    %41 = vector.load %arg11[%c0_27, %c0_28, %c192] : memref<16x16x288xbf16, #tpu.memory_space<vmem>>, vector<16x16x96xbf16>
    tpu.vector_store %arg11[%c0_27, %c0_28, %c192], %40 {strides = array<i32>} : memref<16x16x288xbf16, #tpu.memory_space<vmem>>, vector<16x16x96xbf16>,
    %c0_29 = arith.constant 0 : index
    %c0_30 = arith.constant 0 : index
    %c0_31 = arith.constant 0 : index
    %42 = vector.load %arg11[%c0_29, %c0_30, %c0_31] : memref<16x16x288xbf16, #tpu.memory_space<vmem>>, vector<16x16x288xbf16>
    %43 = vector.shape_cast %42 : vector<16x16x288xbf16> to vector<256x288xbf16>
    %c0_32 = arith.constant 0 : index
    %c0_33 = arith.constant 0 : index
    %44 = vector.load %arg5[%c0_32, %c0_33] : memref<288x32xbf16, #tpu.memory_space<vmem>>, vector<288x32xbf16>
    %cst_34 = arith.constant dense<0.000000e+00> : vector<256x32xf32>
    %45 = tpu.matmul %43, %44, %cst_34 {dimension_numbers = #tpu.dot_dimension_numbers<[1], [0], [0], [1], [0, 0, 1, 1], [], []>} : vector<256x288xbf16>, vector<288x32xbf16>, vector<256x32xf32> -> vector<256x32xf32>
    %c0_35 = arith.constant 0 : index
    %c0_36 = arith.constant 0 : index
    %46 = vector.load %arg6[%c0_35, %c0_36] : memref<1x32xf32, #tpu.memory_space<vmem>>, vector<1x32xf32>
    %47 = vector.broadcast %46 : vector<1x32xf32> to vector<256x32xf32>
    %48 = arith.addf %45, %47 : vector<256x32xf32>
    %cst_37 = arith.constant 0.000000e+00 : f32
    %49 = vector.broadcast %cst_37 : f32 to vector<256x32xf32>
    %50 = arith.maximumf %48, %49 : vector<256x32xf32>
    %c0_38 = arith.constant 0 : index
    %c0_39 = arith.constant 0 : index
    %c0_40 = arith.constant 0 : index
    %c0_41 = arith.constant 0 : index
    %51 = vector.load %arg2[%c0_38, %c0_39, %c0_40, %c0_41] : memref<1x16x16x32xf32, #tpu.memory_space<vmem>>, vector<1x16x16x32xf32>
    %52 = vector.shape_cast %51 : vector<1x16x16x32xf32> to vector<16x16x32xf32>
    %53 = arith.truncf %50 : vector<256x32xf32> to vector<256x32xbf16>
    %54 = vector.shape_cast %53 : vector<256x32xbf16> to vector<16x16x32xbf16>
    %cst_42 = arith.constant 0.000000e+00 : bf16
    %55 = vector.broadcast %cst_42 : bf16 to vector<16x1x32xbf16>
    %56 = vector.extract_strided_slice %54 {offsets = [0, 0, 0], sizes = [16, 15, 32], strides = [1, 1, 1]} : vector<16x16x32xbf16> to vector<16x15x32xbf16>
    %57 = tpu.concatenate %55, %56 in 1 : vector<16x1x32xbf16>, vector<16x15x32xbf16> -> vector<16x16x32xbf16>
    %58 = vector.extract_strided_slice %54 {offsets = [0, 1, 0], sizes = [16, 15, 32], strides = [1, 1, 1]} : vector<16x16x32xbf16> to vector<16x15x32xbf16>
    %59 = tpu.concatenate %58, %55 in 1 : vector<16x15x32xbf16>, vector<16x1x32xbf16> -> vector<16x16x32xbf16>
    %60 = tpu.concatenate %57, %54, %59 in 2 : vector<16x16x32xbf16>, vector<16x16x32xbf16>, vector<16x16x32xbf16> -> vector<16x16x96xbf16>
    %cst_43 = arith.constant 0.000000e+00 : bf16
    %61 = vector.broadcast %cst_43 : bf16 to vector<1x16x96xbf16>
    %62 = vector.extract_strided_slice %60 {offsets = [0, 0, 0], sizes = [15, 16, 96], strides = [1, 1, 1]} : vector<16x16x96xbf16> to vector<15x16x96xbf16>
    %63 = tpu.concatenate %61, %62 in 0 : vector<1x16x96xbf16>, vector<15x16x96xbf16> -> vector<16x16x96xbf16>
    %c0_44 = arith.constant 0 : index
    %c0_45 = arith.constant 0 : index
    %c0_46 = arith.constant 0 : index
    %64 = vector.load %arg12[%c0_44, %c0_45, %c0_46] : memref<16x16x576xbf16, #tpu.memory_space<vmem>>, vector<16x16x96xbf16>
    tpu.vector_store %arg12[%c0_44, %c0_45, %c0_46], %63 {strides = array<i32>} : memref<16x16x576xbf16, #tpu.memory_space<vmem>>, vector<16x16x96xbf16>,
    %c0_47 = arith.constant 0 : index
    %c0_48 = arith.constant 0 : index
    %c96_49 = arith.constant 96 : index
    %65 = vector.load %arg12[%c0_47, %c0_48, %c96_49] : memref<16x16x576xbf16, #tpu.memory_space<vmem>>, vector<16x16x96xbf16>
    tpu.vector_store %arg12[%c0_47, %c0_48, %c96_49], %60 {strides = array<i32>} : memref<16x16x576xbf16, #tpu.memory_space<vmem>>, vector<16x16x96xbf16>,
    %66 = vector.extract_strided_slice %60 {offsets = [1, 0, 0], sizes = [15, 16, 96], strides = [1, 1, 1]} : vector<16x16x96xbf16> to vector<15x16x96xbf16>
    %67 = tpu.concatenate %66, %61 in 0 : vector<15x16x96xbf16>, vector<1x16x96xbf16> -> vector<16x16x96xbf16>
    %c0_50 = arith.constant 0 : index
    %c0_51 = arith.constant 0 : index
    %c192_52 = arith.constant 192 : index
    %68 = vector.load %arg12[%c0_50, %c0_51, %c192_52] : memref<16x16x576xbf16, #tpu.memory_space<vmem>>, vector<16x16x96xbf16>
    tpu.vector_store %arg12[%c0_50, %c0_51, %c192_52], %67 {strides = array<i32>} : memref<16x16x576xbf16, #tpu.memory_space<vmem>>, vector<16x16x96xbf16>,
    %69 = arith.truncf %52 : vector<16x16x32xf32> to vector<16x16x32xbf16>
    %cst_53 = arith.constant 0.000000e+00 : bf16
    %70 = vector.broadcast %cst_53 : bf16 to vector<16x1x32xbf16>
    %71 = vector.extract_strided_slice %69 {offsets = [0, 0, 0], sizes = [16, 15, 32], strides = [1, 1, 1]} : vector<16x16x32xbf16> to vector<16x15x32xbf16>
    %72 = tpu.concatenate %70, %71 in 1 : vector<16x1x32xbf16>, vector<16x15x32xbf16> -> vector<16x16x32xbf16>
    %73 = vector.extract_strided_slice %69 {offsets = [0, 1, 0], sizes = [16, 15, 32], strides = [1, 1, 1]} : vector<16x16x32xbf16> to vector<16x15x32xbf16>
    %74 = tpu.concatenate %73, %70 in 1 : vector<16x15x32xbf16>, vector<16x1x32xbf16> -> vector<16x16x32xbf16>
    %75 = tpu.concatenate %72, %69, %74 in 2 : vector<16x16x32xbf16>, vector<16x16x32xbf16>, vector<16x16x32xbf16> -> vector<16x16x96xbf16>
    %cst_54 = arith.constant 0.000000e+00 : bf16
    %76 = vector.broadcast %cst_54 : bf16 to vector<1x16x96xbf16>
    %77 = vector.extract_strided_slice %75 {offsets = [0, 0, 0], sizes = [15, 16, 96], strides = [1, 1, 1]} : vector<16x16x96xbf16> to vector<15x16x96xbf16>
    %78 = tpu.concatenate %76, %77 in 0 : vector<1x16x96xbf16>, vector<15x16x96xbf16> -> vector<16x16x96xbf16>
    %c0_55 = arith.constant 0 : index
    %c0_56 = arith.constant 0 : index
    %c288 = arith.constant 288 : index
    %79 = vector.load %arg12[%c0_55, %c0_56, %c288] : memref<16x16x576xbf16, #tpu.memory_space<vmem>>, vector<16x16x96xbf16>
    tpu.vector_store %arg12[%c0_55, %c0_56, %c288], %78 {strides = array<i32>} : memref<16x16x576xbf16, #tpu.memory_space<vmem>>, vector<16x16x96xbf16>,
    %c0_57 = arith.constant 0 : index
    %c0_58 = arith.constant 0 : index
    %c384 = arith.constant 384 : index
    %80 = vector.load %arg12[%c0_57, %c0_58, %c384] : memref<16x16x576xbf16, #tpu.memory_space<vmem>>, vector<16x16x96xbf16>
    tpu.vector_store %arg12[%c0_57, %c0_58, %c384], %75 {strides = array<i32>} : memref<16x16x576xbf16, #tpu.memory_space<vmem>>, vector<16x16x96xbf16>,
    %81 = vector.extract_strided_slice %75 {offsets = [1, 0, 0], sizes = [15, 16, 96], strides = [1, 1, 1]} : vector<16x16x96xbf16> to vector<15x16x96xbf16>
    %82 = tpu.concatenate %81, %76 in 0 : vector<15x16x96xbf16>, vector<1x16x96xbf16> -> vector<16x16x96xbf16>
    %c0_59 = arith.constant 0 : index
    %c0_60 = arith.constant 0 : index
    %c480 = arith.constant 480 : index
    %83 = vector.load %arg12[%c0_59, %c0_60, %c480] : memref<16x16x576xbf16, #tpu.memory_space<vmem>>, vector<16x16x96xbf16>
    tpu.vector_store %arg12[%c0_59, %c0_60, %c480], %82 {strides = array<i32>} : memref<16x16x576xbf16, #tpu.memory_space<vmem>>, vector<16x16x96xbf16>,
    %c0_61 = arith.constant 0 : index
    %c0_62 = arith.constant 0 : index
    %c0_63 = arith.constant 0 : index
    %84 = vector.load %arg12[%c0_61, %c0_62, %c0_63] : memref<16x16x576xbf16, #tpu.memory_space<vmem>>, vector<16x16x576xbf16>
    %85 = vector.shape_cast %84 : vector<16x16x576xbf16> to vector<256x576xbf16>
    %c0_64 = arith.constant 0 : index
    %c0_65 = arith.constant 0 : index
    %86 = vector.load %arg7[%c0_64, %c0_65] : memref<576x128xbf16, #tpu.memory_space<vmem>>, vector<576x128xbf16>
    %cst_66 = arith.constant dense<0.000000e+00> : vector<256x128xf32>
    %87 = tpu.matmul %85, %86, %cst_66 {dimension_numbers = #tpu.dot_dimension_numbers<[1], [0], [0], [1], [0, 0, 1, 1], [], []>} : vector<256x576xbf16>, vector<576x128xbf16>, vector<256x128xf32> -> vector<256x128xf32>
    %c0_67 = arith.constant 0 : index
    %c0_68 = arith.constant 0 : index
    %88 = vector.load %arg8[%c0_67, %c0_68] : memref<1x128xf32, #tpu.memory_space<vmem>>, vector<1x128xf32>
    %89 = vector.broadcast %88 : vector<1x128xf32> to vector<256x128xf32>
    %90 = arith.addf %87, %89 : vector<256x128xf32>
    %91 = vector.shape_cast %52 : vector<16x16x32xf32> to vector<256x32xf32>
    %92 = vector.extract_strided_slice %90 {offsets = [0, 0], sizes = [256, 32], strides = [1, 1]} : vector<256x128xf32> to vector<256x32xf32>
    %93 = arith.negf %92 : vector<256x32xf32>
    %94 = math.exp %93 : vector<256x32xf32>
    %cst_69 = arith.constant 1.000000e+00 : f32
    %95 = vector.broadcast %cst_69 : f32 to vector<256x32xf32>
    %96 = arith.addf %95, %94 : vector<256x32xf32>
    %97 = arith.divf %95, %96 : vector<256x32xf32>
    %98 = vector.extract_strided_slice %90 {offsets = [0, 32], sizes = [256, 32], strides = [1, 1]} : vector<256x128xf32> to vector<256x32xf32>
    %99 = arith.negf %98 : vector<256x32xf32>
    %100 = math.exp %99 : vector<256x32xf32>
    %cst_70 = arith.constant 1.000000e+00 : f32
    %101 = vector.broadcast %cst_70 : f32 to vector<256x32xf32>
    %102 = arith.addf %101, %100 : vector<256x32xf32>
    %103 = arith.divf %101, %102 : vector<256x32xf32>
    %104 = vector.extract_strided_slice %90 {offsets = [0, 64], sizes = [256, 32], strides = [1, 1]} : vector<256x128xf32> to vector<256x32xf32>
    %105 = vector.extract_strided_slice %90 {offsets = [0, 96], sizes = [256, 32], strides = [1, 1]} : vector<256x128xf32> to vector<256x32xf32>
    %106 = arith.mulf %103, %105 : vector<256x32xf32>
    %107 = arith.addf %104, %106 : vector<256x32xf32>
    %108 = math.tanh %107 : vector<256x32xf32>
    %cst_71 = arith.constant 1.000000e+00 : f32
    %109 = vector.broadcast %cst_71 : f32 to vector<256x32xf32>
    %110 = arith.subf %109, %97 : vector<256x32xf32>
    %111 = arith.mulf %110, %108 : vector<256x32xf32>
    %112 = arith.mulf %97, %91 : vector<256x32xf32>
    %113 = arith.addf %111, %112 : vector<256x32xf32>
    %114 = vector.shape_cast %113 : vector<256x32xf32> to vector<16x16x32xf32>
    %c0_72 = arith.constant 0 : index
    %c0_73 = arith.constant 0 : index
    %c0_74 = arith.constant 0 : index
    %c0_75 = arith.constant 0 : index
    %115 = vector.load %arg9[%c0_72, %c0_73, %c0_74, %c0_75] : memref<1x16x16x32xf32, #tpu.memory_space<vmem>>, vector<1x16x16x32xf32>
    %116 = vector.shape_cast %115 : vector<1x16x16x32xf32> to vector<16x16x32xf32>
    %117 = vector.shape_cast %114 : vector<16x16x32xf32> to vector<1x16x16x32xf32>
    tpu.vector_store %arg9[%c0_72, %c0_73, %c0_74, %c0_75], %117 {strides = array<i32>} : memref<1x16x16x32xf32, #tpu.memory_space<vmem>>, vector<1x16x16x32xf32>,
    return
  }
  func.func @transform_0(%arg0: i32) -> (i32, i32, i32, i32) {
    %c0_i32 = arith.constant 0 : i32
    %c0_i32_0 = arith.constant 0 : i32
    %c0_i32_1 = arith.constant 0 : i32
    %c0_i32_2 = arith.constant 0 : i32
    return %arg0, %c0_i32, %c0_i32_0, %c0_i32_1 : i32, i32, i32, i32
  }
  func.func @transform_1(%arg0: i32) -> (i32, i32, i32, i32) {
    %c0_i32 = arith.constant 0 : i32
    %c0_i32_0 = arith.constant 0 : i32
    %c0_i32_1 = arith.constant 0 : i32
    %c0_i32_2 = arith.constant 0 : i32
    return %arg0, %c0_i32, %c0_i32_0, %c0_i32_1 : i32, i32, i32, i32
  }
  func.func @transform_2(%arg0: i32) -> (i32, i32) {
    %c0_i32 = arith.constant 0 : i32
    %c0_i32_0 = arith.constant 0 : i32
    %c0_i32_1 = arith.constant 0 : i32
    return %c0_i32, %c0_i32_0 : i32, i32
  }
  func.func @transform_3(%arg0: i32) -> (i32, i32) {
    %c0_i32 = arith.constant 0 : i32
    %c0_i32_0 = arith.constant 0 : i32
    %c0_i32_1 = arith.constant 0 : i32
    return %c0_i32, %c0_i32_0 : i32, i32
  }
  func.func @transform_4(%arg0: i32) -> (i32, i32) {
    %c0_i32 = arith.constant 0 : i32
    %c0_i32_0 = arith.constant 0 : i32
    %c0_i32_1 = arith.constant 0 : i32
    return %c0_i32, %c0_i32_0 : i32, i32
  }
  func.func @transform_5(%arg0: i32) -> (i32, i32) {
    %c0_i32 = arith.constant 0 : i32
    %c0_i32_0 = arith.constant 0 : i32
    %c0_i32_1 = arith.constant 0 : i32
    return %c0_i32, %c0_i32_0 : i32, i32
  }
  func.func @transform_6(%arg0: i32) -> (i32, i32) {
    %c0_i32 = arith.constant 0 : i32
    %c0_i32_0 = arith.constant 0 : i32
    %c0_i32_1 = arith.constant 0 : i32
    return %c0_i32, %c0_i32_0 : i32, i32
  }
  func.func @transform_7(%arg0: i32) -> (i32, i32) {
    %c0_i32 = arith.constant 0 : i32
    %c0_i32_0 = arith.constant 0 : i32
    %c0_i32_1 = arith.constant 0 : i32
    return %c0_i32, %c0_i32_0 : i32, i32
  }
  func.func @transform_8(%arg0: i32) -> (i32, i32, i32, i32) {
    %c0_i32 = arith.constant 0 : i32
    %c0_i32_0 = arith.constant 0 : i32
    %c0_i32_1 = arith.constant 0 : i32
    %c0_i32_2 = arith.constant 0 : i32
    return %arg0, %c0_i32, %c0_i32_0, %c0_i32_1 : i32, i32, i32, i32
  }
}

</mosaic_0001>

<llo_original>
// kernel: conv_rnn_stack_forward.1
$region0: #{conv_rnn_stack_forward.1}
  #allocation0 [shape = 'u32[]', space=smem, size = 0x4, offset = 0x4, fixed_abs, tag = 'smem constant byte address 0x4 - core index']
  #allocation1 [shape = 'u32[144,128]{1,0:T(1,128)}', space=vmem, size = 0x12000, scoped, tag = 'internal scratch']
  #allocation2 [shape = 'bf16[16,16,36]{2,1,0:T(16,128)(2,1)}', space=vmem, size = 0x10000, scoped, tag = 'scratch operand']
  #allocation3 [shape = 'bf16[16,16,288]{2,1,0:T(16,128)(2,1)}', space=vmem, size = 0x30000, scoped, tag = 'scratch operand']
  #allocation4 [shape = 'bf16[16,16,576]{2,1,0:T(16,128)(2,1)}', space=vmem, size = 0x50000, scoped, tag = 'scratch operand']
  %s0 = inlined_call_operand.vmem [shape: f32[2,16,16,4], index: 0, kind: input, shape index: {}]
  %s1 = inlined_call_operand.vmem [shape: f32[2,16,16,32], index: 1, kind: input, shape index: {}, may-alias: {1,8}]
  %s2 = inlined_call_operand.vmem [shape: bf16[36,32], index: 2, kind: input, shape index: {}]
  %s3 = inlined_call_operand.vmem [shape: f32[1,32], index: 3, kind: input, shape index: {}]
  %s4 = inlined_call_operand.vmem [shape: bf16[288,32], index: 4, kind: input, shape index: {}]
  %s5 = inlined_call_operand.vmem [shape: f32[1,32], index: 5, kind: input, shape index: {}]
  %s6 = inlined_call_operand.vmem [shape: bf16[576,128], index: 6, kind: input, shape index: {}]
  %s7 = inlined_call_operand.vmem [shape: f32[1,128], index: 7, kind: input, shape index: {}]
  %s8 = inlined_call_operand.vmem [shape: f32[2,16,16,32], index: 8, kind: output, shape index: {}, may-alias: {1,8}]
  %s9 = sld [smem:[#allocation0]]
  $region65: #{conv_rnn_stack_forward.1} parent=0
    _
  %s11 = ssub.s32 1, %s9
  %s12 = scalar_select 0, %s11, %s9
  loop: start=0, step=1, limit=4
  $region2: #{conv_rnn_stack_forward.1} parent=0 // loop_pre_header
    _
  $region3: #{conv_rnn_stack_forward.1} parent=0 // loop_header
    %s14 = sphi 0, %s18
    %p15 = scmp.ge.s32.totalorder %s14, 4
    %s24 = sphi 0, %s26
    %s27 = sphi 0, %s24
    %s28 = sphi 0, %s27
    %s44 = sphi 0, %s28
    %s50 = sphi 0, %s52
    %s53 = sphi 0, %s50
    %s54 = sphi 0, %s53
    %s70 = sphi 0, %s54
    %s74 = sphi 0, %s74
    %s76 = sphi 0, %s74
    %s77 = sphi 0, %s76
    %s91 = sphi 0, %s77
    %s95 = sphi 0, %s95
    %s97 = sphi 0, %s95
    %s98 = sphi 0, %s97
    %s112 = sphi 0, %s98
    %s116 = sphi 0, %s116
    %s118 = sphi 0, %s116
    %s119 = sphi 0, %s118
    %s133 = sphi 0, %s119
    %s137 = sphi 0, %s137
    %s139 = sphi 0, %s137
    %s140 = sphi 0, %s139
    %s154 = sphi 0, %s140
    %s158 = sphi 0, %s158
    %s160 = sphi 0, %s158
    %s161 = sphi 0, %s160
    %s175 = sphi 0, %s161
    %s179 = sphi 0, %s179
    %s181 = sphi 0, %s179
    %s182 = sphi 0, %s181
    %s196 = sphi 0, %s182
    %s202 = sphi 0, %s204
    %s205 = sphi 0, %s202
    %s206 = sphi 0, %s205
    %s222 = sphi 0, %s206
  $region4: #{conv_rnn_stack_forward.1} parent=0 // loop_header_branch
    %17 = sbr.rel (%p15) target = $region8
  $region5: #{conv_rnn_stack_forward.1} parent=0 // loop_body
    %s19 = ssub.s32 %s14, 1
    %s20 = ssub.s32 %s14, 2
    %s21 = sadd.s32 %s14, 1
    %s22 = ssub.s32 %s14, %s21
    %p23 = scmp.eq.s32.totalorder %s22, 0
    %s25 = sadd.s32 %s24, 1
    %s26 = scalar_select %p23, %s24, %s25
    %p29 = pneg %p23
    %p30 = scmp.eq.s32.totalorder %s14, 1
    %p31 = por %p29, %p30
    %p32 = scmp.ne.s32.totalorder %s24, %s27
    %p33 = scmp.eq.s32.totalorder %s14, 0
    %p34 = por %p32, %p33
    %p35 = scmp.ne.s32.totalorder %s24, %s27
    %p36 = scmp.eq.s32.totalorder %s19, 1
    %p37 = por %p35, %p36
    %p38 = scmp.ne.s32.totalorder %s27, %s28
    %p39 = scmp.eq.s32.totalorder %s19, 0
    %p40 = por %p38, %p39
    %p41 = scmp.ne.s32.totalorder %s27, %s28
    %p42 = scmp.eq.s32.totalorder %s20, 1
    %p43 = por %p41, %p42
    %p45 = scmp.ne.s32.totalorder %s28, %s44
    %p46 = scmp.eq.s32.totalorder %s20, 0
    %p47 = por %p45, %p46
    %s48 = ssub.s32 %s14, %s21
    %p49 = scmp.eq.s32.totalorder %s48, 0
    %s51 = sadd.s32 %s50, 1
    %s52 = scalar_select %p49, %s50, %s51
    %p55 = pneg %p49
    %p56 = scmp.eq.s32.totalorder %s14, 1
    %p57 = por %p55, %p56
    %p58 = scmp.ne.s32.totalorder %s50, %s53
    %p59 = scmp.eq.s32.totalorder %s14, 0
    %p60 = por %p58, %p59
    %p61 = scmp.ne.s32.totalorder %s50, %s53
    %p62 = scmp.eq.s32.totalorder %s19, 1
    %p63 = por %p61, %p62
    %p64 = scmp.ne.s32.totalorder %s53, %s54
    %p65 = scmp.eq.s32.totalorder %s19, 0
    %p66 = por %p64, %p65
    %p67 = scmp.ne.s32.totalorder %s53, %s54
    %p68 = scmp.eq.s32.totalorder %s20, 1
    %p69 = por %p67, %p68
    %p71 = scmp.ne.s32.totalorder %s54, %s70
    %p72 = scmp.eq.s32.totalorder %s20, 0
    %p73 = por %p71, %p72
    %s75 = sadd.s32 %s74, 1
    %p78 = scmp.eq.s32.totalorder %s14, 1
    %p79 = scmp.ne.s32.totalorder %s74, %s76
    %p80 = scmp.eq.s32.totalorder %s14, 0
    %p81 = por %p79, %p80
    %p82 = scmp.ne.s32.totalorder %s74, %s76
    %p83 = scmp.eq.s32.totalorder %s19, 1
    %p84 = por %p82, %p83
    %p85 = scmp.ne.s32.totalorder %s76, %s77
    %p86 = scmp.eq.s32.totalorder %s19, 0
    %p87 = por %p85, %p86
    %p88 = scmp.ne.s32.totalorder %s76, %s77
    %p89 = scmp.eq.s32.totalorder %s20, 1
    %p90 = por %p88, %p89
    %p92 = scmp.ne.s32.totalorder %s77, %s91
    %p93 = scmp.eq.s32.totalorder %s20, 0
    %p94 = por %p92, %p93
    %s96 = sadd.s32 %s95, 1
    %p99 = scmp.eq.s32.totalorder %s14, 1
    %p100 = scmp.ne.s32.totalorder %s95, %s97
    %p101 = scmp.eq.s32.totalorder %s14, 0
    %p102 = por %p100, %p101
    %p103 = scmp.ne.s32.totalorder %s95, %s97
    %p104 = scmp.eq.s32.totalorder %s19, 1
    %p105 = por %p103, %p104
    %p106 = scmp.ne.s32.totalorder %s97, %s98
    %p107 = scmp.eq.s32.totalorder %s19, 0
    %p108 = por %p106, %p107
    %p109 = scmp.ne.s32.totalorder %s97, %s98
    %p110 = scmp.eq.s32.totalorder %s20, 1
    %p111 = por %p109, %p110
    %p113 = scmp.ne.s32.totalorder %s98, %s112
    %p114 = scmp.eq.s32.totalorder %s20, 0
    %p115 = por %p113, %p114
    %s117 = sadd.s32 %s116, 1
    %p120 = scmp.eq.s32.totalorder %s14, 1
    %p121 = scmp.ne.s32.totalorder %s116, %s118
    %p122 = scmp.eq.s32.totalorder %s14, 0
    %p123 = por %p121, %p122
    %p124 = scmp.ne.s32.totalorder %s116, %s118
    %p125 = scmp.eq.s32.totalorder %s19, 1
    %p126 = por %p124, %p125
    %p127 = scmp.ne.s32.totalorder %s118, %s119
    %p128 = scmp.eq.s32.totalorder %s19, 0
    %p129 = por %p127, %p128
    %p130 = scmp.ne.s32.totalorder %s118, %s119
    %p131 = scmp.eq.s32.totalorder %s20, 1
    %p132 = por %p130, %p131
    %p134 = scmp.ne.s32.totalorder %s119, %s133
    %p135 = scmp.eq.s32.totalorder %s20, 0
    %p136 = por %p134, %p135
    %s138 = sadd.s32 %s137, 1
    %p141 = scmp.eq.s32.totalorder %s14, 1
    %p142 = scmp.ne.s32.totalorder %s137, %s139
    %p143 = scmp.eq.s32.totalorder %s14, 0
    %p144 = por %p142, %p143
    %p145 = scmp.ne.s32.totalorder %s137, %s139
    %p146 = scmp.eq.s32.totalorder %s19, 1
    %p147 = por %p145, %p146
    %p148 = scmp.ne.s32.totalorder %s139, %s140
    %p149 = scmp.eq.s32.totalorder %s19, 0
    %p150 = por %p148, %p149
    %p151 = scmp.ne.s32.totalorder %s139, %s140
    %p152 = scmp.eq.s32.totalorder %s20, 1
    %p153 = por %p151, %p152
    %p155 = scmp.ne.s32.totalorder %s140, %s154
    %p156 = scmp.eq.s32.totalorder %s20, 0
    %p157 = por %p155, %p156
    %s159 = sadd.s32 %s158, 1
    %p162 = scmp.eq.s32.totalorder %s14, 1
    %p163 = scmp.ne.s32.totalorder %s158, %s160
    %p164 = scmp.eq.s32.totalorder %s14, 0
    %p165 = por %p163, %p164
    %p166 = scmp.ne.s32.totalorder %s158, %s160
    %p167 = scmp.eq.s32.totalorder %s19, 1
    %p168 = por %p166, %p167
    %p169 = scmp.ne.s32.totalorder %s160, %s161
    %p170 = scmp.eq.s32.totalorder %s19, 0
    %p171 = por %p169, %p170
    %p172 = scmp.ne.s32.totalorder %s160, %s161
    %p173 = scmp.eq.s32.totalorder %s20, 1
    %p174 = por %p172, %p173
    %p176 = scmp.ne.s32.totalorder %s161, %s175
    %p177 = scmp.eq.s32.totalorder %s20, 0
    %p178 = por %p176, %p177
    %s180 = sadd.s32 %s179, 1
    %p183 = scmp.eq.s32.totalorder %s14, 1
    %p184 = scmp.ne.s32.totalorder %s179, %s181
    %p185 = scmp.eq.s32.totalorder %s14, 0
    %p186 = por %p184, %p185
    %p187 = scmp.ne.s32.totalorder %s179, %s181
    %p188 = scmp.eq.s32.totalorder %s19, 1
    %p189 = por %p187, %p188
    %p190 = scmp.ne.s32.totalorder %s181, %s182
    %p191 = scmp.eq.s32.totalorder %s19, 0
    %p192 = por %p190, %p191
    %p193 = scmp.ne.s32.totalorder %s181, %s182
    %p194 = scmp.eq.s32.totalorder %s20, 1
    %p195 = por %p193, %p194
    %p197 = scmp.ne.s32.totalorder %s182, %s196
    %p198 = scmp.eq.s32.totalorder %s20, 0
    %p199 = por %p197, %p198
    %s200 = ssub.s32 %s14, %s21
    %p201 = scmp.eq.s32.totalorder %s200, 0
    %s203 = sadd.s32 %s202, 1
    %s204 = scalar_select %p201, %s202, %s203
    %p207 = pneg %p201
    %p208 = scmp.eq.s32.totalorder %s14, 1
    %p209 = por %p207, %p208
    %p210 = scmp.ne.s32.totalorder %s202, %s205
    %p211 = scmp.eq.s32.totalorder %s14, 0
    %p212 = por %p210, %p211
    %p213 = scmp.ne.s32.totalorder %s202, %s205
    %p214 = scmp.eq.s32.totalorder %s19, 1
    %p215 = por %p213, %p214
    %p216 = scmp.ne.s32.totalorder %s205, %s206
    %p217 = scmp.eq.s32.totalorder %s19, 0
    %p218 = por %p216, %p217
    %p219 = scmp.ne.s32.totalorder %s205, %s206
    %p220 = scmp.eq.s32.totalorder %s20, 1
    %p221 = por %p219, %p220
    %p223 = scmp.ne.s32.totalorder %s206, %s222
    %p224 = scmp.eq.s32.totalorder %s20, 0
    %p225 = por %p223, %p224
    %p226 = scmp.le.s32.totalorder 1, %s14
    %p227 = scmp.lt.s32.totalorder %s14, 3
    %p228 = pnand %p226, %p227
    %p229 = pneg %p228
    // Predicated region
    $region9: #{conv_rnn_stack_forward.1} parent=5 // pred_check
      _
    $region10: #{conv_rnn_stack_forward.1} parent=5 // pred_check_branch
      %231 = sbr.rel (%p228) target = $region12
    $region11: #{conv_rnn_stack_forward.1} parent=5 // pred_region
      %s232 = ssub.s32 %s14, 1
      // Predicated region
      $region13: #{conv_rnn_stack_forward.1} parent=11 // pred_check
        %p233 = pneg %p87
      $region14: #{conv_rnn_stack_forward.1} parent=11 // pred_check_branch
        %235 = sbr.rel (%p233) target = $region16
      $region15: #{conv_rnn_stack_forward.1} parent=11 // pred_region
        _
      $region16: #{conv_rnn_stack_forward.1} parent=11 // pred_fallthru
        _
      // Predicated region
      $region17: #{conv_rnn_stack_forward.1} parent=11 // pred_check
        %p236 = pneg %p108
      $region18: #{conv_rnn_stack_forward.1} parent=11 // pred_check_branch
        %238 = sbr.rel (%p236) target = $region20
      $region19: #{conv_rnn_stack_forward.1} parent=11 // pred_region
        _
      $region20: #{conv_rnn_stack_forward.1} parent=11 // pred_fallthru
        _
      // Predicated region
      $region21: #{conv_rnn_stack_forward.1} parent=11 // pred_check
        %p239 = pneg %p129
      $region22: #{conv_rnn_stack_forward.1} parent=11 // pred_check_branch
        %241 = sbr.rel (%p239) target = $region24
      $region23: #{conv_rnn_stack_forward.1} parent=11 // pred_region
        _
      $region24: #{conv_rnn_stack_forward.1} parent=11 // pred_fallthru
        _
      // Predicated region
      $region25: #{conv_rnn_stack_forward.1} parent=11 // pred_check
        %p242 = pneg %p150
      $region26: #{conv_rnn_stack_forward.1} parent=11 // pred_check_branch
        %244 = sbr.rel (%p242) target = $region28
      $region27: #{conv_rnn_stack_forward.1} parent=11 // pred_region
        _
      $region28: #{conv_rnn_stack_forward.1} parent=11 // pred_fallthru
        _
      // Predicated region
      $region29: #{conv_rnn_stack_forward.1} parent=11 // pred_check
        %p245 = pneg %p171
      $region30: #{conv_rnn_stack_forward.1} parent=11 // pred_check_branch
        %247 = sbr.rel (%p245) target = $region32
      $region31: #{conv_rnn_stack_forward.1} parent=11 // pred_region
        _
      $region32: #{conv_rnn_stack_forward.1} parent=11 // pred_fallthru
        _
      // Predicated region
      $region33: #{conv_rnn_stack_forward.1} parent=11 // pred_check
        %p248 = pneg %p192
      $region34: #{conv_rnn_stack_forward.1} parent=11 // pred_check_branch
        %250 = sbr.rel (%p248) target = $region36
      $region35: #{conv_rnn_stack_forward.1} parent=11 // pred_region
        _
      $region36: #{conv_rnn_stack_forward.1} parent=11 // pred_fallthru
        _
    $region12: #{conv_rnn_stack_forward.1} parent=5 // pred_fallthru
      _
    %p251 = scmp.lt.s32.totalorder %s14, 2
    // Predicated region
    $region37: #{conv_rnn_stack_forward.1} parent=5 // pred_check
      %p252 = pneg %p251
    $region38: #{conv_rnn_stack_forward.1} parent=5 // pred_check_branch
      %254 = sbr.rel (%p252) target = $region40
    $region39: #{conv_rnn_stack_forward.1} parent=5 // pred_region
      // Predicated region
      $region41: #{conv_rnn_stack_forward.1} parent=39 // pred_check
        %p255 = pneg %p34
      $region42: #{conv_rnn_stack_forward.1} parent=39 // pred_check_branch
        %257 = sbr.rel (%p255) target = $region44
      $region43: #{conv_rnn_stack_forward.1} parent=39 // pred_region
        %p258 = scmp.lt.s32.totalorder %s14, 1
        %s259 = scalar_select %p258, %s14, 1
        %s260 = smul.addr %s259, 32
        %s261 = smul.addr %s260, 8
        %s262 = scalar_lea.vmem %s0, %s261
      $region44: #{conv_rnn_stack_forward.1} parent=39 // pred_fallthru
        _
      // Predicated region
      $region45: #{conv_rnn_stack_forward.1} parent=39 // pred_check
        %p263 = pneg %p60
      $region46: #{conv_rnn_stack_forward.1} parent=39 // pred_check_branch
        %265 = sbr.rel (%p263) target = $region48
      $region47: #{conv_rnn_stack_forward.1} parent=39 // pred_region
        %p266 = scmp.lt.s32.totalorder %s14, 1
        %s267 = scalar_select %p266, %s14, 1
        %s268 = smul.addr %s267, 32
        %s269 = smul.addr %s268, 8
        %s270 = scalar_lea.vmem %s1, %s269
      $region48: #{conv_rnn_stack_forward.1} parent=39 // pred_fallthru
        _
    $region40: #{conv_rnn_stack_forward.1} parent=5 // pred_fallthru
      _
    %p271 = scmp.le.s32.totalorder 1, %s14
    %p272 = scmp.lt.s32.totalorder %s14, 3
    %p273 = pnand %p271, %p272
    %p274 = pneg %p273
    // Predicated region
    $region49: #{conv_rnn_stack_forward.1} parent=5 // pred_check
      _
    $region50: #{conv_rnn_stack_forward.1} parent=5 // pred_check_branch
      %276 = sbr.rel (%p273) target = $region52
    $region51: #{conv_rnn_stack_forward.1} parent=5 // pred_region
      %s277 = ssub.s32 %s14, 1
      %p278 = scmp.lt.s32.totalorder %s19, 1
      %s279 = scalar_select %p278, %s19, 1
      %s280 = smul.addr %s279, 32
      %s281 = smul.addr %s280, 8
      %s282 = scalar_lea.vmem %s0, %s281
      %p283 = pneg %p40
      %p284 = pneg %p37
      %p285 = scmp.lt.s32.totalorder %s19, 1
      %s286 = scalar_select %p285, %s19, 1
      %s287 = smul.addr %s286, 32
      %s288 = smul.addr %s287, 8
      %s289 = scalar_lea.vmem %s1, %s288
      %p290 = pneg %p66
      %p291 = pneg %p63
      %p292 = pneg %p87
      %p293 = pneg %p84
      %p294 = pneg %p108
      %p295 = pneg %p105
      %p296 = pneg %p129
      %p297 = pneg %p126
      %p298 = pneg %p150
      %p299 = pneg %p147
      %p300 = pneg %p171
      %p301 = pneg %p168
      %p302 = pneg %p192
      %p303 = pneg %p189
      %p304 = pneg %p218
      %p305 = pneg %p215
      %p306 = scmp.lt.s32.totalorder %s19, 1
      %s307 = scalar_select %p306, %s19, 1
      %s308 = smul.addr %s307, 32
      %s309 = smul.addr %s308, 8
      %s310 = scalar_lea.vmem %s8, %s309
      %p311 = scmp.lt.s32.totalorder %s19, 1
      %s312 = scalar_select %p311, %s19, 1
      %s313 = smul.addr %s312, 32
      %s314 = smul.addr %s313, 8
      %s315 = scalar_lea.vmem %s0, %s314
      %p316 = scmp.lt.s32.totalorder %s19, 1
      %s317 = scalar_select %p316, %s19, 1
      %s318 = smul.addr %s317, 32
      %s319 = smul.addr %s318, 8
      %s320 = scalar_lea.vmem %s1, %s319
      %p321 = scmp.lt.s32.totalorder %s19, 1
      %s322 = scalar_select %p321, %s19, 1
      %s323 = smul.addr %s322, 32
      %s324 = smul.addr %s323, 8
      %s325 = scalar_lea.vmem %s8, %s324
      %v327 = vld [vmem:[%s315] sm:$0xff]
      %v328 = vld [vmem:[%s315 + $0x8] sm:$0xff]
      %v329 = vld [vmem:[%s315 + $0x10] sm:$0xff]
      %v330 = vld [vmem:[%s315 + $0x18] sm:$0xff]
      %v331 = vld [vmem:[%s315 + $0x20] sm:$0xff]
      %v332 = vld [vmem:[%s315 + $0x28] sm:$0xff]
      %v333 = vld [vmem:[%s315 + $0x30] sm:$0xff]
      %v334 = vld [vmem:[%s315 + $0x38] sm:$0xff]
      %v335 = vld [vmem:[%s315 + $0x40] sm:$0xff]
      %v336 = vld [vmem:[%s315 + $0x48] sm:$0xff]
      %v337 = vld [vmem:[%s315 + $0x50] sm:$0xff]
      %v338 = vld [vmem:[%s315 + $0x58] sm:$0xff]
      %v339 = vld [vmem:[%s315 + $0x60] sm:$0xff]
      %v340 = vld [vmem:[%s315 + $0x68] sm:$0xff]
      %v341 = vld [vmem:[%s315 + $0x70] sm:$0xff]
      %v342 = vld [vmem:[%s315 + $0x78] sm:$0xff]
      %v343 = vld [vmem:[%s315 + $0x80] sm:$0xff]
      %v344 = vld [vmem:[%s315 + $0x88] sm:$0xff]
      %v345 = vld [vmem:[%s315 + $0x90] sm:$0xff]
      %v346 = vld [vmem:[%s315 + $0x98] sm:$0xff]
      %v347 = vld [vmem:[%s315 + $0xa0] sm:$0xff]
      %v348 = vld [vmem:[%s315 + $0xa8] sm:$0xff]
      %v349 = vld [vmem:[%s315 + $0xb0] sm:$0xff]
      %v350 = vld [vmem:[%s315 + $0xb8] sm:$0xff]
      %v351 = vld [vmem:[%s315 + $0xc0] sm:$0xff]
      %v352 = vld [vmem:[%s315 + $0xc8] sm:$0xff]
      %v353 = vld [vmem:[%s315 + $0xd0] sm:$0xff]
      %v354 = vld [vmem:[%s315 + $0xd8] sm:$0xff]
      %v355 = vld [vmem:[%s315 + $0xe0] sm:$0xff]
      %v356 = vld [vmem:[%s315 + $0xe8] sm:$0xff]
      %v357 = vld [vmem:[%s315 + $0xf0] sm:$0xff]
      %v358 = vld [vmem:[%s315 + $0xf8] sm:$0xff]
      %v359 = vpack.c.bf16 %v328, %v327
      %v360 = vpack.c.bf16 %v330, %v329
      %v361 = vpack.c.bf16 %v332, %v331
      %v362 = vpack.c.bf16 %v334, %v333
      %v363 = vpack.c.bf16 %v336, %v335
      %v364 = vpack.c.bf16 %v338, %v337
      %v365 = vpack.c.bf16 %v340, %v339
      %v366 = vpack.c.bf16 %v342, %v341
      %v367 = vpack.c.bf16 %v344, %v343
      %v368 = vpack.c.bf16 %v346, %v345
      %v369 = vpack.c.bf16 %v348, %v347
      %v370 = vpack.c.bf16 %v350, %v349
      %v371 = vpack.c.bf16 %v352, %v351
      %v372 = vpack.c.bf16 %v354, %v353
      %v373 = vpack.c.bf16 %v356, %v355
      %v374 = vpack.c.bf16 %v358, %v357
      %v376 = vshrl.u32 %v359, 16
      %v378 = vrot.slane %v376, 7
      %v379 = vshll.u32 %v359, 16
      %v381 = vor.u32 %v378, %v379
      %v383 = vshrl.u32 %v360, 16
      %v385 = vrot.slane %v383, 7
      %v386 = vshll.u32 %v360, 16
      %v388 = vor.u32 %v385, %v386
      %v390 = vshrl.u32 %v361, 16
      %v392 = vrot.slane %v390, 7
      %v393 = vshll.u32 %v361, 16
      %v395 = vor.u32 %v392, %v393
      %v397 = vshrl.u32 %v362, 16
      %v399 = vrot.slane %v397, 7
      %v400 = vshll.u32 %v362, 16
      %v402 = vor.u32 %v399, %v400
      %v404 = vshrl.u32 %v363, 16
      %v406 = vrot.slane %v404, 7
      %v407 = vshll.u32 %v363, 16
      %v409 = vor.u32 %v406, %v407
      %v411 = vshrl.u32 %v364, 16
      %v413 = vrot.slane %v411, 7
      %v414 = vshll.u32 %v364, 16
      %v416 = vor.u32 %v413, %v414
      %v418 = vshrl.u32 %v365, 16
      %v420 = vrot.slane %v418, 7
      %v421 = vshll.u32 %v365, 16
      %v423 = vor.u32 %v420, %v421
      %v425 = vshrl.u32 %v366, 16
      %v427 = vrot.slane %v425, 7
      %v428 = vshll.u32 %v366, 16
      %v430 = vor.u32 %v427, %v428
      %v432 = vshrl.u32 %v367, 16
      %v434 = vrot.slane %v432, 7
      %v435 = vshll.u32 %v367, 16
      %v437 = vor.u32 %v434, %v435
      %v439 = vshrl.u32 %v368, 16
      %v441 = vrot.slane %v439, 7
      %v442 = vshll.u32 %v368, 16
      %v444 = vor.u32 %v441, %v442
      %v446 = vshrl.u32 %v369, 16
      %v448 = vrot.slane %v446, 7
      %v449 = vshll.u32 %v369, 16
      %v451 = vor.u32 %v448, %v449
      %v453 = vshrl.u32 %v370, 16
      %v455 = vrot.slane %v453, 7
      %v456 = vshll.u32 %v370, 16
      %v458 = vor.u32 %v455, %v456
      %v460 = vshrl.u32 %v371, 16
      %v462 = vrot.slane %v460, 7
      %v463 = vshll.u32 %v371, 16
      %v465 = vor.u32 %v462, %v463
      %v467 = vshrl.u32 %v372, 16
      %v469 = vrot.slane %v467, 7
      %v470 = vshll.u32 %v372, 16
      %v472 = vor.u32 %v469, %v470
      %v474 = vshrl.u32 %v373, 16
      %v476 = vrot.slane %v474, 7
      %v477 = vshll.u32 %v373, 16
      %v479 = vor.u32 %v476, %v477
      %v481 = vshrl.u32 %v374, 16
      %v483 = vrot.slane %v481, 7
      %v484 = vshll.u32 %v374, 16
      %v486 = vor.u32 %v483, %v484
      %vm503 = vcmask 1040384
      %vm504 = vsmask.f32 256
      %vm505 = vmand %vm503, %vm504
      %v506 = vsel %vm505, 0, %v381
      %v507 = vsel %vm505, 0, %v388
      %v508 = vsel %vm505, 0, %v395
      %v509 = vsel %vm505, 0, %v402
      %v510 = vsel %vm505, 0, %v409
      %v511 = vsel %vm505, 0, %v416
      %v512 = vsel %vm505, 0, %v423
      %v513 = vsel %vm505, 0, %v430
      %v514 = vsel %vm505, 0, %v437
      %v515 = vsel %vm505, 0, %v444
      %v516 = vsel %vm505, 0, %v451
      %v517 = vsel %vm505, 0, %v458
      %v518 = vsel %vm505, 0, %v465
      %v519 = vsel %vm505, 0, %v472
      %v520 = vsel %vm505, 0, %v479
      %v521 = vsel %vm505, 0, %v486
      %v522 = vrot.slane %v379, 1
      %v523 = vor.u32 %v376, %v522
      %v524 = vrot.slane %v386, 1
      %v525 = vor.u32 %v383, %v524
      %v526 = vrot.slane %v393, 1
      %v527 = vor.u32 %v390, %v526
      %v528 = vrot.slane %v400, 1
      %v529 = vor.u32 %v397, %v528
      %v530 = vrot.slane %v407, 1
      %v531 = vor.u32 %v404, %v530
      %v532 = vrot.slane %v414, 1
      %v533 = vor.u32 %v411, %v532
      %v534 = vrot.slane %v421, 1
      %v535 = vor.u32 %v418, %v534
      %v536 = vrot.slane %v428, 1
      %v537 = vor.u32 %v425, %v536
      %v538 = vrot.slane %v435, 1
      %v539 = vor.u32 %v432, %v538
      %v540 = vrot.slane %v442, 1
      %v541 = vor.u32 %v439, %v540
      %v542 = vrot.slane %v449, 1
      %v543 = vor.u32 %v446, %v542
      %v544 = vrot.slane %v456, 1
      %v545 = vor.u32 %v453, %v544
      %v546 = vrot.slane %v463, 1
      %v547 = vor.u32 %v460, %v546
      %v548 = vrot.slane %v470, 1
      %v549 = vor.u32 %v467, %v548
      %v550 = vrot.slane %v477, 1
      %v551 = vor.u32 %v474, %v550
      %v552 = vrot.slane %v484, 1
      %v553 = vor.u32 %v481, %v552
      %vm570 = vcmask 1047552
      %vm571 = vsmask.f32 7424
      %vm572 = vmand %vm570, %vm571
      %v573 = vsel %vm572, %v523, 0
      %v574 = vsel %vm572, %v525, 0
      %v575 = vsel %vm572, %v527, 0
      %v576 = vsel %vm572, %v529, 0
      %v577 = vsel %vm572, %v531, 0
      %v578 = vsel %vm572, %v533, 0
      %v579 = vsel %vm572, %v535, 0
      %v580 = vsel %vm572, %v537, 0
      %v581 = vsel %vm572, %v539, 0
      %v582 = vsel %vm572, %v541, 0
      %v583 = vsel %vm572, %v543, 0
      %v584 = vsel %vm572, %v545, 0
      %v585 = vsel %vm572, %v547, 0
      %v586 = vsel %vm572, %v549, 0
      %v587 = vsel %vm572, %v551, 0
      %v588 = vsel %vm572, %v553, 0
      %605 = vrot.lane.b32.xlu0 %v359, 4
      %v606 = vpop.permute.xlu0 %605
      %607 = vrot.lane.b32.xlu0 %v360, 4
      %v608 = vpop.permute.xlu0 %607
      %609 = vrot.lane.b32.xlu0 %v361, 4
      %v610 = vpop.permute.xlu0 %609
      %611 = vrot.lane.b32.xlu0 %v362, 4
      %v612 = vpop.permute.xlu0 %611
      %613 = vrot.lane.b32.xlu0 %v363, 4
      %v614 = vpop.permute.xlu0 %613
      %615 = vrot.lane.b32.xlu0 %v364, 4
      %v616 = vpop.permute.xlu0 %615
      %617 = vrot.lane.b32.xlu0 %v365, 4
      %v618 = vpop.permute.xlu0 %617
      %619 = vrot.lane.b32.xlu0 %v366, 4
      %v620 = vpop.permute.xlu0 %619
      %621 = vrot.lane.b32.xlu0 %v367, 4
      %v622 = vpop.permute.xlu0 %621
      %623 = vrot.lane.b32.xlu0 %v368, 4
      %v624 = vpop.permute.xlu0 %623
      %625 = vrot.lane.b32.xlu0 %v369, 4
      %v626 = vpop.permute.xlu0 %625
      %627 = vrot.lane.b32.xlu0 %v370, 4
      %v628 = vpop.permute.xlu0 %627
      %629 = vrot.lane.b32.xlu0 %v371, 4
      %v630 = vpop.permute.xlu0 %629
      %631 = vrot.lane.b32.xlu0 %v372, 4
      %v632 = vpop.permute.xlu0 %631
      %633 = vrot.lane.b32.xlu0 %v373, 4
      %v634 = vpop.permute.xlu0 %633
      %635 = vrot.lane.b32.xlu0 %v374, 4
      %v636 = vpop.permute.xlu0 %635
      %653 = vrot.lane.b32.xlu0 %v573, 8
      %v654 = vpop.permute.xlu0 %653
      %655 = vrot.lane.b32.xlu0 %v574, 8
      %v656 = vpop.permute.xlu0 %655
      %657 = vrot.lane.b32.xlu0 %v575, 8
      %v658 = vpop.permute.xlu0 %657
      %659 = vrot.lane.b32.xlu0 %v576, 8
      %v660 = vpop.permute.xlu0 %659
      %661 = vrot.lane.b32.xlu0 %v577, 8
      %v662 = vpop.permute.xlu0 %661
      %663 = vrot.lane.b32.xlu0 %v578, 8
      %v664 = vpop.permute.xlu0 %663
      %665 = vrot.lane.b32.xlu0 %v579, 8
      %v666 = vpop.permute.xlu0 %665
      %667 = vrot.lane.b32.xlu0 %v580, 8
      %v668 = vpop.permute.xlu0 %667
      %669 = vrot.lane.b32.xlu0 %v581, 8
      %v670 = vpop.permute.xlu0 %669
      %671 = vrot.lane.b32.xlu0 %v582, 8
      %v672 = vpop.permute.xlu0 %671
      %673 = vrot.lane.b32.xlu0 %v583, 8
      %v674 = vpop.permute.xlu0 %673
      %675 = vrot.lane.b32.xlu0 %v584, 8
      %v676 = vpop.permute.xlu0 %675
      %677 = vrot.lane.b32.xlu0 %v585, 8
      %v678 = vpop.permute.xlu0 %677
      %679 = vrot.lane.b32.xlu0 %v586, 8
      %v680 = vpop.permute.xlu0 %679
      %681 = vrot.lane.b32.xlu0 %v587, 8
      %v682 = vpop.permute.xlu0 %681
      %683 = vrot.lane.b32.xlu0 %v588, 8
      %v684 = vpop.permute.xlu0 %683
      %vm685 = vcmask 31744
      %v688 = vsel %vm685, %v506, %v606
      %v691 = vsel %vm685, %v507, %v608
      %v694 = vsel %vm685, %v508, %v610
      %v697 = vsel %vm685, %v509, %v612
      %v700 = vsel %vm685, %v510, %v614
      %v703 = vsel %vm685, %v511, %v616
      %v706 = vsel %vm685, %v512, %v618
      %v709 = vsel %vm685, %v513, %v620
      %v712 = vsel %vm685, %v514, %v622
      %v715 = vsel %vm685, %v515, %v624
      %v718 = vsel %vm685, %v516, %v626
      %v721 = vsel %vm685, %v517, %v628
      %v724 = vsel %vm685, %v518, %v630
      %v727 = vsel %vm685, %v519, %v632
      %v730 = vsel %vm685, %v520, %v634
      %v733 = vsel %vm685, %v521, %v636
      %vm734 = vcmask 64512
      %v736 = vsel %vm734, %v688, %v654
      %v739 = vsel %vm734, %v691, %v656
      %v742 = vsel %vm734, %v694, %v658
      %v745 = vsel %vm734, %v697, %v660
      %v748 = vsel %vm734, %v700, %v662
      %v751 = vsel %vm734, %v703, %v664
      %v754 = vsel %vm734, %v706, %v666
      %v757 = vsel %vm734, %v709, %v668
      %v760 = vsel %vm734, %v712, %v670
      %v763 = vsel %vm734, %v715, %v672
      %v766 = vsel %vm734, %v718, %v674
      %v769 = vsel %vm734, %v721, %v676
      %v772 = vsel %vm734, %v724, %v678
      %v775 = vsel %vm734, %v727, %v680
      %v778 = vsel %vm734, %v730, %v682
      %v781 = vsel %vm734, %v733, %v684
      %vm782 = vcmask 97280
      %783 = vst.msk [vmem:[#allocation2] sm:$0xff] %vm782, 0
      %784 = vst.msk [vmem:[#allocation2 + $0x8] sm:$0xff] %vm782, %v736
      %785 = vst.msk [vmem:[#allocation2 + $0x10] sm:$0xff] %vm782, %v739
      %786 = vst.msk [vmem:[#allocation2 + $0x18] sm:$0xff] %vm782, %v742
      %787 = vst.msk [vmem:[#allocation2 + $0x20] sm:$0xff] %vm782, %v745
      %788 = vst.msk [vmem:[#allocation2 + $0x28] sm:$0xff] %vm782, %v748
      %789 = vst.msk [vmem:[#allocation2 + $0x30] sm:$0xff] %vm782, %v751
      %790 = vst.msk [vmem:[#allocation2 + $0x38] sm:$0xff] %vm782, %v754
      %791 = vst.msk [vmem:[#allocation2 + $0x40] sm:$0xff] %vm782, %v757
      %792 = vst.msk [vmem:[#allocation2 + $0x48] sm:$0xff] %vm782, %v760
      %793 = vst.msk [vmem:[#allocation2 + $0x50] sm:$0xff] %vm782, %v763
      %794 = vst.msk [vmem:[#allocation2 + $0x58] sm:$0xff] %vm782, %v766
      %795 = vst.msk [vmem:[#allocation2 + $0x60] sm:$0xff] %vm782, %v769
      %796 = vst.msk [vmem:[#allocation2 + $0x68] sm:$0xff] %vm782, %v772
      %797 = vst.msk [vmem:[#allocation2 + $0x70] sm:$0xff] %vm782, %v775
      %798 = vst.msk [vmem:[#allocation2 + $0x78] sm:$0xff] %vm782, %v778
      %815 = vrot.lane.b32.xlu0 %v736, 12
      %v816 = vpop.permute.xlu0 %815
      %817 = vrot.lane.b32.xlu0 %v739, 12
      %v818 = vpop.permute.xlu0 %817
      %819 = vrot.lane.b32.xlu0 %v742, 12
      %v820 = vpop.permute.xlu0 %819
      %821 = vrot.lane.b32.xlu0 %v745, 12
      %v822 = vpop.permute.xlu0 %821
      %823 = vrot.lane.b32.xlu0 %v748, 12
      %v824 = vpop.permute.xlu0 %823
      %825 = vrot.lane.b32.xlu0 %v751, 12
      %v826 = vpop.permute.xlu0 %825
      %827 = vrot.lane.b32.xlu0 %v754, 12
      %v828 = vpop.permute.xlu0 %827
      %829 = vrot.lane.b32.xlu0 %v757, 12
      %v830 = vpop.permute.xlu0 %829
      %831 = vrot.lane.b32.xlu0 %v760, 12
      %v832 = vpop.permute.xlu0 %831
      %833 = vrot.lane.b32.xlu0 %v763, 12
      %v834 = vpop.permute.xlu0 %833
      %835 = vrot.lane.b32.xlu0 %v766, 12
      %v836 = vpop.permute.xlu0 %835
      %837 = vrot.lane.b32.xlu0 %v769, 12
      %v838 = vpop.permute.xlu0 %837
      %839 = vrot.lane.b32.xlu0 %v772, 12
      %v840 = vpop.permute.xlu0 %839
      %841 = vrot.lane.b32.xlu0 %v775, 12
      %v842 = vpop.permute.xlu0 %841
      %843 = vrot.lane.b32.xlu0 %v778, 12
      %v844 = vpop.permute.xlu0 %843
      %845 = vrot.lane.b32.xlu0 %v781, 12
      %v846 = vpop.permute.xlu0 %845
      %vm863 = vcmask 195680
      %864 = vst.msk [vmem:[#allocation2] sm:$0xff] %vm863, %v816
      %865 = vst.msk [vmem:[#allocation2 + $0x8] sm:$0xff] %vm863, %v818
      %866 = vst.msk [vmem:[#allocation2 + $0x10] sm:$0xff] %vm863, %v820
      %867 = vst.msk [vmem:[#allocation2 + $0x18] sm:$0xff] %vm863, %v822
      %868 = vst.msk [vmem:[#allocation2 + $0x20] sm:$0xff] %vm863, %v824
      %869 = vst.msk [vmem:[#allocation2 + $0x28] sm:$0xff] %vm863, %v826
      %870 = vst.msk [vmem:[#allocation2 + $0x30] sm:$0xff] %vm863, %v828
      %871 = vst.msk [vmem:[#allocation2 + $0x38] sm:$0xff] %vm863, %v830
      %872 = vst.msk [vmem:[#allocation2 + $0x40] sm:$0xff] %vm863, %v832
      %873 = vst.msk [vmem:[#allocation2 + $0x48] sm:$0xff] %vm863, %v834
      %874 = vst.msk [vmem:[#allocation2 + $0x50] sm:$0xff] %vm863, %v836
      %875 = vst.msk [vmem:[#allocation2 + $0x58] sm:$0xff] %vm863, %v838
      %876 = vst.msk [vmem:[#allocation2 + $0x60] sm:$0xff] %vm863, %v840
      %877 = vst.msk [vmem:[#allocation2 + $0x68] sm:$0xff] %vm863, %v842
      %878 = vst.msk [vmem:[#allocation2 + $0x70] sm:$0xff] %vm863, %v844
      %879 = vst.msk [vmem:[#allocation2 + $0x78] sm:$0xff] %vm863, %v846
      %881 = vrot.lane.b32.xlu0 %v739, 24
      %v882 = vpop.permute.xlu0 %881
      %883 = vrot.lane.b32.xlu0 %v742, 24
      %v884 = vpop.permute.xlu0 %883
      %885 = vrot.lane.b32.xlu0 %v745, 24
      %v886 = vpop.permute.xlu0 %885
      %887 = vrot.lane.b32.xlu0 %v748, 24
      %v888 = vpop.permute.xlu0 %887
      %889 = vrot.lane.b32.xlu0 %v751, 24
      %v890 = vpop.permute.xlu0 %889
      %891 = vrot.lane.b32.xlu0 %v754, 24
      %v892 = vpop.permute.xlu0 %891
      %893 = vrot.lane.b32.xlu0 %v757, 24
      %v894 = vpop.permute.xlu0 %893
      %895 = vrot.lane.b32.xlu0 %v760, 24
      %v896 = vpop.permute.xlu0 %895
      %897 = vrot.lane.b32.xlu0 %v763, 24
      %v898 = vpop.permute.xlu0 %897
      %899 = vrot.lane.b32.xlu0 %v766, 24
      %v900 = vpop.permute.xlu0 %899
      %901 = vrot.lane.b32.xlu0 %v769, 24
      %v902 = vpop.permute.xlu0 %901
      %903 = vrot.lane.b32.xlu0 %v772, 24
      %v904 = vpop.permute.xlu0 %903
      %905 = vrot.lane.b32.xlu0 %v775, 24
      %v906 = vpop.permute.xlu0 %905
      %907 = vrot.lane.b32.xlu0 %v778, 24
      %v908 = vpop.permute.xlu0 %907
      %909 = vrot.lane.b32.xlu0 %v781, 24
      %v910 = vpop.permute.xlu0 %909
      %911 = vrot.lane.b32.xlu0 0, 24
      %v912 = vpop.permute.xlu0 %911
      %vm929 = vcmask 294080
      %930 = vst.msk [vmem:[#allocation2] sm:$0xff] %vm929, %v882
      %931 = vst.msk [vmem:[#allocation2 + $0x8] sm:$0xff] %vm929, %v884
      %932 = vst.msk [vmem:[#allocation2 + $0x10] sm:$0xff] %vm929, %v886
      %933 = vst.msk [vmem:[#allocation2 + $0x18] sm:$0xff] %vm929, %v888
      %934 = vst.msk [vmem:[#allocation2 + $0x20] sm:$0xff] %vm929, %v890
      %935 = vst.msk [vmem:[#allocation2 + $0x28] sm:$0xff] %vm929, %v892
      %936 = vst.msk [vmem:[#allocation2 + $0x30] sm:$0xff] %vm929, %v894
      %937 = vst.msk [vmem:[#allocation2 + $0x38] sm:$0xff] %vm929, %v896
      %938 = vst.msk [vmem:[#allocation2 + $0x40] sm:$0xff] %vm929, %v898
      %939 = vst.msk [vmem:[#allocation2 + $0x48] sm:$0xff] %vm929, %v900
      %940 = vst.msk [vmem:[#allocation2 + $0x50] sm:$0xff] %vm929, %v902
      %941 = vst.msk [vmem:[#allocation2 + $0x58] sm:$0xff] %vm929, %v904
      %942 = vst.msk [vmem:[#allocation2 + $0x60] sm:$0xff] %vm929, %v906
      %943 = vst.msk [vmem:[#allocation2 + $0x68] sm:$0xff] %vm929, %v908
      %944 = vst.msk [vmem:[#allocation2 + $0x70] sm:$0xff] %vm929, %v910
      %945 = vst.msk [vmem:[#allocation2 + $0x78] sm:$0xff] %vm929, %v912
      %v946 = vld [vmem:[#allocation2] sm:$0xff]
      %v947 = vld [vmem:[#allocation2 + $0x8] sm:$0xff]
      %v948 = vld [vmem:[#allocation2 + $0x10] sm:$0xff]
      %v949 = vld [vmem:[#allocation2 + $0x18] sm:$0xff]
      %v950 = vld [vmem:[#allocation2 + $0x20] sm:$0xff]
      %v951 = vld [vmem:[#allocation2 + $0x28] sm:$0xff]
      %v952 = vld [vmem:[#allocation2 + $0x30] sm:$0xff]
      %v953 = vld [vmem:[#allocation2 + $0x38] sm:$0xff]
      %v954 = vld [vmem:[#allocation2 + $0x40] sm:$0xff]
      %v955 = vld [vmem:[#allocation2 + $0x48] sm:$0xff]
      %v956 = vld [vmem:[#allocation2 + $0x50] sm:$0xff]
      %v957 = vld [vmem:[#allocation2 + $0x58] sm:$0xff]
      %v958 = vld [vmem:[#allocation2 + $0x60] sm:$0xff]
      %v959 = vld [vmem:[#allocation2 + $0x68] sm:$0xff]
      %v960 = vld [vmem:[#allocation2 + $0x70] sm:$0xff]
      %v961 = vld [vmem:[#allocation2 + $0x78] sm:$0xff]
      %v962 = vld [vmem:[%s2] sm:$0xf]
      %v963 = vld [vmem:[%s2 + $0x4] sm:$0xf]
      %v964 = vld [vmem:[%s2 + $0x8] sm:$0xf]
      %v965 = vld [vmem:[%s2 + $0xc] sm:$0xf]
      %v966 = vld [vmem:[%s2 + $0x10] sm:$0x3]
      %v967 = vld [vmem:[%s3] sm:$0x1]
      %v969 = vlaneseq
      %v970 = vshrl.u32 %v969, 7
      %v971 = vsub.s32 0, %v970
      %v972 = vrot.slane %v967, %v971
      %v979 = vunpack.c.l.b16 %v962
      %v980 = vunpack.c.l.b16 %v963
      %v981 = vunpack.c.l.b16 %v964
      %v982 = vunpack.c.l.b16 %v965
      %v983 = vunpack.c.l.b16 %v966
      %v984 = vpack.c.b16 %v980, %v979
      %v985 = vpack.c.b16 %v982, %v981
      %v986 = vpack.c.b16 %v983, %v983
      %vm989 = vcmask 293888
      %v991 = vsel %vm989, %v946, 0
      %v994 = vsel %vm989, %v947, 0
      %v997 = vsel %vm989, %v948, 0
      %v1000 = vsel %vm989, %v949, 0
      %v1003 = vsel %vm989, %v950, 0
      %v1006 = vsel %vm989, %v951, 0
      %v1009 = vsel %vm989, %v952, 0
      %v1012 = vsel %vm989, %v953, 0
      %v1015 = vsel %vm989, %v954, 0
      %v1018 = vsel %vm989, %v955, 0
      %v1021 = vsel %vm989, %v956, 0
      %v1024 = vsel %vm989, %v957, 0
      %v1027 = vsel %vm989, %v958, 0
      %v1030 = vsel %vm989, %v959, 0
      %v1033 = vsel %vm989, %v960, 0
      %v1036 = vsel %vm989, %v961, 0
      %vm1038 = vcmask 1041408
      %v1040 = vsel %vm1038, %v986, 0
      %1042 = vmatprep.subr.bf16.mxu0 0
      %1043 = vmatpush1.bf16.msra.mxu0 %v984
      %1044 = vmatprep.subr.bf16.mxu0 0
      %1045 = vmatpush1.bf16.msra.mxu0 %v985
      %1046 = vmatprep.subr.bf16.mxu0 0
      %1047 = vmatpush1.bf16.msra.mxu0 %v1040
      %1048 = vmatprep.subr.bf16.mxu0 0
      %1049 = vmatpush1.bf16.msra.mxu0 0
      %1050 = vmatprep.subr.bf16.mxu0 0
      %1051 = vmatpush1.bf16.msra.mxu0 0
      %1052 = vmatprep.subr.bf16.mxu0 0
      %1053 = vmatpush1.bf16.msra.mxu0 0
      %1054 = vmatprep.subr.bf16.mxu0 0
      %1055 = vmatpush1.bf16.msra.mxu0 0
      %1056 = vmatprep.subr.bf16.mxu0 0
      %1057 = vmatpush1.bf16.msra.mxu0 0
      %1058 = vmatprep.subr.bf16.mxu0 0
      %1059 = vmatpush1.bf16.msra.mxu0 0
      %1060 = vmatprep.subr.bf16.mxu0 0
      %1061 = vmatpush1.bf16.msra.mxu0 0
      %1062 = vmatprep.subr.bf16.mxu0 0
      %1063 = vmatpush1.bf16.msra.mxu0 0
      %1064 = vmatprep.subr.bf16.mxu0 0
      %1065 = vmatpush1.bf16.msra.mxu0 0
      %1066 = vmatprep.subr.bf16.mxu0 0
      %1067 = vmatpush1.bf16.msra.mxu0 0
      %1068 = vmatprep.subr.bf16.mxu0 0
      %1069 = vmatpush1.bf16.msra.mxu0 0
      %1070 = vmatprep.subr.bf16.mxu0 0
      %1071 = vmatpush1.bf16.msra.mxu0 0
      %1072 = vmatprep.subr.bf16.mxu0 0
      %1073 = vmatpush1.bf16.msra.mxu0 0
      %1074 = vmatprep.mubr.bf16.mxu0 0
      %1075 = vmatmul.mubr.bf16.gmra.mrb[0].mxu0 %v991
      %v1076 = vpop.f32.mrb[0].mxu0
      %v1077 = vadd.f32 %v972, %v1076
      %v1078 = vpop.f32.mrb[0].mxu0
      %v1079 = vpop.f32.mrb[0].mxu0
      %v1080 = vadd.f32 %v972, %v1079
      %v1081 = vpop.f32.mrb[0].mxu0
      %1082 = vmatprep.mubr.bf16.mxu0 0
      %1083 = vmatmul.mubr.bf16.gmra.mrb[0].mxu0 %v994
      %v1084 = vpop.f32.mrb[0].mxu0
      %v1085 = vadd.f32 %v972, %v1084
      %v1086 = vpop.f32.mrb[0].mxu0
      %v1087 = vpop.f32.mrb[0].mxu0
      %v1088 = vadd.f32 %v972, %v1087
      %v1089 = vpop.f32.mrb[0].mxu0
      %1090 = vmatprep.mubr.bf16.mxu0 0
      %1091 = vmatmul.mubr.bf16.gmra.mrb[0].mxu0 %v997
      %v1092 = vpop.f32.mrb[0].mxu0
      %v1093 = vadd.f32 %v972, %v1092
      %v1094 = vpop.f32.mrb[0].mxu0
      %v1095 = vpop.f32.mrb[0].mxu0
      %v1096 = vadd.f32 %v972, %v1095
      %v1097 = vpop.f32.mrb[0].mxu0
      %1098 = vmatprep.mubr.bf16.mxu0 0
      %1099 = vmatmul.mubr.bf16.gmra.mrb[0].mxu0 %v1000
      %v1100 = vpop.f32.mrb[0].mxu0
      %v1101 = vadd.f32 %v972, %v1100
      %v1102 = vpop.f32.mrb[0].mxu0
      %v1103 = vpop.f32.mrb[0].mxu0
      %v1104 = vadd.f32 %v972, %v1103
      %v1105 = vpop.f32.mrb[0].mxu0
      %1106 = vmatprep.mubr.bf16.mxu0 0
      %1107 = vmatmul.mubr.bf16.gmra.mrb[0].mxu0 %v1003
      %v1108 = vpop.f32.mrb[0].mxu0
      %v1109 = vadd.f32 %v972, %v1108
      %v1110 = vpop.f32.mrb[0].mxu0
      %v1111 = vpop.f32.mrb[0].mxu0
      %v1112 = vadd.f32 %v972, %v1111
      %v1113 = vpop.f32.mrb[0].mxu0
      %1114 = vmatprep.mubr.bf16.mxu0 0
      %1115 = vmatmul.mubr.bf16.gmra.mrb[0].mxu0 %v1006
      %v1116 = vpop.f32.mrb[0].mxu0
      %v1117 = vadd.f32 %v972, %v1116
      %v1118 = vpop.f32.mrb[0].mxu0
      %v1119 = vpop.f32.mrb[0].mxu0
      %v1120 = vadd.f32 %v972, %v1119
      %v1121 = vpop.f32.mrb[0].mxu0
      %1122 = vmatprep.mubr.bf16.mxu0 0
      %1123 = vmatmul.mubr.bf16.gmra.mrb[0].mxu0 %v1009
      %v1124 = vpop.f32.mrb[0].mxu0
      %v1125 = vadd.f32 %v972, %v1124
      %v1126 = vpop.f32.mrb[0].mxu0
      %v1127 = vpop.f32.mrb[0].mxu0
      %v1128 = vadd.f32 %v972, %v1127
      %v1129 = vpop.f32.mrb[0].mxu0
      %1130 = vmatprep.mubr.bf16.mxu0 0
      %1131 = vmatmul.mubr.bf16.gmra.mrb[0].mxu0 %v1012
      %v1132 = vpop.f32.mrb[0].mxu0
      %v1133 = vadd.f32 %v972, %v1132
      %v1134 = vpop.f32.mrb[0].mxu0
      %v1135 = vpop.f32.mrb[0].mxu0
      %v1136 = vadd.f32 %v972, %v1135
      %v1137 = vpop.f32.mrb[0].mxu0
      %1138 = vmatprep.mubr.bf16.mxu0 0
      %1139 = vmatmul.mubr.bf16.gmra.mrb[0].mxu0 %v1015
      %v1140 = vpop.f32.mrb[0].mxu0
      %v1141 = vadd.f32 %v972, %v1140
      %v1142 = vpop.f32.mrb[0].mxu0
      %v1143 = vpop.f32.mrb[0].mxu0
      %v1144 = vadd.f32 %v972, %v1143
      %v1145 = vpop.f32.mrb[0].mxu0
      %1146 = vmatprep.mubr.bf16.mxu0 0
      %1147 = vmatmul.mubr.bf16.gmra.mrb[0].mxu0 %v1018
      %v1148 = vpop.f32.mrb[0].mxu0
      %v1149 = vadd.f32 %v972, %v1148
      %v1150 = vpop.f32.mrb[0].mxu0
      %v1151 = vpop.f32.mrb[0].mxu0
      %v1152 = vadd.f32 %v972, %v1151
      %v1153 = vpop.f32.mrb[0].mxu0
      %1154 = vmatprep.mubr.bf16.mxu0 0
      %1155 = vmatmul.mubr.bf16.gmra.mrb[0].mxu0 %v1021
      %v1156 = vpop.f32.mrb[0].mxu0
      %v1157 = vadd.f32 %v972, %v1156
      %v1158 = vpop.f32.mrb[0].mxu0
      %v1159 = vpop.f32.mrb[0].mxu0
      %v1160 = vadd.f32 %v972, %v1159
      %v1161 = vpop.f32.mrb[0].mxu0
      %1162 = vmatprep.mubr.bf16.mxu0 0
      %1163 = vmatmul.mubr.bf16.gmra.mrb[0].mxu0 %v1024
      %v1164 = vpop.f32.mrb[0].mxu0
      %v1165 = vadd.f32 %v972, %v1164
      %v1166 = vpop.f32.mrb[0].mxu0
      %v1167 = vpop.f32.mrb[0].mxu0
      %v1168 = vadd.f32 %v972, %v1167
      %v1169 = vpop.f32.mrb[0].mxu0
      %1170 = vmatprep.mubr.bf16.mxu0 0
      %1171 = vmatmul.mubr.bf16.gmra.mrb[0].mxu0 %v1027
      %v1172 = vpop.f32.mrb[0].mxu0
      %v1173 = vadd.f32 %v972, %v1172
      %v1174 = vpop.f32.mrb[0].mxu0
      %v1175 = vpop.f32.mrb[0].mxu0
      %v1176 = vadd.f32 %v972, %v1175
      %v1177 = vpop.f32.mrb[0].mxu0
      %1178 = vmatprep.mubr.bf16.mxu0 0
      %1179 = vmatmul.mubr.bf16.gmra.mrb[0].mxu0 %v1030
      %v1180 = vpop.f32.mrb[0].mxu0
      %v1181 = vadd.f32 %v972, %v1180
      %v1182 = vpop.f32.mrb[0].mxu0
      %v1183 = vpop.f32.mrb[0].mxu0
      %v1184 = vadd.f32 %v972, %v1183
      %v1185 = vpop.f32.mrb[0].mxu0
      %1186 = vmatprep.mubr.bf16.mxu0 0
      %1187 = vmatmul.mubr.bf16.gmra.mrb[0].mxu0 %v1033
      %v1188 = vpop.f32.mrb[0].mxu0
      %v1189 = vadd.f32 %v972, %v1188
      %v1190 = vpop.f32.mrb[0].mxu0
      %v1191 = vpop.f32.mrb[0].mxu0
      %v1192 = vadd.f32 %v972, %v1191
      %v1193 = vpop.f32.mrb[0].mxu0
      %1194 = vmatprep.mubr.bf16.mxu0 0
      %1195 = vmatmul.mubr.bf16.gmra.mrb[0].mxu0 %v1036
      %v1196 = vpop.f32.mrb[0].mxu0
      %v1197 = vadd.f32 %v972, %v1196
      %v1198 = vpop.f32.mrb[0].mxu0
      %v1199 = vpop.f32.mrb[0].mxu0
      %v1200 = vadd.f32 %v972, %v1199
      %v1201 = vpop.f32.mrb[0].mxu0
      %1202 = vdwg.mxu0
      %v1203 = vmax.f32 %v1077, 0.0
      %v1204 = vmax.f32 %v1080, 0.0
      %v1205 = vmax.f32 %v1085, 0.0
      %v1206 = vmax.f32 %v1088, 0.0
      %v1207 = vmax.f32 %v1093, 0.0
      %v1208 = vmax.f32 %v1096, 0.0
      %v1209 = vmax.f32 %v1101, 0.0
      %v1210 = vmax.f32 %v1104, 0.0
      %v1211 = vmax.f32 %v1109, 0.0
      %v1212 = vmax.f32 %v1112, 0.0
      %v1213 = vmax.f32 %v1117, 0.0
      %v1214 = vmax.f32 %v1120, 0.0
      %v1215 = vmax.f32 %v1125, 0.0
      %v1216 = vmax.f32 %v1128, 0.0
      %v1217 = vmax.f32 %v1133, 0.0
      %v1218 = vmax.f32 %v1136, 0.0
      %v1219 = vmax.f32 %v1141, 0.0
      %v1220 = vmax.f32 %v1144, 0.0
      %v1221 = vmax.f32 %v1149, 0.0
      %v1222 = vmax.f32 %v1152, 0.0
      %v1223 = vmax.f32 %v1157, 0.0
      %v1224 = vmax.f32 %v1160, 0.0
      %v1225 = vmax.f32 %v1165, 0.0
      %v1226 = vmax.f32 %v1168, 0.0
      %v1227 = vmax.f32 %v1173, 0.0
      %v1228 = vmax.f32 %v1176, 0.0
      %v1229 = vmax.f32 %v1181, 0.0
      %v1230 = vmax.f32 %v1184, 0.0
      %v1231 = vmax.f32 %v1189, 0.0
      %v1232 = vmax.f32 %v1192, 0.0
      %v1233 = vmax.f32 %v1197, 0.0
      %v1234 = vmax.f32 %v1200, 0.0
      %v1235 = vpack.c.bf16 %v1204, %v1203
      %v1236 = vpack.c.bf16 %v1206, %v1205
      %v1237 = vpack.c.bf16 %v1208, %v1207
      %v1238 = vpack.c.bf16 %v1210, %v1209
      %v1239 = vpack.c.bf16 %v1212, %v1211
      %v1240 = vpack.c.bf16 %v1214, %v1213
      %v1241 = vpack.c.bf16 %v1216, %v1215
      %v1242 = vpack.c.bf16 %v1218, %v1217
      %v1243 = vpack.c.bf16 %v1220, %v1219
      %v1244 = vpack.c.bf16 %v1222, %v1221
      %v1245 = vpack.c.bf16 %v1224, %v1223
      %v1246 = vpack.c.bf16 %v1226, %v1225
      %v1247 = vpack.c.bf16 %v1228, %v1227
      %v1248 = vpack.c.bf16 %v1230, %v1229
      %v1249 = vpack.c.bf16 %v1232, %v1231
      %v1250 = vpack.c.bf16 %v1234, %v1233
      %v1252 = vshrl.u32 %v1235, 16
      %v1254 = vrot.slane %v1252, 7
      %v1255 = vshll.u32 %v1235, 16
      %v1257 = vor.u32 %v1254, %v1255
      %v1259 = vshrl.u32 %v1236, 16
      %v1261 = vrot.slane %v1259, 7
      %v1262 = vshll.u32 %v1236, 16
      %v1264 = vor.u32 %v1261, %v1262
      %v1266 = vshrl.u32 %v1237, 16
      %v1268 = vrot.slane %v1266, 7
      %v1269 = vshll.u32 %v1237, 16
      %v1271 = vor.u32 %v1268, %v1269
      %v1273 = vshrl.u32 %v1238, 16
      %v1275 = vrot.slane %v1273, 7
      %v1276 = vshll.u32 %v1238, 16
      %v1278 = vor.u32 %v1275, %v1276
      %v1280 = vshrl.u32 %v1239, 16
      %v1282 = vrot.slane %v1280, 7
      %v1283 = vshll.u32 %v1239, 16
      %v1285 = vor.u32 %v1282, %v1283
      %v1287 = vshrl.u32 %v1240, 16
      %v1289 = vrot.slane %v1287, 7
      %v1290 = vshll.u32 %v1240, 16
      %v1292 = vor.u32 %v1289, %v1290
      %v1294 = vshrl.u32 %v1241, 16
      %v1296 = vrot.slane %v1294, 7
      %v1297 = vshll.u32 %v1241, 16
      %v1299 = vor.u32 %v1296, %v1297
      %v1301 = vshrl.u32 %v1242, 16
      %v1303 = vrot.slane %v1301, 7
      %v1304 = vshll.u32 %v1242, 16
      %v1306 = vor.u32 %v1303, %v1304
      %v1308 = vshrl.u32 %v1243, 16
      %v1310 = vrot.slane %v1308, 7
      %v1311 = vshll.u32 %v1243, 16
      %v1313 = vor.u32 %v1310, %v1311
      %v1315 = vshrl.u32 %v1244, 16
      %v1317 = vrot.slane %v1315, 7
      %v1318 = vshll.u32 %v1244, 16
      %v1320 = vor.u32 %v1317, %v1318
      %v1322 = vshrl.u32 %v1245, 16
      %v1324 = vrot.slane %v1322, 7
      %v1325 = vshll.u32 %v1245, 16
      %v1327 = vor.u32 %v1324, %v1325
      %v1329 = vshrl.u32 %v1246, 16
      %v1331 = vrot.slane %v1329, 7
      %v1332 = vshll.u32 %v1246, 16
      %v1334 = vor.u32 %v1331, %v1332
      %v1336 = vshrl.u32 %v1247, 16
      %v1338 = vrot.slane %v1336, 7
      %v1339 = vshll.u32 %v1247, 16
      %v1341 = vor.u32 %v1338, %v1339
      %v1343 = vshrl.u32 %v1248, 16
      %v1345 = vrot.slane %v1343, 7
      %v1346 = vshll.u32 %v1248, 16
      %v1348 = vor.u32 %v1345, %v1346
      %v1350 = vshrl.u32 %v1249, 16
      %v1352 = vrot.slane %v1350, 7
      %v1353 = vshll.u32 %v1249, 16
      %v1355 = vor.u32 %v1352, %v1353
      %v1357 = vshrl.u32 %v1250, 16
      %v1359 = vrot.slane %v1357, 7
      %v1360 = vshll.u32 %v1250, 16
      %v1362 = vor.u32 %v1359, %v1360
      %v1379 = vsel %vm505, 0, %v1257
      %v1380 = vsel %vm505, 0, %v1264
      %v1381 = vsel %vm505, 0, %v1271
      %v1382 = vsel %vm505, 0, %v1278
      %v1383 = vsel %vm505, 0, %v1285
      %v1384 = vsel %vm505, 0, %v1292
      %v1385 = vsel %vm505, 0, %v1299
      %v1386 = vsel %vm505, 0, %v1306
      %v1387 = vsel %vm505, 0, %v1313
      %v1388 = vsel %vm505, 0, %v1320
      %v1389 = vsel %vm505, 0, %v1327
      %v1390 = vsel %vm505, 0, %v1334
      %v1391 = vsel %vm505, 0, %v1341
      %v1392 = vsel %vm505, 0, %v1348
      %v1393 = vsel %vm505, 0, %v1355
      %v1394 = vsel %vm505, 0, %v1362
      %v1395 = vrot.slane %v1255, 1
      %v1396 = vor.u32 %v1252, %v1395
      %v1397 = vrot.slane %v1262, 1
      %v1398 = vor.u32 %v1259, %v1397
      %v1399 = vrot.slane %v1269, 1
      %v1400 = vor.u32 %v1266, %v1399
      %v1401 = vrot.slane %v1276, 1
      %v1402 = vor.u32 %v1273, %v1401
      %v1403 = vrot.slane %v1283, 1
      %v1404 = vor.u32 %v1280, %v1403
      %v1405 = vrot.slane %v1290, 1
      %v1406 = vor.u32 %v1287, %v1405
      %v1407 = vrot.slane %v1297, 1
      %v1408 = vor.u32 %v1294, %v1407
      %v1409 = vrot.slane %v1304, 1
      %v1410 = vor.u32 %v1301, %v1409
      %v1411 = vrot.slane %v1311, 1
      %v1412 = vor.u32 %v1308, %v1411
      %v1413 = vrot.slane %v1318, 1
      %v1414 = vor.u32 %v1315, %v1413
      %v1415 = vrot.slane %v1325, 1
      %v1416 = vor.u32 %v1322, %v1415
      %v1417 = vrot.slane %v1332, 1
      %v1418 = vor.u32 %v1329, %v1417
      %v1419 = vrot.slane %v1339, 1
      %v1420 = vor.u32 %v1336, %v1419
      %v1421 = vrot.slane %v1346, 1
      %v1422 = vor.u32 %v1343, %v1421
      %v1423 = vrot.slane %v1353, 1
      %v1424 = vor.u32 %v1350, %v1423
      %v1425 = vrot.slane %v1360, 1
      %v1426 = vor.u32 %v1357, %v1425
      %v1443 = vsel %vm572, %v1396, 0
      %v1444 = vsel %vm572, %v1398, 0
      %v1445 = vsel %vm572, %v1400, 0
      %v1446 = vsel %vm572, %v1402, 0
      %v1447 = vsel %vm572, %v1404, 0
      %v1448 = vsel %vm572, %v1406, 0
      %v1449 = vsel %vm572, %v1408, 0
      %v1450 = vsel %vm572, %v1410, 0
      %v1451 = vsel %vm572, %v1412, 0
      %v1452 = vsel %vm572, %v1414, 0
      %v1453 = vsel %vm572, %v1416, 0
      %v1454 = vsel %vm572, %v1418, 0
      %v1455 = vsel %vm572, %v1420, 0
      %v1456 = vsel %vm572, %v1422, 0
      %v1457 = vsel %vm572, %v1424, 0
      %v1458 = vsel %vm572, %v1426, 0
      %1475 = vrot.lane.b32.xlu0 %v1235, 32
      %v1476 = vpop.permute.xlu0 %1475
      %1477 = vrot.lane.b32.xlu0 %v1236, 32
      %v1478 = vpop.permute.xlu0 %1477
      %1479 = vrot.lane.b32.xlu0 %v1237, 32
      %v1480 = vpop.permute.xlu0 %1479
      %1481 = vrot.lane.b32.xlu0 %v1238, 32
      %v1482 = vpop.permute.xlu0 %1481
      %1483 = vrot.lane.b32.xlu0 %v1239, 32
      %v1484 = vpop.permute.xlu0 %1483
      %1485 = vrot.lane.b32.xlu0 %v1240, 32
      %v1486 = vpop.permute.xlu0 %1485
      %1487 = vrot.lane.b32.xlu0 %v1241, 32
      %v1488 = vpop.permute.xlu0 %1487
      %1489 = vrot.lane.b32.xlu0 %v1242, 32
      %v1490 = vpop.permute.xlu0 %1489
      %1491 = vrot.lane.b32.xlu0 %v1243, 32
      %v1492 = vpop.permute.xlu0 %1491
      %1493 = vrot.lane.b32.xlu0 %v1244, 32
      %v1494 = vpop.permute.xlu0 %1493
      %1495 = vrot.lane.b32.xlu0 %v1245, 32
      %v1496 = vpop.permute.xlu0 %1495
      %1497 = vrot.lane.b32.xlu0 %v1246, 32
      %v1498 = vpop.permute.xlu0 %1497
      %1499 = vrot.lane.b32.xlu0 %v1247, 32
      %v1500 = vpop.permute.xlu0 %1499
      %1501 = vrot.lane.b32.xlu0 %v1248, 32
      %v1502 = vpop.permute.xlu0 %1501
      %1503 = vrot.lane.b32.xlu0 %v1249, 32
      %v1504 = vpop.permute.xlu0 %1503
      %1505 = vrot.lane.b32.xlu0 %v1250, 32
      %v1506 = vpop.permute.xlu0 %1505
      %1523 = vrot.lane.b32.xlu0 %v1443, 64
      %v1524 = vpop.permute.xlu0 %1523
      %1525 = vrot.lane.b32.xlu0 %v1444, 64
      %v1526 = vpop.permute.xlu0 %1525
      %1527 = vrot.lane.b32.xlu0 %v1445, 64
      %v1528 = vpop.permute.xlu0 %1527
      %1529 = vrot.lane.b32.xlu0 %v1446, 64
      %v1530 = vpop.permute.xlu0 %1529
      %1531 = vrot.lane.b32.xlu0 %v1447, 64
      %v1532 = vpop.permute.xlu0 %1531
      %1533 = vrot.lane.b32.xlu0 %v1448, 64
      %v1534 = vpop.permute.xlu0 %1533
      %1535 = vrot.lane.b32.xlu0 %v1449, 64
      %v1536 = vpop.permute.xlu0 %1535
      %1537 = vrot.lane.b32.xlu0 %v1450, 64
      %v1538 = vpop.permute.xlu0 %1537
      %1539 = vrot.lane.b32.xlu0 %v1451, 64
      %v1540 = vpop.permute.xlu0 %1539
      %1541 = vrot.lane.b32.xlu0 %v1452, 64
      %v1542 = vpop.permute.xlu0 %1541
      %1543 = vrot.lane.b32.xlu0 %v1453, 64
      %v1544 = vpop.permute.xlu0 %1543
      %1545 = vrot.lane.b32.xlu0 %v1454, 64
      %v1546 = vpop.permute.xlu0 %1545
      %1547 = vrot.lane.b32.xlu0 %v1455, 64
      %v1548 = vpop.permute.xlu0 %1547
      %1549 = vrot.lane.b32.xlu0 %v1456, 64
      %v1550 = vpop.permute.xlu0 %1549
      %1551 = vrot.lane.b32.xlu0 %v1457, 64
      %v1552 = vpop.permute.xlu0 %1551
      %1553 = vrot.lane.b32.xlu0 %v1458, 64
      %v1554 = vpop.permute.xlu0 %1553
      %vm1555 = vcmask 261120
      %v1558 = vsel %vm1555, %v1379, %v1476
      %v1561 = vsel %vm1555, %v1380, %v1478
      %v1564 = vsel %vm1555, %v1381, %v1480
      %v1567 = vsel %vm1555, %v1382, %v1482
      %v1570 = vsel %vm1555, %v1383, %v1484
      %v1573 = vsel %vm1555, %v1384, %v1486
      %v1576 = vsel %vm1555, %v1385, %v1488
      %v1579 = vsel %vm1555, %v1386, %v1490
      %v1582 = vsel %vm1555, %v1387, %v1492
      %v1585 = vsel %vm1555, %v1388, %v1494
      %v1588 = vsel %vm1555, %v1389, %v1496
      %v1591 = vsel %vm1555, %v1390, %v1498
      %v1594 = vsel %vm1555, %v1391, %v1500
      %v1597 = vsel %vm1555, %v1392, %v1502
      %v1600 = vsel %vm1555, %v1393, %v1504
      %v1603 = vsel %vm1555, %v1394, %v1506
      %vm1604 = vcmask 523264
      %v1606 = vsel %vm1604, %v1558, %v1524
      %v1609 = vsel %vm1604, %v1561, %v1526
      %v1612 = vsel %vm1604, %v1564, %v1528
      %v1615 = vsel %vm1604, %v1567, %v1530
      %v1618 = vsel %vm1604, %v1570, %v1532
      %v1621 = vsel %vm1604, %v1573, %v1534
      %v1624 = vsel %vm1604, %v1576, %v1536
      %v1627 = vsel %vm1604, %v1579, %v1538
      %v1630 = vsel %vm1604, %v1582, %v1540
      %v1633 = vsel %vm1604, %v1585, %v1542
      %v1636 = vsel %vm1604, %v1588, %v1544
      %v1639 = vsel %vm1604, %v1591, %v1546
      %v1642 = vsel %vm1604, %v1594, %v1548
      %v1645 = vsel %vm1604, %v1597, %v1550
      %v1648 = vsel %vm1604, %v1600, %v1552
      %v1651 = vsel %vm1604, %v1603, %v1554
      %vm1652 = vcmask 785408
      %1653 = vst.msk [vmem:[#allocation3] sm:$0xff] %vm1652, 0
      %1654 = vst.msk [vmem:[#allocation3 + $0x18] sm:$0xff] %vm1652, %v1606
      %1655 = vst.msk [vmem:[#allocation3 + $0x30] sm:$0xff] %vm1652, %v1609
      %1656 = vst.msk [vmem:[#allocation3 + $0x48] sm:$0xff] %vm1652, %v1612
      %1657 = vst.msk [vmem:[#allocation3 + $0x60] sm:$0xff] %vm1652, %v1615
      %1658 = vst.msk [vmem:[#allocation3 + $0x78] sm:$0xff] %vm1652, %v1618
      %1659 = vst.msk [vmem:[#allocation3 + $0x90] sm:$0xff] %vm1652, %v1621
      %1660 = vst.msk [vmem:[#allocation3 + $0xa8] sm:$0xff] %vm1652, %v1624
      %1661 = vst.msk [vmem:[#allocation3 + $0xc0] sm:$0xff] %vm1652, %v1627
      %1662 = vst.msk [vmem:[#allocation3 + $0xd8] sm:$0xff] %vm1652, %v1630
      %1663 = vst.msk [vmem:[#allocation3 + $0xf0] sm:$0xff] %vm1652, %v1633
      %1664 = vst.msk [vmem:[#allocation3 + $0x108] sm:$0xff] %vm1652, %v1636
      %1665 = vst.msk [vmem:[#allocation3 + $0x120] sm:$0xff] %vm1652, %v1639
      %1666 = vst.msk [vmem:[#allocation3 + $0x138] sm:$0xff] %vm1652, %v1642
      %1667 = vst.msk [vmem:[#allocation3 + $0x150] sm:$0xff] %vm1652, %v1645
      %1668 = vst.msk [vmem:[#allocation3 + $0x168] sm:$0xff] %vm1652, %v1648
      %1685 = vrot.lane.b32.xlu0 %v1606, 96
      %v1686 = vpop.permute.xlu0 %1685
      %1687 = vrot.lane.b32.xlu0 %v1609, 96
      %v1688 = vpop.permute.xlu0 %1687
      %1689 = vrot.lane.b32.xlu0 %v1612, 96
      %v1690 = vpop.permute.xlu0 %1689
      %1691 = vrot.lane.b32.xlu0 %v1615, 96
      %v1692 = vpop.permute.xlu0 %1691
      %1693 = vrot.lane.b32.xlu0 %v1618, 96
      %v1694 = vpop.permute.xlu0 %1693
      %1695 = vrot.lane.b32.xlu0 %v1621, 96
      %v1696 = vpop.permute.xlu0 %1695
      %1697 = vrot.lane.b32.xlu0 %v1624, 96
      %v1698 = vpop.permute.xlu0 %1697
      %1699 = vrot.lane.b32.xlu0 %v1627, 96
      %v1700 = vpop.permute.xlu0 %1699
      %1701 = vrot.lane.b32.xlu0 %v1630, 96
      %v1702 = vpop.permute.xlu0 %1701
      %1703 = vrot.lane.b32.xlu0 %v1633, 96
      %v1704 = vpop.permute.xlu0 %1703
      %1705 = vrot.lane.b32.xlu0 %v1636, 96
      %v1706 = vpop.permute.xlu0 %1705
      %1707 = vrot.lane.b32.xlu0 %v1639, 96
      %v1708 = vpop.permute.xlu0 %1707
      %1709 = vrot.lane.b32.xlu0 %v1642, 96
      %v1710 = vpop.permute.xlu0 %1709
      %1711 = vrot.lane.b32.xlu0 %v1645, 96
      %v1712 = vpop.permute.xlu0 %1711
      %1713 = vrot.lane.b32.xlu0 %v1648, 96
      %v1714 = vpop.permute.xlu0 %1713
      %1715 = vrot.lane.b32.xlu0 %v1651, 96
      %v1716 = vpop.permute.xlu0 %1715
      %vm1733 = vcmask 1048320
      %1734 = vst.msk [vmem:[#allocation3] sm:$0xff] %vm1733, %v1686
      %1735 = vst.msk [vmem:[#allocation3 + $0x8] sm:$0xff] %vm1604, %v1686
      %1736 = vst.msk [vmem:[#allocation3 + $0x18] sm:$0xff] %vm1733, %v1688
      %1737 = vst.msk [vmem:[#allocation3 + $0x20] sm:$0xff] %vm1604, %v1688
      %1738 = vst.msk [vmem:[#allocation3 + $0x30] sm:$0xff] %vm1733, %v1690
      %1739 = vst.msk [vmem:[#allocation3 + $0x38] sm:$0xff] %vm1604, %v1690
      %1740 = vst.msk [vmem:[#allocation3 + $0x48] sm:$0xff] %vm1733, %v1692
      %1741 = vst.msk [vmem:[#allocation3 + $0x50] sm:$0xff] %vm1604, %v1692
      %1742 = vst.msk [vmem:[#allocation3 + $0x60] sm:$0xff] %vm1733, %v1694
      %1743 = vst.msk [vmem:[#allocation3 + $0x68] sm:$0xff] %vm1604, %v1694
      %1744 = vst.msk [vmem:[#allocation3 + $0x78] sm:$0xff] %vm1733, %v1696
      %1745 = vst.msk [vmem:[#allocation3 + $0x80] sm:$0xff] %vm1604, %v1696
      %1746 = vst.msk [vmem:[#allocation3 + $0x90] sm:$0xff] %vm1733, %v1698
      %1747 = vst.msk [vmem:[#allocation3 + $0x98] sm:$0xff] %vm1604, %v1698
      %1748 = vst.msk [vmem:[#allocation3 + $0xa8] sm:$0xff] %vm1733, %v1700
      %1749 = vst.msk [vmem:[#allocation3 + $0xb0] sm:$0xff] %vm1604, %v1700
      %1750 = vst.msk [vmem:[#allocation3 + $0xc0] sm:$0xff] %vm1733, %v1702
      %1751 = vst.msk [vmem:[#allocation3 + $0xc8] sm:$0xff] %vm1604, %v1702
      %1752 = vst.msk [vmem:[#allocation3 + $0xd8] sm:$0xff] %vm1733, %v1704
      %1753 = vst.msk [vmem:[#allocation3 + $0xe0] sm:$0xff] %vm1604, %v1704
      %1754 = vst.msk [vmem:[#allocation3 + $0xf0] sm:$0xff] %vm1733, %v1706
      %1755 = vst.msk [vmem:[#allocation3 + $0xf8] sm:$0xff] %vm1604, %v1706
      %1756 = vst.msk [vmem:[#allocation3 + $0x108] sm:$0xff] %vm1733, %v1708
      %1757 = vst.msk [vmem:[#allocation3 + $0x110] sm:$0xff] %vm1604, %v1708
      %1758 = vst.msk [vmem:[#allocation3 + $0x120] sm:$0xff] %vm1733, %v1710
      %1759 = vst.msk [vmem:[#allocation3 + $0x128] sm:$0xff] %vm1604, %v1710
      %1760 = vst.msk [vmem:[#allocation3 + $0x138] sm:$0xff] %vm1733, %v1712
      %1761 = vst.msk [vmem:[#allocation3 + $0x140] sm:$0xff] %vm1604, %v1712
      %1762 = vst.msk [vmem:[#allocation3 + $0x150] sm:$0xff] %vm1733, %v1714
      %1763 = vst.msk [vmem:[#allocation3 + $0x158] sm:$0xff] %vm1604, %v1714
      %1764 = vst.msk [vmem:[#allocation3 + $0x168] sm:$0xff] %vm1733, %v1716
      %1765 = vst.msk [vmem:[#allocation3 + $0x170] sm:$0xff] %vm1604, %v1716
      %1766 = vrot.lane.b32.xlu0 %v1609, 64
      %v1767 = vpop.permute.xlu0 %1766
      %1768 = vrot.lane.b32.xlu0 %v1612, 64
      %v1769 = vpop.permute.xlu0 %1768
      %1770 = vrot.lane.b32.xlu0 %v1615, 64
      %v1771 = vpop.permute.xlu0 %1770
      %1772 = vrot.lane.b32.xlu0 %v1618, 64
      %v1773 = vpop.permute.xlu0 %1772
      %1774 = vrot.lane.b32.xlu0 %v1621, 64
      %v1775 = vpop.permute.xlu0 %1774
      %1776 = vrot.lane.b32.xlu0 %v1624, 64
      %v1777 = vpop.permute.xlu0 %1776
      %1778 = vrot.lane.b32.xlu0 %v1627, 64
      %v1779 = vpop.permute.xlu0 %1778
      %1780 = vrot.lane.b32.xlu0 %v1630, 64
      %v1781 = vpop.permute.xlu0 %1780
      %1782 = vrot.lane.b32.xlu0 %v1633, 64
      %v1783 = vpop.permute.xlu0 %1782
      %1784 = vrot.lane.b32.xlu0 %v1636, 64
      %v1785 = vpop.permute.xlu0 %1784
      %1786 = vrot.lane.b32.xlu0 %v1639, 64
      %v1787 = vpop.permute.xlu0 %1786
      %1788 = vrot.lane.b32.xlu0 %v1642, 64
      %v1789 = vpop.permute.xlu0 %1788
      %1790 = vrot.lane.b32.xlu0 %v1645, 64
      %v1791 = vpop.permute.xlu0 %1790
      %1792 = vrot.lane.b32.xlu0 %v1648, 64
      %v1793 = vpop.permute.xlu0 %1792
      %1794 = vrot.lane.b32.xlu0 %v1651, 64
      %v1795 = vpop.permute.xlu0 %1794
      %1796 = vrot.lane.b32.xlu0 0, 64
      %v1797 = vpop.permute.xlu0 %1796
      %vm1814 = vcmask 1048064
      %1815 = vst.msk [vmem:[#allocation3 + $0x8] sm:$0xff] %vm1814, %v1767
      %1816 = vst.msk [vmem:[#allocation3 + $0x10] sm:$0xff] %vm1555, %v1767
      %1817 = vst.msk [vmem:[#allocation3 + $0x20] sm:$0xff] %vm1814, %v1769
      %1818 = vst.msk [vmem:[#allocation3 + $0x28] sm:$0xff] %vm1555, %v1769
      %1819 = vst.msk [vmem:[#allocation3 + $0x38] sm:$0xff] %vm1814, %v1771
      %1820 = vst.msk [vmem:[#allocation3 + $0x40] sm:$0xff] %vm1555, %v1771
      %1821 = vst.msk [vmem:[#allocation3 + $0x50] sm:$0xff] %vm1814, %v1773
      %1822 = vst.msk [vmem:[#allocation3 + $0x58] sm:$0xff] %vm1555, %v1773
      %1823 = vst.msk [vmem:[#allocation3 + $0x68] sm:$0xff] %vm1814, %v1775
      %1824 = vst.msk [vmem:[#allocation3 + $0x70] sm:$0xff] %vm1555, %v1775
      %1825 = vst.msk [vmem:[#allocation3 + $0x80] sm:$0xff] %vm1814, %v1777
      %1826 = vst.msk [vmem:[#allocation3 + $0x88] sm:$0xff] %vm1555, %v1777
      %1827 = vst.msk [vmem:[#allocation3 + $0x98] sm:$0xff] %vm1814, %v1779
      %1828 = vst.msk [vmem:[#allocation3 + $0xa0] sm:$0xff] %vm1555, %v1779
      %1829 = vst.msk [vmem:[#allocation3 + $0xb0] sm:$0xff] %vm1814, %v1781
      %1830 = vst.msk [vmem:[#allocation3 + $0xb8] sm:$0xff] %vm1555, %v1781
      %1831 = vst.msk [vmem:[#allocation3 + $0xc8] sm:$0xff] %vm1814, %v1783
      %1832 = vst.msk [vmem:[#allocation3 + $0xd0] sm:$0xff] %vm1555, %v1783
      %1833 = vst.msk [vmem:[#allocation3 + $0xe0] sm:$0xff] %vm1814, %v1785
      %1834 = vst.msk [vmem:[#allocation3 + $0xe8] sm:$0xff] %vm1555, %v1785
      %1835 = vst.msk [vmem:[#allocation3 + $0xf8] sm:$0xff] %vm1814, %v1787
      %1836 = vst.msk [vmem:[#allocation3 + $0x100] sm:$0xff] %vm1555, %v1787
      %1837 = vst.msk [vmem:[#allocation3 + $0x110] sm:$0xff] %vm1814, %v1789
      %1838 = vst.msk [vmem:[#allocation3 + $0x118] sm:$0xff] %vm1555, %v1789
      %1839 = vst.msk [vmem:[#allocation3 + $0x128] sm:$0xff] %vm1814, %v1791
      %1840 = vst.msk [vmem:[#allocation3 + $0x130] sm:$0xff] %vm1555, %v1791
      %1841 = vst.msk [vmem:[#allocation3 + $0x140] sm:$0xff] %vm1814, %v1793
      %1842 = vst.msk [vmem:[#allocation3 + $0x148] sm:$0xff] %vm1555, %v1793
      %1843 = vst.msk [vmem:[#allocation3 + $0x158] sm:$0xff] %vm1814, %v1795
      %1844 = vst.msk [vmem:[#allocation3 + $0x160] sm:$0xff] %vm1555, %v1795
      %1845 = vst.msk [vmem:[#allocation3 + $0x170] sm:$0xff] %vm1814, %v1797
      %1846 = vst.msk [vmem:[#allocation3 + $0x178] sm:$0xff] %vm1555, %v1797
      %v1847 = vld [vmem:[#allocation3] sm:$0xff]
      %v1848 = vld [vmem:[#allocation3 + $0x8] sm:$0xff]
      %v1849 = vld [vmem:[#allocation3 + $0x10] sm:$0xff]
      %v1850 = vld [vmem:[#allocation3 + $0x18] sm:$0xff]
      %v1851 = vld [vmem:[#allocation3 + $0x20] sm:$0xff]
      %v1852 = vld [vmem:[#allocation3 + $0x28] sm:$0xff]
      %v1853 = vld [vmem:[#allocation3 + $0x30] sm:$0xff]
      %v1854 = vld [vmem:[#allocation3 + $0x38] sm:$0xff]
      %v1855 = vld [vmem:[#allocation3 + $0x40] sm:$0xff]
      %v1856 = vld [vmem:[#allocation3 + $0x48] sm:$0xff]
      %v1857 = vld [vmem:[#allocation3 + $0x50] sm:$0xff]
      %v1858 = vld [vmem:[#allocation3 + $0x58] sm:$0xff]
      %v1859 = vld [vmem:[#allocation3 + $0x60] sm:$0xff]
      %v1860 = vld [vmem:[#allocation3 + $0x68] sm:$0xff]
      %v1861 = vld [vmem:[#allocation3 + $0x70] sm:$0xff]
      %v1862 = vld [vmem:[#allocation3 + $0x78] sm:$0xff]
      %v1863 = vld [vmem:[#allocation3 + $0x80] sm:$0xff]
      %v1864 = vld [vmem:[#allocation3 + $0x88] sm:$0xff]
      %v1865 = vld [vmem:[#allocation3 + $0x90] sm:$0xff]
      %v1866 = vld [vmem:[#allocation3 + $0x98] sm:$0xff]
      %v1867 = vld [vmem:[#allocation3 + $0xa0] sm:$0xff]
      %v1868 = vld [vmem:[#allocation3 + $0xa8] sm:$0xff]
      %v1869 = vld [vmem:[#allocation3 + $0xb0] sm:$0xff]
      %v1870 = vld [vmem:[#allocation3 + $0xb8] sm:$0xff]
      %v1871 = vld [vmem:[#allocation3 + $0xc0] sm:$0xff]
      %v1872 = vld [vmem:[#allocation3 + $0xc8] sm:$0xff]
      %v1873 = vld [vmem:[#allocation3 + $0xd0] sm:$0xff]
      %v1874 = vld [vmem:[#allocation3 + $0xd8] sm:$0xff]
      %v1875 = vld [vmem:[#allocation3 + $0xe0] sm:$0xff]
      %v1876 = vld [vmem:[#allocation3 + $0xe8] sm:$0xff]
      %v1877 = vld [vmem:[#allocation3 + $0xf0] sm:$0xff]
      %v1878 = vld [vmem:[#allocation3 + $0xf8] sm:$0xff]
      %v1879 = vld [vmem:[#allocation3 + $0x100] sm:$0xff]
      %v1880 = vld [vmem:[#allocation3 + $0x108] sm:$0xff]
      %v1881 = vld [vmem:[#allocation3 + $0x110] sm:$0xff]
      %v1882 = vld [vmem:[#allocation3 + $0x118] sm:$0xff]
      %v1883 = vld [vmem:[#allocation3 + $0x120] sm:$0xff]
      %v1884 = vld [vmem:[#allocation3 + $0x128] sm:$0xff]
      %v1885 = vld [vmem:[#allocation3 + $0x130] sm:$0xff]
      %v1886 = vld [vmem:[#allocation3 + $0x138] sm:$0xff]
      %v1887 = vld [vmem:[#allocation3 + $0x140] sm:$0xff]
      %v1888 = vld [vmem:[#allocation3 + $0x148] sm:$0xff]
      %v1889 = vld [vmem:[#allocation3 + $0x150] sm:$0xff]
      %v1890 = vld [vmem:[#allocation3 + $0x158] sm:$0xff]
      %v1891 = vld [vmem:[#allocation3 + $0x160] sm:$0xff]
      %v1892 = vld [vmem:[#allocation3 + $0x168] sm:$0xff]
      %v1893 = vld [vmem:[#allocation3 + $0x170] sm:$0xff]
      %v1894 = vld [vmem:[#allocation3 + $0x178] sm:$0xff]
      %v1895 = vld [vmem:[%s4] sm:$0xf]
      %v1896 = vld [vmem:[%s4 + $0x4] sm:$0xf]
      %v1897 = vld [vmem:[%s4 + $0x8] sm:$0xf]
      %v1898 = vld [vmem:[%s4 + $0xc] sm:$0xf]
      %v1899 = vld [vmem:[%s4 + $0x10] sm:$0xf]
      %v1900 = vld [vmem:[%s4 + $0x14] sm:$0xf]
      %v1901 = vld [vmem:[%s4 + $0x18] sm:$0xf]
      %v1902 = vld [vmem:[%s4 + $0x1c] sm:$0xf]
      %v1903 = vld [vmem:[%s4 + $0x20] sm:$0xf]
      %v1904 = vld [vmem:[%s4 + $0x24] sm:$0xf]
      %v1905 = vld [vmem:[%s4 + $0x28] sm:$0xf]
      %v1906 = vld [vmem:[%s4 + $0x2c] sm:$0xf]
      %v1907 = vld [vmem:[%s4 + $0x30] sm:$0xf]
      %v1908 = vld [vmem:[%s4 + $0x34] sm:$0xf]
      %v1909 = vld [vmem:[%s4 + $0x38] sm:$0xf]
      %v1910 = vld [vmem:[%s4 + $0x3c] sm:$0xf]
      %v1911 = vld [vmem:[%s4 + $0x40] sm:$0xf]
      %v1912 = vld [vmem:[%s4 + $0x44] sm:$0xf]
      %v1913 = vld [vmem:[%s4 + $0x48] sm:$0xf]
      %v1914 = vld [vmem:[%s4 + $0x4c] sm:$0xf]
      %v1915 = vld [vmem:[%s4 + $0x50] sm:$0xf]
      %v1916 = vld [vmem:[%s4 + $0x54] sm:$0xf]
      %v1917 = vld [vmem:[%s4 + $0x58] sm:$0xf]
      %v1918 = vld [vmem:[%s4 + $0x5c] sm:$0xf]
      %v1919 = vld [vmem:[%s4 + $0x60] sm:$0xf]
      %v1920 = vld [vmem:[%s4 + $0x64] sm:$0xf]
      %v1921 = vld [vmem:[%s4 + $0x68] sm:$0xf]
      %v1922 = vld [vmem:[%s4 + $0x6c] sm:$0xf]
      %v1923 = vld [vmem:[%s4 + $0x70] sm:$0xf]
      %v1924 = vld [vmem:[%s4 + $0x74] sm:$0xf]
      %v1925 = vld [vmem:[%s4 + $0x78] sm:$0xf]
      %v1926 = vld [vmem:[%s4 + $0x7c] sm:$0xf]
      %v1927 = vld [vmem:[%s4 + $0x80] sm:$0xf]
      %v1928 = vld [vmem:[%s4 + $0x84] sm:$0xf]
      %v1929 = vld [vmem:[%s4 + $0x88] sm:$0xf]
      %v1930 = vld [vmem:[%s4 + $0x8c] sm:$0xf]
      %v1931 = vld [vmem:[%s5] sm:$0x1]
      %v1933 = vlaneseq
      %v1934 = vshrl.u32 %v1933, 7
      %v1935 = vsub.s32 0, %v1934
      %v1936 = vrot.slane %v1931, %v1935
      %v1974 = vunpack.c.l.b16 %v1895
      %v1975 = vunpack.c.l.b16 %v1896
      %v1976 = vunpack.c.l.b16 %v1897
      %v1977 = vunpack.c.l.b16 %v1898
      %v1978 = vunpack.c.l.b16 %v1899
      %v1979 = vunpack.c.l.b16 %v1900
      %v1980 = vunpack.c.l.b16 %v1901
      %v1981 = vunpack.c.l.b16 %v1902
      %v1982 = vunpack.c.l.b16 %v1903
      %v1983 = vunpack.c.l.b16 %v1904
      %v1984 = vunpack.c.l.b16 %v1905
      %v1985 = vunpack.c.l.b16 %v1906
      %v1986 = vunpack.c.l.b16 %v1907
      %v1987 = vunpack.c.l.b16 %v1908
      %v1988 = vunpack.c.l.b16 %v1909
      %v1989 = vunpack.c.l.b16 %v1910
      %v1990 = vunpack.c.l.b16 %v1911
      %v1991 = vunpack.c.l.b16 %v1912
      %v1992 = vunpack.c.l.b16 %v1913
      %v1993 = vunpack.c.l.b16 %v1914
      %v1994 = vunpack.c.l.b16 %v1915
      %v1995 = vunpack.c.l.b16 %v1916
      %v1996 = vunpack.c.l.b16 %v1917
      %v1997 = vunpack.c.l.b16 %v1918
      %v1998 = vunpack.c.l.b16 %v1919
      %v1999 = vunpack.c.l.b16 %v1920
      %v2000 = vunpack.c.l.b16 %v1921
      %v2001 = vunpack.c.l.b16 %v1922
      %v2002 = vunpack.c.l.b16 %v1923
      %v2003 = vunpack.c.l.b16 %v1924
      %v2004 = vunpack.c.l.b16 %v1925
      %v2005 = vunpack.c.l.b16 %v1926
      %v2006 = vunpack.c.l.b16 %v1927
      %v2007 = vunpack.c.l.b16 %v1928
      %v2008 = vunpack.c.l.b16 %v1929
      %v2009 = vunpack.c.l.b16 %v1930
      %v2010 = vpack.c.b16 %v1975, %v1974
      %v2011 = vpack.c.b16 %v1977, %v1976
      %v2012 = vpack.c.b16 %v1979, %v1978
      %v2013 = vpack.c.b16 %v1981, %v1980
      %v2014 = vpack.c.b16 %v1983, %v1982
      %v2015 = vpack.c.b16 %v1985, %v1984
      %v2016 = vpack.c.b16 %v1987, %v1986
      %v2017 = vpack.c.b16 %v1989, %v1988
      %v2018 = vpack.c.b16 %v1991, %v1990
      %v2019 = vpack.c.b16 %v1993, %v1992
      %v2020 = vpack.c.b16 %v1995, %v1994
      %v2021 = vpack.c.b16 %v1997, %v1996
      %v2022 = vpack.c.b16 %v1999, %v1998
      %v2023 = vpack.c.b16 %v2001, %v2000
      %v2024 = vpack.c.b16 %v2003, %v2002
      %v2025 = vpack.c.b16 %v2005, %v2004
      %v2026 = vpack.c.b16 %v2007, %v2006
      %v2027 = vpack.c.b16 %v2009, %v2008
      %v2047 = vsel %vm1555, %v1849, 0
      %v2050 = vsel %vm1555, %v1852, 0
      %v2053 = vsel %vm1555, %v1855, 0
      %v2056 = vsel %vm1555, %v1858, 0
      %v2059 = vsel %vm1555, %v1861, 0
      %v2062 = vsel %vm1555, %v1864, 0
      %v2065 = vsel %vm1555, %v1867, 0
      %v2068 = vsel %vm1555, %v1870, 0
      %v2071 = vsel %vm1555, %v1873, 0
      %v2074 = vsel %vm1555, %v1876, 0
      %v2077 = vsel %vm1555, %v1879, 0
      %v2080 = vsel %vm1555, %v1882, 0
      %v2083 = vsel %vm1555, %v1885, 0
      %v2086 = vsel %vm1555, %v1888, 0
      %v2089 = vsel %vm1555, %v1891, 0
      %v2092 = vsel %vm1555, %v1894, 0
      %2094 = vmatprep.subr.bf16.mxu0 0
      %2095 = vmatpush1.bf16.msra.mxu0 %v2010
      %2096 = vmatprep.subr.bf16.mxu0 0
      %2097 = vmatpush1.bf16.msra.mxu0 %v2011
      %2098 = vmatprep.subr.bf16.mxu0 0
      %2099 = vmatpush1.bf16.msra.mxu0 %v2012
      %2100 = vmatprep.subr.bf16.mxu0 0
      %2101 = vmatpush1.bf16.msra.mxu0 %v2013
      %2102 = vmatprep.subr.bf16.mxu0 0
      %2103 = vmatpush1.bf16.msra.mxu0 %v2014
      %2104 = vmatprep.subr.bf16.mxu0 0
      %2105 = vmatpush1.bf16.msra.mxu0 %v2015
      %2106 = vmatprep.subr.bf16.mxu0 0
      %2107 = vmatpush1.bf16.msra.mxu0 %v2016
      %2108 = vmatprep.subr.bf16.mxu0 0
      %2109 = vmatpush1.bf16.msra.mxu0 %v2017
      %2110 = vmatprep.subr.bf16.mxu0 0
      %2111 = vmatpush1.bf16.msra.mxu0 %v2018
      %2112 = vmatprep.subr.bf16.mxu0 0
      %2113 = vmatpush1.bf16.msra.mxu0 %v2019
      %2114 = vmatprep.subr.bf16.mxu0 0
      %2115 = vmatpush1.bf16.msra.mxu0 %v2020
      %2116 = vmatprep.subr.bf16.mxu0 0
      %2117 = vmatpush1.bf16.msra.mxu0 %v2021
      %2118 = vmatprep.subr.bf16.mxu0 0
      %2119 = vmatpush1.bf16.msra.mxu0 %v2022
      %2120 = vmatprep.subr.bf16.mxu0 0
      %2121 = vmatpush1.bf16.msra.mxu0 %v2023
      %2122 = vmatprep.subr.bf16.mxu0 0
      %2123 = vmatpush1.bf16.msra.mxu0 %v2024
      %2124 = vmatprep.subr.bf16.mxu0 0
      %2125 = vmatpush1.bf16.msra.mxu0 %v2025
      %2126 = vmatprep.mubr.bf16.mxu0 %v1848
      %2127 = vmatmul.mubr.bf16.gmra.mrb[0].mxu0 %v1847
      %v2128 = vpop.f32.mrb[0].mxu0
      %v2129 = vadd.f32 %v1936, %v2128
      %v2130 = vpop.f32.mrb[0].mxu0
      %v2131 = vpop.f32.mrb[0].mxu0
      %v2132 = vadd.f32 %v1936, %v2131
      %v2133 = vpop.f32.mrb[0].mxu0
      %2134 = vmatprep.mubr.bf16.mxu0 %v1851
      %2135 = vmatmul.mubr.bf16.gmra.mrb[0].mxu0 %v1850
      %v2136 = vpop.f32.mrb[0].mxu0
      %v2137 = vadd.f32 %v1936, %v2136
      %v2138 = vpop.f32.mrb[0].mxu0
      %v2139 = vpop.f32.mrb[0].mxu0
      %v2140 = vadd.f32 %v1936, %v2139
      %v2141 = vpop.f32.mrb[0].mxu0
      %2142 = vmatprep.mubr.bf16.mxu0 %v1854
      %2143 = vmatmul.mubr.bf16.gmra.mrb[0].mxu0 %v1853
      %v2144 = vpop.f32.mrb[0].mxu0
      %v2145 = vadd.f32 %v1936, %v2144
      %v2146 = vpop.f32.mrb[0].mxu0
      %v2147 = vpop.f32.mrb[0].mxu0
      %v2148 = vadd.f32 %v1936, %v2147
      %v2149 = vpop.f32.mrb[0].mxu0
      %2150 = vmatprep.mubr.bf16.mxu0 %v1857
      %2151 = vmatmul.mubr.bf16.gmra.mrb[0].mxu0 %v1856
      %v2152 = vpop.f32.mrb[0].mxu0
      %v2153 = vadd.f32 %v1936, %v2152
      %v2154 = vpop.f32.mrb[0].mxu0
      %v2155 = vpop.f32.mrb[0].mxu0
      %v2156 = vadd.f32 %v1936, %v2155
      %v2157 = vpop.f32.mrb[0].mxu0
      %2158 = vmatprep.mubr.bf16.mxu0 %v1860
      %2159 = vmatmul.mubr.bf16.gmra.mrb[0].mxu0 %v1859
      %v2160 = vpop.f32.mrb[0].mxu0
      %v2161 = vadd.f32 %v1936, %v2160
      %v2162 = vpop.f32.mrb[0].mxu0
      %v2163 = vpop.f32.mrb[0].mxu0
      %v2164 = vadd.f32 %v1936, %v2163
      %v2165 = vpop.f32.mrb[0].mxu0
      %2166 = vmatprep.mubr.bf16.mxu0 %v1863
      %2167 = vmatmul.mubr.bf16.gmra.mrb[0].mxu0 %v1862
      %v2168 = vpop.f32.mrb[0].mxu0
      %v2169 = vadd.f32 %v1936, %v2168
      %v2170 = vpop.f32.mrb[0].mxu0
      %v2171 = vpop.f32.mrb[0].mxu0
      %v2172 = vadd.f32 %v1936, %v2171
      %v2173 = vpop.f32.mrb[0].mxu0
      %2174 = vmatprep.mubr.bf16.mxu0 %v1866
      %2175 = vmatmul.mubr.bf16.gmra.mrb[0].mxu0 %v1865
      %v2176 = vpop.f32.mrb[0].mxu0
      %v2177 = vadd.f32 %v1936, %v2176
      %v2178 = vpop.f32.mrb[0].mxu0
      %v2179 = vpop.f32.mrb[0].mxu0
      %v2180 = vadd.f32 %v1936, %v2179
      %v2181 = vpop.f32.mrb[0].mxu0
      %2182 = vmatprep.mubr.bf16.mxu0 %v1869
      %2183 = vmatmul.mubr.bf16.gmra.mrb[0].mxu0 %v1868
      %v2184 = vpop.f32.mrb[0].mxu0
      %v2185 = vadd.f32 %v1936, %v2184
      %v2186 = vpop.f32.mrb[0].mxu0
      %v2187 = vpop.f32.mrb[0].mxu0
      %v2188 = vadd.f32 %v1936, %v2187
      %v2189 = vpop.f32.mrb[0].mxu0
      %2190 = vmatprep.mubr.bf16.mxu0 %v1872
      %2191 = vmatmul.mubr.bf16.gmra.mrb[0].mxu0 %v1871
      %v2192 = vpop.f32.mrb[0].mxu0
      %v2193 = vadd.f32 %v1936, %v2192
      %v2194 = vpop.f32.mrb[0].mxu0
      %v2195 = vpop.f32.mrb[0].mxu0
      %v2196 = vadd.f32 %v1936, %v2195
      %v2197 = vpop.f32.mrb[0].mxu0
      %2198 = vmatprep.mubr.bf16.mxu0 %v1875
      %2199 = vmatmul.mubr.bf16.gmra.mrb[0].mxu0 %v1874
      %v2200 = vpop.f32.mrb[0].mxu0
      %v2201 = vadd.f32 %v1936, %v2200
      %v2202 = vpop.f32.mrb[0].mxu0
      %v2203 = vpop.f32.mrb[0].mxu0
      %v2204 = vadd.f32 %v1936, %v2203
      %v2205 = vpop.f32.mrb[0].mxu0
      %2206 = vmatprep.mubr.bf16.mxu0 %v1878
      %2207 = vmatmul.mubr.bf16.gmra.mrb[0].mxu0 %v1877
      %v2208 = vpop.f32.mrb[0].mxu0
      %v2209 = vadd.f32 %v1936, %v2208
      %v2210 = vpop.f32.mrb[0].mxu0
      %v2211 = vpop.f32.mrb[0].mxu0
      %v2212 = vadd.f32 %v1936, %v2211
      %v2213 = vpop.f32.mrb[0].mxu0
      %2214 = vmatprep.mubr.bf16.mxu0 %v1881
      %2215 = vmatmul.mubr.bf16.gmra.mrb[0].mxu0 %v1880
      %v2216 = vpop.f32.mrb[0].mxu0
      %v2217 = vadd.f32 %v1936, %v2216
      %v2218 = vpop.f32.mrb[0].mxu0
      %v2219 = vpop.f32.mrb[0].mxu0
      %v2220 = vadd.f32 %v1936, %v2219
      %v2221 = vpop.f32.mrb[0].mxu0
      %2222 = vmatprep.mubr.bf16.mxu0 %v1884
      %2223 = vmatmul.mubr.bf16.gmra.mrb[0].mxu0 %v1883
      %v2224 = vpop.f32.mrb[0].mxu0
      %v2225 = vadd.f32 %v1936, %v2224
      %v2226 = vpop.f32.mrb[0].mxu0
      %v2227 = vpop.f32.mrb[0].mxu0
      %v2228 = vadd.f32 %v1936, %v2227
      %v2229 = vpop.f32.mrb[0].mxu0
      %2230 = vmatprep.mubr.bf16.mxu0 %v1887
      %2231 = vmatmul.mubr.bf16.gmra.mrb[0].mxu0 %v1886
      %v2232 = vpop.f32.mrb[0].mxu0
      %v2233 = vadd.f32 %v1936, %v2232
      %v2234 = vpop.f32.mrb[0].mxu0
      %v2235 = vpop.f32.mrb[0].mxu0
      %v2236 = vadd.f32 %v1936, %v2235
      %v2237 = vpop.f32.mrb[0].mxu0
      %2238 = vmatprep.mubr.bf16.mxu0 %v1890
      %2239 = vmatmul.mubr.bf16.gmra.mrb[0].mxu0 %v1889
      %v2240 = vpop.f32.mrb[0].mxu0
      %v2241 = vadd.f32 %v1936, %v2240
      %v2242 = vpop.f32.mrb[0].mxu0
      %v2243 = vpop.f32.mrb[0].mxu0
      %v2244 = vadd.f32 %v1936, %v2243
      %v2245 = vpop.f32.mrb[0].mxu0
      %2246 = vmatprep.mubr.bf16.mxu0 %v1893
      %2247 = vmatmul.mubr.bf16.gmra.mrb[0].mxu0 %v1892
      %v2248 = vpop.f32.mrb[0].mxu0
      %v2249 = vadd.f32 %v1936, %v2248
      %v2250 = vpop.f32.mrb[0].mxu0
      %v2251 = vpop.f32.mrb[0].mxu0
      %v2252 = vadd.f32 %v1936, %v2251
      %v2253 = vpop.f32.mrb[0].mxu0
      %2254 = vdwg.mxu0
      %2255 = vmatprep.subr.bf16.mxu0 0
      %2256 = vmatpush1.bf16.msra.mxu0 %v2026
      %2257 = vmatprep.subr.bf16.mxu0 0
      %2258 = vmatpush1.bf16.msra.mxu0 %v2027
      %2259 = vmatprep.subr.bf16.mxu0 0
      %2260 = vmatpush1.bf16.msra.mxu0 0
      %2261 = vmatprep.subr.bf16.mxu0 0
      %2262 = vmatpush1.bf16.msra.mxu0 0
      %2263 = vmatprep.subr.bf16.mxu0 0
      %2264 = vmatpush1.bf16.msra.mxu0 0
      %2265 = vmatprep.subr.bf16.mxu0 0
      %2266 = vmatpush1.bf16.msra.mxu0 0
      %2267 = vmatprep.subr.bf16.mxu0 0
      %2268 = vmatpush1.bf16.msra.mxu0 0
      %2269 = vmatprep.subr.bf16.mxu0 0
      %2270 = vmatpush1.bf16.msra.mxu0 0
      %2271 = vmatprep.subr.bf16.mxu0 0
      %2272 = vmatpush1.bf16.msra.mxu0 0
      %2273 = vmatprep.subr.bf16.mxu0 0
      %2274 = vmatpush1.bf16.msra.mxu0 0
      %2275 = vmatprep.subr.bf16.mxu0 0
      %2276 = vmatpush1.bf16.msra.mxu0 0
      %2277 = vmatprep.subr.bf16.mxu0 0
      %2278 = vmatpush1.bf16.msra.mxu0 0
      %2279 = vmatprep.subr.bf16.mxu0 0
      %2280 = vmatpush1.bf16.msra.mxu0 0
      %2281 = vmatprep.subr.bf16.mxu0 0
      %2282 = vmatpush1.bf16.msra.mxu0 0
      %2283 = vmatprep.subr.bf16.mxu0 0
      %2284 = vmatpush1.bf16.msra.mxu0 0
      %2285 = vmatprep.subr.bf16.mxu0 0
      %2286 = vmatpush1.bf16.msra.mxu0 0
      %2287 = vmatprep.mubr.bf16.mxu0 0
      %2288 = vmatmul.mubr.bf16.gmra.mrb[0].mxu0 %v2047
      %v2289 = vpop.f32.mrb[0].mxu0
      %v2290 = vadd.f32 %v2129, %v2289
      %v2291 = vpop.f32.mrb[0].mxu0
      %v2292 = vpop.f32.mrb[0].mxu0
      %v2293 = vadd.f32 %v2132, %v2292
      %v2294 = vpop.f32.mrb[0].mxu0
      %2295 = vmatprep.mubr.bf16.mxu0 0
      %2296 = vmatmul.mubr.bf16.gmra.mrb[0].mxu0 %v2050
      %v2297 = vpop.f32.mrb[0].mxu0
      %v2298 = vadd.f32 %v2137, %v2297
      %v2299 = vpop.f32.mrb[0].mxu0
      %v2300 = vpop.f32.mrb[0].mxu0
      %v2301 = vadd.f32 %v2140, %v2300
      %v2302 = vpop.f32.mrb[0].mxu0
      %2303 = vmatprep.mubr.bf16.mxu0 0
      %2304 = vmatmul.mubr.bf16.gmra.mrb[0].mxu0 %v2053
      %v2305 = vpop.f32.mrb[0].mxu0
      %v2306 = vadd.f32 %v2145, %v2305
      %v2307 = vpop.f32.mrb[0].mxu0
      %v2308 = vpop.f32.mrb[0].mxu0
      %v2309 = vadd.f32 %v2148, %v2308
      %v2310 = vpop.f32.mrb[0].mxu0
      %2311 = vmatprep.mubr.bf16.mxu0 0
      %2312 = vmatmul.mubr.bf16.gmra.mrb[0].mxu0 %v2056
      %v2313 = vpop.f32.mrb[0].mxu0
      %v2314 = vadd.f32 %v2153, %v2313
      %v2315 = vpop.f32.mrb[0].mxu0
      %v2316 = vpop.f32.mrb[0].mxu0
      %v2317 = vadd.f32 %v2156, %v2316
      %v2318 = vpop.f32.mrb[0].mxu0
      %2319 = vmatprep.mubr.bf16.mxu0 0
      %2320 = vmatmul.mubr.bf16.gmra.mrb[0].mxu0 %v2059
      %v2321 = vpop.f32.mrb[0].mxu0
      %v2322 = vadd.f32 %v2161, %v2321
      %v2323 = vpop.f32.mrb[0].mxu0
      %v2324 = vpop.f32.mrb[0].mxu0
      %v2325 = vadd.f32 %v2164, %v2324
      %v2326 = vpop.f32.mrb[0].mxu0
      %2327 = vmatprep.mubr.bf16.mxu0 0
      %2328 = vmatmul.mubr.bf16.gmra.mrb[0].mxu0 %v2062
      %v2329 = vpop.f32.mrb[0].mxu0
      %v2330 = vadd.f32 %v2169, %v2329
      %v2331 = vpop.f32.mrb[0].mxu0
      %v2332 = vpop.f32.mrb[0].mxu0
      %v2333 = vadd.f32 %v2172, %v2332
      %v2334 = vpop.f32.mrb[0].mxu0
      %2335 = vmatprep.mubr.bf16.mxu0 0
      %2336 = vmatmul.mubr.bf16.gmra.mrb[0].mxu0 %v2065
      %v2337 = vpop.f32.mrb[0].mxu0
      %v2338 = vadd.f32 %v2177, %v2337
      %v2339 = vpop.f32.mrb[0].mxu0
      %v2340 = vpop.f32.mrb[0].mxu0
      %v2341 = vadd.f32 %v2180, %v2340
      %v2342 = vpop.f32.mrb[0].mxu0
      %2343 = vmatprep.mubr.bf16.mxu0 0
      %2344 = vmatmul.mubr.bf16.gmra.mrb[0].mxu0 %v2068
      %v2345 = vpop.f32.mrb[0].mxu0
      %v2346 = vadd.f32 %v2185, %v2345
      %v2347 = vpop.f32.mrb[0].mxu0
      %v2348 = vpop.f32.mrb[0].mxu0
      %v2349 = vadd.f32 %v2188, %v2348
      %v2350 = vpop.f32.mrb[0].mxu0
      %2351 = vmatprep.mubr.bf16.mxu0 0
      %2352 = vmatmul.mubr.bf16.gmra.mrb[0].mxu0 %v2071
      %v2353 = vpop.f32.mrb[0].mxu0
      %v2354 = vadd.f32 %v2193, %v2353
      %v2355 = vpop.f32.mrb[0].mxu0
      %v2356 = vpop.f32.mrb[0].mxu0
      %v2357 = vadd.f32 %v2196, %v2356
      %v2358 = vpop.f32.mrb[0].mxu0
      %2359 = vmatprep.mubr.bf16.mxu0 0
      %2360 = vmatmul.mubr.bf16.gmra.mrb[0].mxu0 %v2074
      %v2361 = vpop.f32.mrb[0].mxu0
      %v2362 = vadd.f32 %v2201, %v2361
      %v2363 = vpop.f32.mrb[0].mxu0
      %v2364 = vpop.f32.mrb[0].mxu0
      %v2365 = vadd.f32 %v2204, %v2364
      %v2366 = vpop.f32.mrb[0].mxu0
      %2367 = vmatprep.mubr.bf16.mxu0 0
      %2368 = vmatmul.mubr.bf16.gmra.mrb[0].mxu0 %v2077
      %v2369 = vpop.f32.mrb[0].mxu0
      %v2370 = vadd.f32 %v2209, %v2369
      %v2371 = vpop.f32.mrb[0].mxu0
      %v2372 = vpop.f32.mrb[0].mxu0
      %v2373 = vadd.f32 %v2212, %v2372
      %v2374 = vpop.f32.mrb[0].mxu0
      %2375 = vmatprep.mubr.bf16.mxu0 0
      %2376 = vmatmul.mubr.bf16.gmra.mrb[0].mxu0 %v2080
      %v2377 = vpop.f32.mrb[0].mxu0
      %v2378 = vadd.f32 %v2217, %v2377
      %v2379 = vpop.f32.mrb[0].mxu0
      %v2380 = vpop.f32.mrb[0].mxu0
      %v2381 = vadd.f32 %v2220, %v2380
      %v2382 = vpop.f32.mrb[0].mxu0
      %2383 = vmatprep.mubr.bf16.mxu0 0
      %2384 = vmatmul.mubr.bf16.gmra.mrb[0].mxu0 %v2083
      %v2385 = vpop.f32.mrb[0].mxu0
      %v2386 = vadd.f32 %v2225, %v2385
      %v2387 = vpop.f32.mrb[0].mxu0
      %v2388 = vpop.f32.mrb[0].mxu0
      %v2389 = vadd.f32 %v2228, %v2388
      %v2390 = vpop.f32.mrb[0].mxu0
      %2391 = vmatprep.mubr.bf16.mxu0 0
      %2392 = vmatmul.mubr.bf16.gmra.mrb[0].mxu0 %v2086
      %v2393 = vpop.f32.mrb[0].mxu0
      %v2394 = vadd.f32 %v2233, %v2393
      %v2395 = vpop.f32.mrb[0].mxu0
      %v2396 = vpop.f32.mrb[0].mxu0
      %v2397 = vadd.f32 %v2236, %v2396
      %v2398 = vpop.f32.mrb[0].mxu0
      %2399 = vmatprep.mubr.bf16.mxu0 0
      %2400 = vmatmul.mubr.bf16.gmra.mrb[0].mxu0 %v2089
      %v2401 = vpop.f32.mrb[0].mxu0
      %v2402 = vadd.f32 %v2241, %v2401
      %v2403 = vpop.f32.mrb[0].mxu0
      %v2404 = vpop.f32.mrb[0].mxu0
      %v2405 = vadd.f32 %v2244, %v2404
      %v2406 = vpop.f32.mrb[0].mxu0
      %2407 = vmatprep.mubr.bf16.mxu0 0
      %2408 = vmatmul.mubr.bf16.gmra.mrb[0].mxu0 %v2092
      %v2409 = vpop.f32.mrb[0].mxu0
      %v2410 = vadd.f32 %v2249, %v2409
      %v2411 = vpop.f32.mrb[0].mxu0
      %v2412 = vpop.f32.mrb[0].mxu0
      %v2413 = vadd.f32 %v2252, %v2412
      %v2414 = vpop.f32.mrb[0].mxu0
      %2415 = vdwg.mxu0
      %v2416 = vmax.f32 %v2290, 0.0
      %v2417 = vmax.f32 %v2293, 0.0
      %v2418 = vmax.f32 %v2298, 0.0
      %v2419 = vmax.f32 %v2301, 0.0
      %v2420 = vmax.f32 %v2306, 0.0
      %v2421 = vmax.f32 %v2309, 0.0
      %v2422 = vmax.f32 %v2314, 0.0
      %v2423 = vmax.f32 %v2317, 0.0
      %v2424 = vmax.f32 %v2322, 0.0
      %v2425 = vmax.f32 %v2325, 0.0
      %v2426 = vmax.f32 %v2330, 0.0
      %v2427 = vmax.f32 %v2333, 0.0
      %v2428 = vmax.f32 %v2338, 0.0
      %v2429 = vmax.f32 %v2341, 0.0
      %v2430 = vmax.f32 %v2346, 0.0
      %v2431 = vmax.f32 %v2349, 0.0
      %v2432 = vmax.f32 %v2354, 0.0
      %v2433 = vmax.f32 %v2357, 0.0
      %v2434 = vmax.f32 %v2362, 0.0
      %v2435 = vmax.f32 %v2365, 0.0
      %v2436 = vmax.f32 %v2370, 0.0
      %v2437 = vmax.f32 %v2373, 0.0
      %v2438 = vmax.f32 %v2378, 0.0
      %v2439 = vmax.f32 %v2381, 0.0
      %v2440 = vmax.f32 %v2386, 0.0
      %v2441 = vmax.f32 %v2389, 0.0
      %v2442 = vmax.f32 %v2394, 0.0
      %v2443 = vmax.f32 %v2397, 0.0
      %v2444 = vmax.f32 %v2402, 0.0
      %v2445 = vmax.f32 %v2405, 0.0
      %v2446 = vmax.f32 %v2410, 0.0
      %v2447 = vmax.f32 %v2413, 0.0
      %v2448 = vld [vmem:[%s320] sm:$0xff]
      %v2449 = vld [vmem:[%s320 + $0x8] sm:$0xff]
      %v2450 = vld [vmem:[%s320 + $0x10] sm:$0xff]
      %v2451 = vld [vmem:[%s320 + $0x18] sm:$0xff]
      %v2452 = vld [vmem:[%s320 + $0x20] sm:$0xff]
      %v2453 = vld [vmem:[%s320 + $0x28] sm:$0xff]
      %v2454 = vld [vmem:[%s320 + $0x30] sm:$0xff]
      %v2455 = vld [vmem:[%s320 + $0x38] sm:$0xff]
      %v2456 = vld [vmem:[%s320 + $0x40] sm:$0xff]
      %v2457 = vld [vmem:[%s320 + $0x48] sm:$0xff]
      %v2458 = vld [vmem:[%s320 + $0x50] sm:$0xff]
      %v2459 = vld [vmem:[%s320 + $0x58] sm:$0xff]
      %v2460 = vld [vmem:[%s320 + $0x60] sm:$0xff]
      %v2461 = vld [vmem:[%s320 + $0x68] sm:$0xff]
      %v2462 = vld [vmem:[%s320 + $0x70] sm:$0xff]
      %v2463 = vld [vmem:[%s320 + $0x78] sm:$0xff]
      %v2464 = vld [vmem:[%s320 + $0x80] sm:$0xff]
      %v2465 = vld [vmem:[%s320 + $0x88] sm:$0xff]
      %v2466 = vld [vmem:[%s320 + $0x90] sm:$0xff]
      %v2467 = vld [vmem:[%s320 + $0x98] sm:$0xff]
      %v2468 = vld [vmem:[%s320 + $0xa0] sm:$0xff]
      %v2469 = vld [vmem:[%s320 + $0xa8] sm:$0xff]
      %v2470 = vld [vmem:[%s320 + $0xb0] sm:$0xff]
      %v2471 = vld [vmem:[%s320 + $0xb8] sm:$0xff]
      %v2472 = vld [vmem:[%s320 + $0xc0] sm:$0xff]
      %v2473 = vld [vmem:[%s320 + $0xc8] sm:$0xff]
      %v2474 = vld [vmem:[%s320 + $0xd0] sm:$0xff]
      %v2475 = vld [vmem:[%s320 + $0xd8] sm:$0xff]
      %v2476 = vld [vmem:[%s320 + $0xe0] sm:$0xff]
      %v2477 = vld [vmem:[%s320 + $0xe8] sm:$0xff]
      %v2478 = vld [vmem:[%s320 + $0xf0] sm:$0xff]
      %v2479 = vld [vmem:[%s320 + $0xf8] sm:$0xff]
      %v2480 = vpack.c.bf16 %v2417, %v2416
      %v2481 = vpack.c.bf16 %v2419, %v2418
      %v2482 = vpack.c.bf16 %v2421, %v2420
      %v2483 = vpack.c.bf16 %v2423, %v2422
      %v2484 = vpack.c.bf16 %v2425, %v2424
      %v2485 = vpack.c.bf16 %v2427, %v2426
      %v2486 = vpack.c.bf16 %v2429, %v2428
      %v2487 = vpack.c.bf16 %v2431, %v2430
      %v2488 = vpack.c.bf16 %v2433, %v2432
      %v2489 = vpack.c.bf16 %v2435, %v2434
      %v2490 = vpack.c.bf16 %v2437, %v2436
      %v2491 = vpack.c.bf16 %v2439, %v2438
      %v2492 = vpack.c.bf16 %v2441, %v2440
      %v2493 = vpack.c.bf16 %v2443, %v2442
      %v2494 = vpack.c.bf16 %v2445, %v2444
      %v2495 = vpack.c.bf16 %v2447, %v2446
      %v2497 = vshrl.u32 %v2480, 16
      %v2499 = vrot.slane %v2497, 7
      %v2500 = vshll.u32 %v2480, 16
      %v2502 = vor.u32 %v2499, %v2500
      %v2504 = vshrl.u32 %v2481, 16
      %v2506 = vrot.slane %v2504, 7
      %v2507 = vshll.u32 %v2481, 16
      %v2509 = vor.u32 %v2506, %v2507
      %v2511 = vshrl.u32 %v2482, 16
      %v2513 = vrot.slane %v2511, 7
      %v2514 = vshll.u32 %v2482, 16
      %v2516 = vor.u32 %v2513, %v2514
      %v2518 = vshrl.u32 %v2483, 16
      %v2520 = vrot.slane %v2518, 7
      %v2521 = vshll.u32 %v2483, 16
      %v2523 = vor.u32 %v2520, %v2521
      %v2525 = vshrl.u32 %v2484, 16
      %v2527 = vrot.slane %v2525, 7
      %v2528 = vshll.u32 %v2484, 16
      %v2530 = vor.u32 %v2527, %v2528
      %v2532 = vshrl.u32 %v2485, 16
      %v2534 = vrot.slane %v2532, 7
      %v2535 = vshll.u32 %v2485, 16
      %v2537 = vor.u32 %v2534, %v2535
      %v2539 = vshrl.u32 %v2486, 16
      %v2541 = vrot.slane %v2539, 7
      %v2542 = vshll.u32 %v2486, 16
      %v2544 = vor.u32 %v2541, %v2542
      %v2546 = vshrl.u32 %v2487, 16
      %v2548 = vrot.slane %v2546, 7
      %v2549 = vshll.u32 %v2487, 16
      %v2551 = vor.u32 %v2548, %v2549
      %v2553 = vshrl.u32 %v2488, 16
      %v2555 = vrot.slane %v2553, 7
      %v2556 = vshll.u32 %v2488, 16
      %v2558 = vor.u32 %v2555, %v2556
      %v2560 = vshrl.u32 %v2489, 16
      %v2562 = vrot.slane %v2560, 7
      %v2563 = vshll.u32 %v2489, 16
      %v2565 = vor.u32 %v2562, %v2563
      %v2567 = vshrl.u32 %v2490, 16
      %v2569 = vrot.slane %v2567, 7
      %v2570 = vshll.u32 %v2490, 16
      %v2572 = vor.u32 %v2569, %v2570
      %v2574 = vshrl.u32 %v2491, 16
      %v2576 = vrot.slane %v2574, 7
      %v2577 = vshll.u32 %v2491, 16
      %v2579 = vor.u32 %v2576, %v2577
      %v2581 = vshrl.u32 %v2492, 16
      %v2583 = vrot.slane %v2581, 7
      %v2584 = vshll.u32 %v2492, 16
      %v2586 = vor.u32 %v2583, %v2584
      %v2588 = vshrl.u32 %v2493, 16
      %v2590 = vrot.slane %v2588, 7
      %v2591 = vshll.u32 %v2493, 16
      %v2593 = vor.u32 %v2590, %v2591
      %v2595 = vshrl.u32 %v2494, 16
      %v2597 = vrot.slane %v2595, 7
      %v2598 = vshll.u32 %v2494, 16
      %v2600 = vor.u32 %v2597, %v2598
      %v2602 = vshrl.u32 %v2495, 16
      %v2604 = vrot.slane %v2602, 7
      %v2605 = vshll.u32 %v2495, 16
      %v2607 = vor.u32 %v2604, %v2605
      %v2624 = vsel %vm505, 0, %v2502
      %v2625 = vsel %vm505, 0, %v2509
      %v2626 = vsel %vm505, 0, %v2516
      %v2627 = vsel %vm505, 0, %v2523
      %v2628 = vsel %vm505, 0, %v2530
      %v2629 = vsel %vm505, 0, %v2537
      %v2630 = vsel %vm505, 0, %v2544
      %v2631 = vsel %vm505, 0, %v2551
      %v2632 = vsel %vm505, 0, %v2558
      %v2633 = vsel %vm505, 0, %v2565
      %v2634 = vsel %vm505, 0, %v2572
      %v2635 = vsel %vm505, 0, %v2579
      %v2636 = vsel %vm505, 0, %v2586
      %v2637 = vsel %vm505, 0, %v2593
      %v2638 = vsel %vm505, 0, %v2600
      %v2639 = vsel %vm505, 0, %v2607
      %v2640 = vrot.slane %v2500, 1
      %v2641 = vor.u32 %v2497, %v2640
      %v2642 = vrot.slane %v2507, 1
      %v2643 = vor.u32 %v2504, %v2642
      %v2644 = vrot.slane %v2514, 1
      %v2645 = vor.u32 %v2511, %v2644
      %v2646 = vrot.slane %v2521, 1
      %v2647 = vor.u32 %v2518, %v2646
      %v2648 = vrot.slane %v2528, 1
      %v2649 = vor.u32 %v2525, %v2648
      %v2650 = vrot.slane %v2535, 1
      %v2651 = vor.u32 %v2532, %v2650
      %v2652 = vrot.slane %v2542, 1
      %v2653 = vor.u32 %v2539, %v2652
      %v2654 = vrot.slane %v2549, 1
      %v2655 = vor.u32 %v2546, %v2654
      %v2656 = vrot.slane %v2556, 1
      %v2657 = vor.u32 %v2553, %v2656
      %v2658 = vrot.slane %v2563, 1
      %v2659 = vor.u32 %v2560, %v2658
      %v2660 = vrot.slane %v2570, 1
      %v2661 = vor.u32 %v2567, %v2660
      %v2662 = vrot.slane %v2577, 1
      %v2663 = vor.u32 %v2574, %v2662
      %v2664 = vrot.slane %v2584, 1
      %v2665 = vor.u32 %v2581, %v2664
      %v2666 = vrot.slane %v2591, 1
      %v2667 = vor.u32 %v2588, %v2666
      %v2668 = vrot.slane %v2598, 1
      %v2669 = vor.u32 %v2595, %v2668
      %v2670 = vrot.slane %v2605, 1
      %v2671 = vor.u32 %v2602, %v2670
      %v2688 = vsel %vm572, %v2641, 0
      %v2689 = vsel %vm572, %v2643, 0
      %v2690 = vsel %vm572, %v2645, 0
      %v2691 = vsel %vm572, %v2647, 0
      %v2692 = vsel %vm572, %v2649, 0
      %v2693 = vsel %vm572, %v2651, 0
      %v2694 = vsel %vm572, %v2653, 0
      %v2695 = vsel %vm572, %v2655, 0
      %v2696 = vsel %vm572, %v2657, 0
      %v2697 = vsel %vm572, %v2659, 0
      %v2698 = vsel %vm572, %v2661, 0
      %v2699 = vsel %vm572, %v2663, 0
      %v2700 = vsel %vm572, %v2665, 0
      %v2701 = vsel %vm572, %v2667, 0
      %v2702 = vsel %vm572, %v2669, 0
      %v2703 = vsel %vm572, %v2671, 0
      %2720 = vrot.lane.b32.xlu0 %v2480, 32
      %v2721 = vpop.permute.xlu0 %2720
      %2722 = vrot.lane.b32.xlu0 %v2481, 32
      %v2723 = vpop.permute.xlu0 %2722
      %2724 = vrot.lane.b32.xlu0 %v2482, 32
      %v2725 = vpop.permute.xlu0 %2724
      %2726 = vrot.lane.b32.xlu0 %v2483, 32
      %v2727 = vpop.permute.xlu0 %2726
      %2728 = vrot.lane.b32.xlu0 %v2484, 32
      %v2729 = vpop.permute.xlu0 %2728
      %2730 = vrot.lane.b32.xlu0 %v2485, 32
      %v2731 = vpop.permute.xlu0 %2730
      %2732 = vrot.lane.b32.xlu0 %v2486, 32
      %v2733 = vpop.permute.xlu0 %2732
      %2734 = vrot.lane.b32.xlu0 %v2487, 32
      %v2735 = vpop.permute.xlu0 %2734
      %2736 = vrot.lane.b32.xlu0 %v2488, 32
      %v2737 = vpop.permute.xlu0 %2736
      %2738 = vrot.lane.b32.xlu0 %v2489, 32
      %v2739 = vpop.permute.xlu0 %2738
      %2740 = vrot.lane.b32.xlu0 %v2490, 32
      %v2741 = vpop.permute.xlu0 %2740
      %2742 = vrot.lane.b32.xlu0 %v2491, 32
      %v2743 = vpop.permute.xlu0 %2742
      %2744 = vrot.lane.b32.xlu0 %v2492, 32
      %v2745 = vpop.permute.xlu0 %2744
      %2746 = vrot.lane.b32.xlu0 %v2493, 32
      %v2747 = vpop.permute.xlu0 %2746
      %2748 = vrot.lane.b32.xlu0 %v2494, 32
      %v2749 = vpop.permute.xlu0 %2748
      %2750 = vrot.lane.b32.xlu0 %v2495, 32
      %v2751 = vpop.permute.xlu0 %2750
      %2768 = vrot.lane.b32.xlu0 %v2688, 64
      %v2769 = vpop.permute.xlu0 %2768
      %2770 = vrot.lane.b32.xlu0 %v2689, 64
      %v2771 = vpop.permute.xlu0 %2770
      %2772 = vrot.lane.b32.xlu0 %v2690, 64
      %v2773 = vpop.permute.xlu0 %2772
      %2774 = vrot.lane.b32.xlu0 %v2691, 64
      %v2775 = vpop.permute.xlu0 %2774
      %2776 = vrot.lane.b32.xlu0 %v2692, 64
      %v2777 = vpop.permute.xlu0 %2776
      %2778 = vrot.lane.b32.xlu0 %v2693, 64
      %v2779 = vpop.permute.xlu0 %2778
      %2780 = vrot.lane.b32.xlu0 %v2694, 64
      %v2781 = vpop.permute.xlu0 %2780
      %2782 = vrot.lane.b32.xlu0 %v2695, 64
      %v2783 = vpop.permute.xlu0 %2782
      %2784 = vrot.lane.b32.xlu0 %v2696, 64
      %v2785 = vpop.permute.xlu0 %2784
      %2786 = vrot.lane.b32.xlu0 %v2697, 64
      %v2787 = vpop.permute.xlu0 %2786
      %2788 = vrot.lane.b32.xlu0 %v2698, 64
      %v2789 = vpop.permute.xlu0 %2788
      %2790 = vrot.lane.b32.xlu0 %v2699, 64
      %v2791 = vpop.permute.xlu0 %2790
      %2792 = vrot.lane.b32.xlu0 %v2700, 64
      %v2793 = vpop.permute.xlu0 %2792
      %2794 = vrot.lane.b32.xlu0 %v2701, 64
      %v2795 = vpop.permute.xlu0 %2794
      %2796 = vrot.lane.b32.xlu0 %v2702, 64
      %v2797 = vpop.permute.xlu0 %2796
      %2798 = vrot.lane.b32.xlu0 %v2703, 64
      %v2799 = vpop.permute.xlu0 %2798
      %v2802 = vsel %vm1555, %v2624, %v2721
      %v2805 = vsel %vm1555, %v2625, %v2723
      %v2808 = vsel %vm1555, %v2626, %v2725
      %v2811 = vsel %vm1555, %v2627, %v2727
      %v2814 = vsel %vm1555, %v2628, %v2729
      %v2817 = vsel %vm1555, %v2629, %v2731
      %v2820 = vsel %vm1555, %v2630, %v2733
      %v2823 = vsel %vm1555, %v2631, %v2735
      %v2826 = vsel %vm1555, %v2632, %v2737
      %v2829 = vsel %vm1555, %v2633, %v2739
      %v2832 = vsel %vm1555, %v2634, %v2741
      %v2835 = vsel %vm1555, %v2635, %v2743
      %v2838 = vsel %vm1555, %v2636, %v2745
      %v2841 = vsel %vm1555, %v2637, %v2747
      %v2844 = vsel %vm1555, %v2638, %v2749
      %v2847 = vsel %vm1555, %v2639, %v2751
      %v2849 = vsel %vm1604, %v2802, %v2769
      %v2852 = vsel %vm1604, %v2805, %v2771
      %v2855 = vsel %vm1604, %v2808, %v2773
      %v2858 = vsel %vm1604, %v2811, %v2775
      %v2861 = vsel %vm1604, %v2814, %v2777
      %v2864 = vsel %vm1604, %v2817, %v2779
      %v2867 = vsel %vm1604, %v2820, %v2781
      %v2870 = vsel %vm1604, %v2823, %v2783
      %v2873 = vsel %vm1604, %v2826, %v2785
      %v2876 = vsel %vm1604, %v2829, %v2787
      %v2879 = vsel %vm1604, %v2832, %v2789
      %v2882 = vsel %vm1604, %v2835, %v2791
      %v2885 = vsel %vm1604, %v2838, %v2793
      %v2888 = vsel %vm1604, %v2841, %v2795
      %v2891 = vsel %vm1604, %v2844, %v2797
      %v2894 = vsel %vm1604, %v2847, %v2799
      %2895 = vst.msk [vmem:[#allocation4] sm:$0xff] %vm1652, 0
      %2896 = vst.msk [vmem:[#allocation4 + $0x28] sm:$0xff] %vm1652, %v2849
      %2897 = vst.msk [vmem:[#allocation4 + $0x50] sm:$0xff] %vm1652, %v2852
      %2898 = vst.msk [vmem:[#allocation4 + $0x78] sm:$0xff] %vm1652, %v2855
      %2899 = vst.msk [vmem:[#allocation4 + $0xa0] sm:$0xff] %vm1652, %v2858
      %2900 = vst.msk [vmem:[#allocation4 + $0xc8] sm:$0xff] %vm1652, %v2861
      %2901 = vst.msk [vmem:[#allocation4 + $0xf0] sm:$0xff] %vm1652, %v2864
      %2902 = vst.msk [vmem:[#allocation4 + $0x118] sm:$0xff] %vm1652, %v2867
      %2903 = vst.msk [vmem:[#allocation4 + $0x140] sm:$0xff] %vm1652, %v2870
      %2904 = vst.msk [vmem:[#allocation4 + $0x168] sm:$0xff] %vm1652, %v2873
      %2905 = vst.msk [vmem:[#allocation4 + $0x190] sm:$0xff] %vm1652, %v2876
      %2906 = vst.msk [vmem:[#allocation4 + $0x1b8] sm:$0xff] %vm1652, %v2879
      %2907 = vst.msk [vmem:[#allocation4 + $0x1e0] sm:$0xff] %vm1652, %v2882
      %2908 = vst.msk [vmem:[#allocation4 + $0x208] sm:$0xff] %vm1652, %v2885
      %2909 = vst.msk [vmem:[#allocation4 + $0x230] sm:$0xff] %vm1652, %v2888
      %2910 = vst.msk [vmem:[#allocation4 + $0x258] sm:$0xff] %vm1652, %v2891
      %2927 = vrot.lane.b32.xlu0 %v2849, 96
      %v2928 = vpop.permute.xlu0 %2927
      %2929 = vrot.lane.b32.xlu0 %v2852, 96
      %v2930 = vpop.permute.xlu0 %2929
      %2931 = vrot.lane.b32.xlu0 %v2855, 96
      %v2932 = vpop.permute.xlu0 %2931
      %2933 = vrot.lane.b32.xlu0 %v2858, 96
      %v2934 = vpop.permute.xlu0 %2933
      %2935 = vrot.lane.b32.xlu0 %v2861, 96
      %v2936 = vpop.permute.xlu0 %2935
      %2937 = vrot.lane.b32.xlu0 %v2864, 96
      %v2938 = vpop.permute.xlu0 %2937
      %2939 = vrot.lane.b32.xlu0 %v2867, 96
      %v2940 = vpop.permute.xlu0 %2939
      %2941 = vrot.lane.b32.xlu0 %v2870, 96
      %v2942 = vpop.permute.xlu0 %2941
      %2943 = vrot.lane.b32.xlu0 %v2873, 96
      %v2944 = vpop.permute.xlu0 %2943
      %2945 = vrot.lane.b32.xlu0 %v2876, 96
      %v2946 = vpop.permute.xlu0 %2945
      %2947 = vrot.lane.b32.xlu0 %v2879, 96
      %v2948 = vpop.permute.xlu0 %2947
      %2949 = vrot.lane.b32.xlu0 %v2882, 96
      %v2950 = vpop.permute.xlu0 %2949
      %2951 = vrot.lane.b32.xlu0 %v2885, 96
      %v2952 = vpop.permute.xlu0 %2951
      %2953 = vrot.lane.b32.xlu0 %v2888, 96
      %v2954 = vpop.permute.xlu0 %2953
      %2955 = vrot.lane.b32.xlu0 %v2891, 96
      %v2956 = vpop.permute.xlu0 %2955
      %2957 = vrot.lane.b32.xlu0 %v2894, 96
      %v2958 = vpop.permute.xlu0 %2957
      %2975 = vst.msk [vmem:[#allocation4] sm:$0xff] %vm1733, %v2928
      %2976 = vst.msk [vmem:[#allocation4 + $0x8] sm:$0xff] %vm1604, %v2928
      %2977 = vst.msk [vmem:[#allocation4 + $0x28] sm:$0xff] %vm1733, %v2930
      %2978 = vst.msk [vmem:[#allocation4 + $0x30] sm:$0xff] %vm1604, %v2930
      %2979 = vst.msk [vmem:[#allocation4 + $0x50] sm:$0xff] %vm1733, %v2932
      %2980 = vst.msk [vmem:[#allocation4 + $0x58] sm:$0xff] %vm1604, %v2932
      %2981 = vst.msk [vmem:[#allocation4 + $0x78] sm:$0xff] %vm1733, %v2934
      %2982 = vst.msk [vmem:[#allocation4 + $0x80] sm:$0xff] %vm1604, %v2934
      %2983 = vst.msk [vmem:[#allocation4 + $0xa0] sm:$0xff] %vm1733, %v2936
      %2984 = vst.msk [vmem:[#allocation4 + $0xa8] sm:$0xff] %vm1604, %v2936
      %2985 = vst.msk [vmem:[#allocation4 + $0xc8] sm:$0xff] %vm1733, %v2938
      %2986 = vst.msk [vmem:[#allocation4 + $0xd0] sm:$0xff] %vm1604, %v2938
      %2987 = vst.msk [vmem:[#allocation4 + $0xf0] sm:$0xff] %vm1733, %v2940
      %2988 = vst.msk [vmem:[#allocation4 + $0xf8] sm:$0xff] %vm1604, %v2940
      %2989 = vst.msk [vmem:[#allocation4 + $0x118] sm:$0xff] %vm1733, %v2942
      %2990 = vst.msk [vmem:[#allocation4 + $0x120] sm:$0xff] %vm1604, %v2942
      %2991 = vst.msk [vmem:[#allocation4 + $0x140] sm:$0xff] %vm1733, %v2944
      %2992 = vst.msk [vmem:[#allocation4 + $0x148] sm:$0xff] %vm1604, %v2944
      %2993 = vst.msk [vmem:[#allocation4 + $0x168] sm:$0xff] %vm1733, %v2946
      %2994 = vst.msk [vmem:[#allocation4 + $0x170] sm:$0xff] %vm1604, %v2946
      %2995 = vst.msk [vmem:[#allocation4 + $0x190] sm:$0xff] %vm1733, %v2948
      %2996 = vst.msk [vmem:[#allocation4 + $0x198] sm:$0xff] %vm1604, %v2948
      %2997 = vst.msk [vmem:[#allocation4 + $0x1b8] sm:$0xff] %vm1733, %v2950
      %2998 = vst.msk [vmem:[#allocation4 + $0x1c0] sm:$0xff] %vm1604, %v2950
      %2999 = vst.msk [vmem:[#allocation4 + $0x1e0] sm:$0xff] %vm1733, %v2952
      %3000 = vst.msk [vmem:[#allocation4 + $0x1e8] sm:$0xff] %vm1604, %v2952
      %3001 = vst.msk [vmem:[#allocation4 + $0x208] sm:$0xff] %vm1733, %v2954
      %3002 = vst.msk [vmem:[#allocation4 + $0x210] sm:$0xff] %vm1604, %v2954
      %3003 = vst.msk [vmem:[#allocation4 + $0x230] sm:$0xff] %vm1733, %v2956
      %3004 = vst.msk [vmem:[#allocation4 + $0x238] sm:$0xff] %vm1604, %v2956
      %3005 = vst.msk [vmem:[#allocation4 + $0x258] sm:$0xff] %vm1733, %v2958
      %3006 = vst.msk [vmem:[#allocation4 + $0x260] sm:$0xff] %vm1604, %v2958
      %3007 = vrot.lane.b32.xlu0 %v2852, 64
      %v3008 = vpop.permute.xlu0 %3007
      %3009 = vrot.lane.b32.xlu0 %v2855, 64
      %v3010 = vpop.permute.xlu0 %3009
      %3011 = vrot.lane.b32.xlu0 %v2858, 64
      %v3012 = vpop.permute.xlu0 %3011
      %3013 = vrot.lane.b32.xlu0 %v2861, 64
      %v3014 = vpop.permute.xlu0 %3013
      %3015 = vrot.lane.b32.xlu0 %v2864, 64
      %v3016 = vpop.permute.xlu0 %3015
      %3017 = vrot.lane.b32.xlu0 %v2867, 64
      %v3018 = vpop.permute.xlu0 %3017
      %3019 = vrot.lane.b32.xlu0 %v2870, 64
      %v3020 = vpop.permute.xlu0 %3019
      %3021 = vrot.lane.b32.xlu0 %v2873, 64
      %v3022 = vpop.permute.xlu0 %3021
      %3023 = vrot.lane.b32.xlu0 %v2876, 64
      %v3024 = vpop.permute.xlu0 %3023
      %3025 = vrot.lane.b32.xlu0 %v2879, 64
      %v3026 = vpop.permute.xlu0 %3025
      %3027 = vrot.lane.b32.xlu0 %v2882, 64
      %v3028 = vpop.permute.xlu0 %3027
      %3029 = vrot.lane.b32.xlu0 %v2885, 64
      %v3030 = vpop.permute.xlu0 %3029
      %3031 = vrot.lane.b32.xlu0 %v2888, 64
      %v3032 = vpop.permute.xlu0 %3031
      %3033 = vrot.lane.b32.xlu0 %v2891, 64
      %v3034 = vpop.permute.xlu0 %3033
      %3035 = vrot.lane.b32.xlu0 %v2894, 64
      %v3036 = vpop.permute.xlu0 %3035
      %3052 = vst.msk [vmem:[#allocation4 + $0x8] sm:$0xff] %vm1814, %v3008
      %3053 = vst.msk [vmem:[#allocation4 + $0x10] sm:$0xff] %vm1555, %v3008
      %3054 = vst.msk [vmem:[#allocation4 + $0x30] sm:$0xff] %vm1814, %v3010
      %3055 = vst.msk [vmem:[#allocation4 + $0x38] sm:$0xff] %vm1555, %v3010
      %3056 = vst.msk [vmem:[#allocation4 + $0x58] sm:$0xff] %vm1814, %v3012
      %3057 = vst.msk [vmem:[#allocation4 + $0x60] sm:$0xff] %vm1555, %v3012
      %3058 = vst.msk [vmem:[#allocation4 + $0x80] sm:$0xff] %vm1814, %v3014
      %3059 = vst.msk [vmem:[#allocation4 + $0x88] sm:$0xff] %vm1555, %v3014
      %3060 = vst.msk [vmem:[#allocation4 + $0xa8] sm:$0xff] %vm1814, %v3016
      %3061 = vst.msk [vmem:[#allocation4 + $0xb0] sm:$0xff] %vm1555, %v3016
      %3062 = vst.msk [vmem:[#allocation4 + $0xd0] sm:$0xff] %vm1814, %v3018
      %3063 = vst.msk [vmem:[#allocation4 + $0xd8] sm:$0xff] %vm1555, %v3018
      %3064 = vst.msk [vmem:[#allocation4 + $0xf8] sm:$0xff] %vm1814, %v3020
      %3065 = vst.msk [vmem:[#allocation4 + $0x100] sm:$0xff] %vm1555, %v3020
      %3066 = vst.msk [vmem:[#allocation4 + $0x120] sm:$0xff] %vm1814, %v3022
      %3067 = vst.msk [vmem:[#allocation4 + $0x128] sm:$0xff] %vm1555, %v3022
      %3068 = vst.msk [vmem:[#allocation4 + $0x148] sm:$0xff] %vm1814, %v3024
      %3069 = vst.msk [vmem:[#allocation4 + $0x150] sm:$0xff] %vm1555, %v3024
      %3070 = vst.msk [vmem:[#allocation4 + $0x170] sm:$0xff] %vm1814, %v3026
      %3071 = vst.msk [vmem:[#allocation4 + $0x178] sm:$0xff] %vm1555, %v3026
      %3072 = vst.msk [vmem:[#allocation4 + $0x198] sm:$0xff] %vm1814, %v3028
      %3073 = vst.msk [vmem:[#allocation4 + $0x1a0] sm:$0xff] %vm1555, %v3028
      %3074 = vst.msk [vmem:[#allocation4 + $0x1c0] sm:$0xff] %vm1814, %v3030
      %3075 = vst.msk [vmem:[#allocation4 + $0x1c8] sm:$0xff] %vm1555, %v3030
      %3076 = vst.msk [vmem:[#allocation4 + $0x1e8] sm:$0xff] %vm1814, %v3032
      %3077 = vst.msk [vmem:[#allocation4 + $0x1f0] sm:$0xff] %vm1555, %v3032
      %3078 = vst.msk [vmem:[#allocation4 + $0x210] sm:$0xff] %vm1814, %v3034
      %3079 = vst.msk [vmem:[#allocation4 + $0x218] sm:$0xff] %vm1555, %v3034
      %3080 = vst.msk [vmem:[#allocation4 + $0x238] sm:$0xff] %vm1814, %v3036
      %3081 = vst.msk [vmem:[#allocation4 + $0x240] sm:$0xff] %vm1555, %v3036
      %3082 = vst.msk [vmem:[#allocation4 + $0x260] sm:$0xff] %vm1814, %v1797
      %3083 = vst.msk [vmem:[#allocation4 + $0x268] sm:$0xff] %vm1555, %v1797
      %v3084 = vpack.c.bf16 %v2449, %v2448
      %v3085 = vpack.c.bf16 %v2451, %v2450
      %v3086 = vpack.c.bf16 %v2453, %v2452
      %v3087 = vpack.c.bf16 %v2455, %v2454
      %v3088 = vpack.c.bf16 %v2457, %v2456
      %v3089 = vpack.c.bf16 %v2459, %v2458
      %v3090 = vpack.c.bf16 %v2461, %v2460
      %v3091 = vpack.c.bf16 %v2463, %v2462
      %v3092 = vpack.c.bf16 %v2465, %v2464
      %v3093 = vpack.c.bf16 %v2467, %v2466
      %v3094 = vpack.c.bf16 %v2469, %v2468
      %v3095 = vpack.c.bf16 %v2471, %v2470
      %v3096 = vpack.c.bf16 %v2473, %v2472
      %v3097 = vpack.c.bf16 %v2475, %v2474
      %v3098 = vpack.c.bf16 %v2477, %v2476
      %v3099 = vpack.c.bf16 %v2479, %v2478
      %v3101 = vshrl.u32 %v3084, 16
      %v3103 = vrot.slane %v3101, 7
      %v3104 = vshll.u32 %v3084, 16
      %v3106 = vor.u32 %v3103, %v3104
      %v3108 = vshrl.u32 %v3085, 16
      %v3110 = vrot.slane %v3108, 7
      %v3111 = vshll.u32 %v3085, 16
      %v3113 = vor.u32 %v3110, %v3111
      %v3115 = vshrl.u32 %v3086, 16
      %v3117 = vrot.slane %v3115, 7
      %v3118 = vshll.u32 %v3086, 16
      %v3120 = vor.u32 %v3117, %v3118
      %v3122 = vshrl.u32 %v3087, 16
      %v3124 = vrot.slane %v3122, 7
      %v3125 = vshll.u32 %v3087, 16
      %v3127 = vor.u32 %v3124, %v3125
      %v3129 = vshrl.u32 %v3088, 16
      %v3131 = vrot.slane %v3129, 7
      %v3132 = vshll.u32 %v3088, 16
      %v3134 = vor.u32 %v3131, %v3132
      %v3136 = vshrl.u32 %v3089, 16
      %v3138 = vrot.slane %v3136, 7
      %v3139 = vshll.u32 %v3089, 16
      %v3141 = vor.u32 %v3138, %v3139
      %v3143 = vshrl.u32 %v3090, 16
      %v3145 = vrot.slane %v3143, 7
      %v3146 = vshll.u32 %v3090, 16
      %v3148 = vor.u32 %v3145, %v3146
      %v3150 = vshrl.u32 %v3091, 16
      %v3152 = vrot.slane %v3150, 7
      %v3153 = vshll.u32 %v3091, 16
      %v3155 = vor.u32 %v3152, %v3153
      %v3157 = vshrl.u32 %v3092, 16
      %v3159 = vrot.slane %v3157, 7
      %v3160 = vshll.u32 %v3092, 16
      %v3162 = vor.u32 %v3159, %v3160
      %v3164 = vshrl.u32 %v3093, 16
      %v3166 = vrot.slane %v3164, 7
      %v3167 = vshll.u32 %v3093, 16
      %v3169 = vor.u32 %v3166, %v3167
      %v3171 = vshrl.u32 %v3094, 16
      %v3173 = vrot.slane %v3171, 7
      %v3174 = vshll.u32 %v3094, 16
      %v3176 = vor.u32 %v3173, %v3174
      %v3178 = vshrl.u32 %v3095, 16
      %v3180 = vrot.slane %v3178, 7
      %v3181 = vshll.u32 %v3095, 16
      %v3183 = vor.u32 %v3180, %v3181
      %v3185 = vshrl.u32 %v3096, 16
      %v3187 = vrot.slane %v3185, 7
      %v3188 = vshll.u32 %v3096, 16
      %v3190 = vor.u32 %v3187, %v3188
      %v3192 = vshrl.u32 %v3097, 16
      %v3194 = vrot.slane %v3192, 7
      %v3195 = vshll.u32 %v3097, 16
      %v3197 = vor.u32 %v3194, %v3195
      %v3199 = vshrl.u32 %v3098, 16
      %v3201 = vrot.slane %v3199, 7
      %v3202 = vshll.u32 %v3098, 16
      %v3204 = vor.u32 %v3201, %v3202
      %v3206 = vshrl.u32 %v3099, 16
      %v3208 = vrot.slane %v3206, 7
      %v3209 = vshll.u32 %v3099, 16
      %v3211 = vor.u32 %v3208, %v3209
      %v3228 = vsel %vm505, 0, %v3106
      %v3229 = vsel %vm505, 0, %v3113
      %v3230 = vsel %vm505, 0, %v3120
      %v3231 = vsel %vm505, 0, %v3127
      %v3232 = vsel %vm505, 0, %v3134
      %v3233 = vsel %vm505, 0, %v3141
      %v3234 = vsel %vm505, 0, %v3148
      %v3235 = vsel %vm505, 0, %v3155
      %v3236 = vsel %vm505, 0, %v3162
      %v3237 = vsel %vm505, 0, %v3169
      %v3238 = vsel %vm505, 0, %v3176
      %v3239 = vsel %vm505, 0, %v3183
      %v3240 = vsel %vm505, 0, %v3190
      %v3241 = vsel %vm505, 0, %v3197
      %v3242 = vsel %vm505, 0, %v3204
      %v3243 = vsel %vm505, 0, %v3211
      %v3244 = vrot.slane %v3104, 1
      %v3245 = vor.u32 %v3101, %v3244
      %v3246 = vrot.slane %v3111, 1
      %v3247 = vor.u32 %v3108, %v3246
      %v3248 = vrot.slane %v3118, 1
      %v3249 = vor.u32 %v3115, %v3248
      %v3250 = vrot.slane %v3125, 1
      %v3251 = vor.u32 %v3122, %v3250
      %v3252 = vrot.slane %v3132, 1
      %v3253 = vor.u32 %v3129, %v3252
      %v3254 = vrot.slane %v3139, 1
      %v3255 = vor.u32 %v3136, %v3254
      %v3256 = vrot.slane %v3146, 1
      %v3257 = vor.u32 %v3143, %v3256
      %v3258 = vrot.slane %v3153, 1
      %v3259 = vor.u32 %v3150, %v3258
      %v3260 = vrot.slane %v3160, 1
      %v3261 = vor.u32 %v3157, %v3260
      %v3262 = vrot.slane %v3167, 1
      %v3263 = vor.u32 %v3164, %v3262
      %v3264 = vrot.slane %v3174, 1
      %v3265 = vor.u32 %v3171, %v3264
      %v3266 = vrot.slane %v3181, 1
      %v3267 = vor.u32 %v3178, %v3266
      %v3268 = vrot.slane %v3188, 1
      %v3269 = vor.u32 %v3185, %v3268
      %v3270 = vrot.slane %v3195, 1
      %v3271 = vor.u32 %v3192, %v3270
      %v3272 = vrot.slane %v3202, 1
      %v3273 = vor.u32 %v3199, %v3272
      %v3274 = vrot.slane %v3209, 1
      %v3275 = vor.u32 %v3206, %v3274
      %v3292 = vsel %vm572, %v3245, 0
      %v3293 = vsel %vm572, %v3247, 0
      %v3294 = vsel %vm572, %v3249, 0
      %v3295 = vsel %vm572, %v3251, 0
      %v3296 = vsel %vm572, %v3253, 0
      %v3297 = vsel %vm572, %v3255, 0
      %v3298 = vsel %vm572, %v3257, 0
      %v3299 = vsel %vm572, %v3259, 0
      %v3300 = vsel %vm572, %v3261, 0
      %v3301 = vsel %vm572, %v3263, 0
      %v3302 = vsel %vm572, %v3265, 0
      %v3303 = vsel %vm572, %v3267, 0
      %v3304 = vsel %vm572, %v3269, 0
      %v3305 = vsel %vm572, %v3271, 0
      %v3306 = vsel %vm572, %v3273, 0
      %v3307 = vsel %vm572, %v3275, 0
      %3324 = vrot.lane.b32.xlu0 %v3084, 32
      %v3325 = vpop.permute.xlu0 %3324
      %3326 = vrot.lane.b32.xlu0 %v3085, 32
      %v3327 = vpop.permute.xlu0 %3326
      %3328 = vrot.lane.b32.xlu0 %v3086, 32
      %v3329 = vpop.permute.xlu0 %3328
      %3330 = vrot.lane.b32.xlu0 %v3087, 32
      %v3331 = vpop.permute.xlu0 %3330
      %3332 = vrot.lane.b32.xlu0 %v3088, 32
      %v3333 = vpop.permute.xlu0 %3332
      %3334 = vrot.lane.b32.xlu0 %v3089, 32
      %v3335 = vpop.permute.xlu0 %3334
      %3336 = vrot.lane.b32.xlu0 %v3090, 32
      %v3337 = vpop.permute.xlu0 %3336
      %3338 = vrot.lane.b32.xlu0 %v3091, 32
      %v3339 = vpop.permute.xlu0 %3338
      %3340 = vrot.lane.b32.xlu0 %v3092, 32
      %v3341 = vpop.permute.xlu0 %3340
      %3342 = vrot.lane.b32.xlu0 %v3093, 32
      %v3343 = vpop.permute.xlu0 %3342
      %3344 = vrot.lane.b32.xlu0 %v3094, 32
      %v3345 = vpop.permute.xlu0 %3344
      %3346 = vrot.lane.b32.xlu0 %v3095, 32
      %v3347 = vpop.permute.xlu0 %3346
      %3348 = vrot.lane.b32.xlu0 %v3096, 32
      %v3349 = vpop.permute.xlu0 %3348
      %3350 = vrot.lane.b32.xlu0 %v3097, 32
      %v3351 = vpop.permute.xlu0 %3350
      %3352 = vrot.lane.b32.xlu0 %v3098, 32
      %v3353 = vpop.permute.xlu0 %3352
      %3354 = vrot.lane.b32.xlu0 %v3099, 32
      %v3355 = vpop.permute.xlu0 %3354
      %3372 = vrot.lane.b32.xlu0 %v3292, 64
      %v3373 = vpop.permute.xlu0 %3372
      %3374 = vrot.lane.b32.xlu0 %v3293, 64
      %v3375 = vpop.permute.xlu0 %3374
      %3376 = vrot.lane.b32.xlu0 %v3294, 64
      %v3377 = vpop.permute.xlu0 %3376
      %3378 = vrot.lane.b32.xlu0 %v3295, 64
      %v3379 = vpop.permute.xlu0 %3378
      %3380 = vrot.lane.b32.xlu0 %v3296, 64
      %v3381 = vpop.permute.xlu0 %3380
      %3382 = vrot.lane.b32.xlu0 %v3297, 64
      %v3383 = vpop.permute.xlu0 %3382
      %3384 = vrot.lane.b32.xlu0 %v3298, 64
      %v3385 = vpop.permute.xlu0 %3384
      %3386 = vrot.lane.b32.xlu0 %v3299, 64
      %v3387 = vpop.permute.xlu0 %3386
      %3388 = vrot.lane.b32.xlu0 %v3300, 64
      %v3389 = vpop.permute.xlu0 %3388
      %3390 = vrot.lane.b32.xlu0 %v3301, 64
      %v3391 = vpop.permute.xlu0 %3390
      %3392 = vrot.lane.b32.xlu0 %v3302, 64
      %v3393 = vpop.permute.xlu0 %3392
      %3394 = vrot.lane.b32.xlu0 %v3303, 64
      %v3395 = vpop.permute.xlu0 %3394
      %3396 = vrot.lane.b32.xlu0 %v3304, 64
      %v3397 = vpop.permute.xlu0 %3396
      %3398 = vrot.lane.b32.xlu0 %v3305, 64
      %v3399 = vpop.permute.xlu0 %3398
      %3400 = vrot.lane.b32.xlu0 %v3306, 64
      %v3401 = vpop.permute.xlu0 %3400
      %3402 = vrot.lane.b32.xlu0 %v3307, 64
      %v3403 = vpop.permute.xlu0 %3402
      %v3406 = vsel %vm1555, %v3228, %v3325
      %v3409 = vsel %vm1555, %v3229, %v3327
      %v3412 = vsel %vm1555, %v3230, %v3329
      %v3415 = vsel %vm1555, %v3231, %v3331
      %v3418 = vsel %vm1555, %v3232, %v3333
      %v3421 = vsel %vm1555, %v3233, %v3335
      %v3424 = vsel %vm1555, %v3234, %v3337
      %v3427 = vsel %vm1555, %v3235, %v3339
      %v3430 = vsel %vm1555, %v3236, %v3341
      %v3433 = vsel %vm1555, %v3237, %v3343
      %v3436 = vsel %vm1555, %v3238, %v3345
      %v3439 = vsel %vm1555, %v3239, %v3347
      %v3442 = vsel %vm1555, %v3240, %v3349
      %v3445 = vsel %vm1555, %v3241, %v3351
      %v3448 = vsel %vm1555, %v3242, %v3353
      %v3451 = vsel %vm1555, %v3243, %v3355
      %v3453 = vsel %vm1604, %v3406, %v3373
      %v3456 = vsel %vm1604, %v3409, %v3375
      %v3459 = vsel %vm1604, %v3412, %v3377
      %v3462 = vsel %vm1604, %v3415, %v3379
      %v3465 = vsel %vm1604, %v3418, %v3381
      %v3468 = vsel %vm1604, %v3421, %v3383
      %v3471 = vsel %vm1604, %v3424, %v3385
      %v3474 = vsel %vm1604, %v3427, %v3387
      %v3477 = vsel %vm1604, %v3430, %v3389
      %v3480 = vsel %vm1604, %v3433, %v3391
      %v3483 = vsel %vm1604, %v3436, %v3393
      %v3486 = vsel %vm1604, %v3439, %v3395
      %v3489 = vsel %vm1604, %v3442, %v3397
      %v3492 = vsel %vm1604, %v3445, %v3399
      %v3495 = vsel %vm1604, %v3448, %v3401
      %v3498 = vsel %vm1604, %v3451, %v3403
      %3515 = vrot.lane.b32.xlu0 0, 32
      %v3516 = vpop.permute.xlu0 %3515
      %3517 = vrot.lane.b32.xlu0 %v3453, 32
      %v3518 = vpop.permute.xlu0 %3517
      %3519 = vrot.lane.b32.xlu0 %v3456, 32
      %v3520 = vpop.permute.xlu0 %3519
      %3521 = vrot.lane.b32.xlu0 %v3459, 32
      %v3522 = vpop.permute.xlu0 %3521
      %3523 = vrot.lane.b32.xlu0 %v3462, 32
      %v3524 = vpop.permute.xlu0 %3523
      %3525 = vrot.lane.b32.xlu0 %v3465, 32
      %v3526 = vpop.permute.xlu0 %3525
      %3527 = vrot.lane.b32.xlu0 %v3468, 32
      %v3528 = vpop.permute.xlu0 %3527
      %3529 = vrot.lane.b32.xlu0 %v3471, 32
      %v3530 = vpop.permute.xlu0 %3529
      %3531 = vrot.lane.b32.xlu0 %v3474, 32
      %v3532 = vpop.permute.xlu0 %3531
      %3533 = vrot.lane.b32.xlu0 %v3477, 32
      %v3534 = vpop.permute.xlu0 %3533
      %3535 = vrot.lane.b32.xlu0 %v3480, 32
      %v3536 = vpop.permute.xlu0 %3535
      %3537 = vrot.lane.b32.xlu0 %v3483, 32
      %v3538 = vpop.permute.xlu0 %3537
      %3539 = vrot.lane.b32.xlu0 %v3486, 32
      %v3540 = vpop.permute.xlu0 %3539
      %3541 = vrot.lane.b32.xlu0 %v3489, 32
      %v3542 = vpop.permute.xlu0 %3541
      %3543 = vrot.lane.b32.xlu0 %v3492, 32
      %v3544 = vpop.permute.xlu0 %3543
      %3545 = vrot.lane.b32.xlu0 %v3495, 32
      %v3546 = vpop.permute.xlu0 %3545
      %vm3563 = vcmask 1047808
      %3564 = vst.msk [vmem:[#allocation4 + $0x10] sm:$0xff] %vm3563, %v3516
      %3565 = vst.msk [vmem:[#allocation4 + $0x38] sm:$0xff] %vm3563, %v3518
      %3566 = vst.msk [vmem:[#allocation4 + $0x60] sm:$0xff] %vm3563, %v3520
      %3567 = vst.msk [vmem:[#allocation4 + $0x88] sm:$0xff] %vm3563, %v3522
      %3568 = vst.msk [vmem:[#allocation4 + $0xb0] sm:$0xff] %vm3563, %v3524
      %3569 = vst.msk [vmem:[#allocation4 + $0xd8] sm:$0xff] %vm3563, %v3526
      %3570 = vst.msk [vmem:[#allocation4 + $0x100] sm:$0xff] %vm3563, %v3528
      %3571 = vst.msk [vmem:[#allocation4 + $0x128] sm:$0xff] %vm3563, %v3530
      %3572 = vst.msk [vmem:[#allocation4 + $0x150] sm:$0xff] %vm3563, %v3532
      %3573 = vst.msk [vmem:[#allocation4 + $0x178] sm:$0xff] %vm3563, %v3534
      %3574 = vst.msk [vmem:[#allocation4 + $0x1a0] sm:$0xff] %vm3563, %v3536
      %3575 = vst.msk [vmem:[#allocation4 + $0x1c8] sm:$0xff] %vm3563, %v3538
      %3576 = vst.msk [vmem:[#allocation4 + $0x1f0] sm:$0xff] %vm3563, %v3540
      %3577 = vst.msk [vmem:[#allocation4 + $0x218] sm:$0xff] %vm3563, %v3542
      %3578 = vst.msk [vmem:[#allocation4 + $0x240] sm:$0xff] %vm3563, %v3544
      %3579 = vst.msk [vmem:[#allocation4 + $0x268] sm:$0xff] %vm3563, %v3546
      %3580 = vst.msk [vmem:[#allocation4 + $0x18] sm:$0xff] %vm1652, %v3453
      %3581 = vst.msk [vmem:[#allocation4 + $0x40] sm:$0xff] %vm1652, %v3456
      %3582 = vst.msk [vmem:[#allocation4 + $0x68] sm:$0xff] %vm1652, %v3459
      %3583 = vst.msk [vmem:[#allocation4 + $0x90] sm:$0xff] %vm1652, %v3462
      %3584 = vst.msk [vmem:[#allocation4 + $0xb8] sm:$0xff] %vm1652, %v3465
      %3585 = vst.msk [vmem:[#allocation4 + $0xe0] sm:$0xff] %vm1652, %v3468
      %3586 = vst.msk [vmem:[#allocation4 + $0x108] sm:$0xff] %vm1652, %v3471
      %3587 = vst.msk [vmem:[#allocation4 + $0x130] sm:$0xff] %vm1652, %v3474
      %3588 = vst.msk [vmem:[#allocation4 + $0x158] sm:$0xff] %vm1652, %v3477
      %3589 = vst.msk [vmem:[#allocation4 + $0x180] sm:$0xff] %vm1652, %v3480
      %3590 = vst.msk [vmem:[#allocation4 + $0x1a8] sm:$0xff] %vm1652, %v3483
      %3591 = vst.msk [vmem:[#allocation4 + $0x1d0] sm:$0xff] %vm1652, %v3486
      %3592 = vst.msk [vmem:[#allocation4 + $0x1f8] sm:$0xff] %vm1652, %v3489
      %3593 = vst.msk [vmem:[#allocation4 + $0x220] sm:$0xff] %vm1652, %v3492
      %3594 = vst.msk [vmem:[#allocation4 + $0x248] sm:$0xff] %vm1652, %v3495
      %3595 = vst.msk [vmem:[#allocation4 + $0x270] sm:$0xff] %vm1652, %v3498
      %3597 = vrot.lane.b32.xlu0 %v3456, 96
      %v3598 = vpop.permute.xlu0 %3597
      %3599 = vrot.lane.b32.xlu0 %v3459, 96
      %v3600 = vpop.permute.xlu0 %3599
      %3601 = vrot.lane.b32.xlu0 %v3462, 96
      %v3602 = vpop.permute.xlu0 %3601
      %3603 = vrot.lane.b32.xlu0 %v3465, 96
      %v3604 = vpop.permute.xlu0 %3603
      %3605 = vrot.lane.b32.xlu0 %v3468, 96
      %v3606 = vpop.permute.xlu0 %3605
      %3607 = vrot.lane.b32.xlu0 %v3471, 96
      %v3608 = vpop.permute.xlu0 %3607
      %3609 = vrot.lane.b32.xlu0 %v3474, 96
      %v3610 = vpop.permute.xlu0 %3609
      %3611 = vrot.lane.b32.xlu0 %v3477, 96
      %v3612 = vpop.permute.xlu0 %3611
      %3613 = vrot.lane.b32.xlu0 %v3480, 96
      %v3614 = vpop.permute.xlu0 %3613
      %3615 = vrot.lane.b32.xlu0 %v3483, 96
      %v3616 = vpop.permute.xlu0 %3615
      %3617 = vrot.lane.b32.xlu0 %v3486, 96
      %v3618 = vpop.permute.xlu0 %3617
      %3619 = vrot.lane.b32.xlu0 %v3489, 96
      %v3620 = vpop.permute.xlu0 %3619
      %3621 = vrot.lane.b32.xlu0 %v3492, 96
      %v3622 = vpop.permute.xlu0 %3621
      %3623 = vrot.lane.b32.xlu0 %v3495, 96
      %v3624 = vpop.permute.xlu0 %3623
      %3625 = vrot.lane.b32.xlu0 %v3498, 96
      %v3626 = vpop.permute.xlu0 %3625
      %3627 = vrot.lane.b32.xlu0 0, 96
      %v3628 = vpop.permute.xlu0 %3627
      %3645 = vst.msk [vmem:[#allocation4 + $0x18] sm:$0xff] %vm1733, %v3598
      %3646 = vst.msk [vmem:[#allocation4 + $0x20] sm:$0xff] %vm1604, %v3598
      %3647 = vst.msk [vmem:[#allocation4 + $0x40] sm:$0xff] %vm1733, %v3600
      %3648 = vst.msk [vmem:[#allocation4 + $0x48] sm:$0xff] %vm1604, %v3600
      %3649 = vst.msk [vmem:[#allocation4 + $0x68] sm:$0xff] %vm1733, %v3602
      %3650 = vst.msk [vmem:[#allocation4 + $0x70] sm:$0xff] %vm1604, %v3602
      %3651 = vst.msk [vmem:[#allocation4 + $0x90] sm:$0xff] %vm1733, %v3604
      %3652 = vst.msk [vmem:[#allocation4 + $0x98] sm:$0xff] %vm1604, %v3604
      %3653 = vst.msk [vmem:[#allocation4 + $0xb8] sm:$0xff] %vm1733, %v3606
      %3654 = vst.msk [vmem:[#allocation4 + $0xc0] sm:$0xff] %vm1604, %v3606
      %3655 = vst.msk [vmem:[#allocation4 + $0xe0] sm:$0xff] %vm1733, %v3608
      %3656 = vst.msk [vmem:[#allocation4 + $0xe8] sm:$0xff] %vm1604, %v3608
      %3657 = vst.msk [vmem:[#allocation4 + $0x108] sm:$0xff] %vm1733, %v3610
      %3658 = vst.msk [vmem:[#allocation4 + $0x110] sm:$0xff] %vm1604, %v3610
      %3659 = vst.msk [vmem:[#allocation4 + $0x130] sm:$0xff] %vm1733, %v3612
      %3660 = vst.msk [vmem:[#allocation4 + $0x138] sm:$0xff] %vm1604, %v3612
      %3661 = vst.msk [vmem:[#allocation4 + $0x158] sm:$0xff] %vm1733, %v3614
      %3662 = vst.msk [vmem:[#allocation4 + $0x160] sm:$0xff] %vm1604, %v3614
      %3663 = vst.msk [vmem:[#allocation4 + $0x180] sm:$0xff] %vm1733, %v3616
      %3664 = vst.msk [vmem:[#allocation4 + $0x188] sm:$0xff] %vm1604, %v3616
      %3665 = vst.msk [vmem:[#allocation4 + $0x1a8] sm:$0xff] %vm1733, %v3618
      %3666 = vst.msk [vmem:[#allocation4 + $0x1b0] sm:$0xff] %vm1604, %v3618
      %3667 = vst.msk [vmem:[#allocation4 + $0x1d0] sm:$0xff] %vm1733, %v3620
      %3668 = vst.msk [vmem:[#allocation4 + $0x1d8] sm:$0xff] %vm1604, %v3620
      %3669 = vst.msk [vmem:[#allocation4 + $0x1f8] sm:$0xff] %vm1733, %v3622
      %3670 = vst.msk [vmem:[#allocation4 + $0x200] sm:$0xff] %vm1604, %v3622
      %3671 = vst.msk [vmem:[#allocation4 + $0x220] sm:$0xff] %vm1733, %v3624
      %3672 = vst.msk [vmem:[#allocation4 + $0x228] sm:$0xff] %vm1604, %v3624
      %3673 = vst.msk [vmem:[#allocation4 + $0x248] sm:$0xff] %vm1733, %v3626
      %3674 = vst.msk [vmem:[#allocation4 + $0x250] sm:$0xff] %vm1604, %v3626
      %3675 = vst.msk [vmem:[#allocation4 + $0x270] sm:$0xff] %vm1733, %v3628
      %3676 = vst.msk [vmem:[#allocation4 + $0x278] sm:$0xff] %vm1604, %v3628
      %v3677 = vld [vmem:[#allocation4] sm:$0xff]
      %v3678 = vld [vmem:[#allocation4 + $0x8] sm:$0xff]
      %v3679 = vld [vmem:[#allocation4 + $0x10] sm:$0xff]
      %v3680 = vld [vmem:[#allocation4 + $0x18] sm:$0xff]
      %v3681 = vld [vmem:[#allocation4 + $0x20] sm:$0xff]
      %v3682 = vld [vmem:[#allocation4 + $0x28] sm:$0xff]
      %v3683 = vld [vmem:[#allocation4 + $0x30] sm:$0xff]
      %v3684 = vld [vmem:[#allocation4 + $0x38] sm:$0xff]
      %v3685 = vld [vmem:[#allocation4 + $0x40] sm:$0xff]
      %v3686 = vld [vmem:[#allocation4 + $0x48] sm:$0xff]
      %v3687 = vld [vmem:[#allocation4 + $0x50] sm:$0xff]
      %v3688 = vld [vmem:[#allocation4 + $0x58] sm:$0xff]
      %v3689 = vld [vmem:[#allocation4 + $0x60] sm:$0xff]
      %v3690 = vld [vmem:[#allocation4 + $0x68] sm:$0xff]
      %v3691 = vld [vmem:[#allocation4 + $0x70] sm:$0xff]
      %v3692 = vld [vmem:[#allocation4 + $0x78] sm:$0xff]
      %v3693 = vld [vmem:[#allocation4 + $0x80] sm:$0xff]
      %v3694 = vld [vmem:[#allocation4 + $0x88] sm:$0xff]
      %v3695 = vld [vmem:[#allocation4 + $0x90] sm:$0xff]
      %v3696 = vld [vmem:[#allocation4 + $0x98] sm:$0xff]
      %v3697 = vld [vmem:[#allocation4 + $0xa0] sm:$0xff]
      %v3698 = vld [vmem:[#allocation4 + $0xa8] sm:$0xff]
      %v3699 = vld [vmem:[#allocation4 + $0xb0] sm:$0xff]
      %v3700 = vld [vmem:[#allocation4 + $0xb8] sm:$0xff]
      %v3701 = vld [vmem:[#allocation4 + $0xc0] sm:$0xff]
      %v3702 = vld [vmem:[#allocation4 + $0xc8] sm:$0xff]
      %v3703 = vld [vmem:[#allocation4 + $0xd0] sm:$0xff]
      %v3704 = vld [vmem:[#allocation4 + $0xd8] sm:$0xff]
      %v3705 = vld [vmem:[#allocation4 + $0xe0] sm:$0xff]
      %v3706 = vld [vmem:[#allocation4 + $0xe8] sm:$0xff]
      %v3707 = vld [vmem:[#allocation4 + $0xf0] sm:$0xff]
      %v3708 = vld [vmem:[#allocation4 + $0xf8] sm:$0xff]
      %v3709 = vld [vmem:[#allocation4 + $0x100] sm:$0xff]
      %v3710 = vld [vmem:[#allocation4 + $0x108] sm:$0xff]
      %v3711 = vld [vmem:[#allocation4 + $0x110] sm:$0xff]
      %v3712 = vld [vmem:[#allocation4 + $0x118] sm:$0xff]
      %v3713 = vld [vmem:[#allocation4 + $0x120] sm:$0xff]
      %v3714 = vld [vmem:[#allocation4 + $0x128] sm:$0xff]
      %v3715 = vld [vmem:[#allocation4 + $0x130] sm:$0xff]
      %v3716 = vld [vmem:[#allocation4 + $0x138] sm:$0xff]
      %v3717 = vld [vmem:[#allocation4 + $0x140] sm:$0xff]
      %v3718 = vld [vmem:[#allocation4 + $0x148] sm:$0xff]
      %v3719 = vld [vmem:[#allocation4 + $0x150] sm:$0xff]
      %v3720 = vld [vmem:[#allocation4 + $0x158] sm:$0xff]
      %v3721 = vld [vmem:[#allocation4 + $0x160] sm:$0xff]
      %v3722 = vld [vmem:[#allocation4 + $0x168] sm:$0xff]
      %v3723 = vld [vmem:[#allocation4 + $0x170] sm:$0xff]
      %v3724 = vld [vmem:[#allocation4 + $0x178] sm:$0xff]
      %v3725 = vld [vmem:[#allocation4 + $0x180] sm:$0xff]
      %v3726 = vld [vmem:[#allocation4 + $0x188] sm:$0xff]
      %v3727 = vld [vmem:[#allocation4 + $0x190] sm:$0xff]
      %v3728 = vld [vmem:[#allocation4 + $0x198] sm:$0xff]
      %v3729 = vld [vmem:[#allocation4 + $0x1a0] sm:$0xff]
      %v3730 = vld [vmem:[#allocation4 + $0x1a8] sm:$0xff]
      %v3731 = vld [vmem:[#allocation4 + $0x1b0] sm:$0xff]
      %v3732 = vld [vmem:[#allocation4 + $0x1b8] sm:$0xff]
      %v3733 = vld [vmem:[#allocation4 + $0x1c0] sm:$0xff]
      %v3734 = vld [vmem:[#allocation4 + $0x1c8] sm:$0xff]
      %v3735 = vld [vmem:[#allocation4 + $0x1d0] sm:$0xff]
      %v3736 = vld [vmem:[#allocation4 + $0x1d8] sm:$0xff]
      %v3737 = vld [vmem:[#allocation4 + $0x1e0] sm:$0xff]
      %v3738 = vld [vmem:[#allocation4 + $0x1e8] sm:$0xff]
      %v3739 = vld [vmem:[#allocation4 + $0x1f0] sm:$0xff]
      %v3740 = vld [vmem:[#allocation4 + $0x1f8] sm:$0xff]
      %v3741 = vld [vmem:[#allocation4 + $0x200] sm:$0xff]
      %v3742 = vld [vmem:[#allocation4 + $0x208] sm:$0xff]
      %v3743 = vld [vmem:[#allocation4 + $0x210] sm:$0xff]
      %v3744 = vld [vmem:[#allocation4 + $0x218] sm:$0xff]
      %v3745 = vld [vmem:[#allocation4 + $0x220] sm:$0xff]
      %v3746 = vld [vmem:[#allocation4 + $0x228] sm:$0xff]
      %v3747 = vld [vmem:[#allocation4 + $0x230] sm:$0xff]
      %v3748 = vld [vmem:[#allocation4 + $0x238] sm:$0xff]
      %v3749 = vld [vmem:[#allocation4 + $0x240] sm:$0xff]
      %v3750 = vld [vmem:[#allocation4 + $0x248] sm:$0xff]
      %v3751 = vld [vmem:[#allocation4 + $0x250] sm:$0xff]
      %v3752 = vld [vmem:[#allocation4 + $0x258] sm:$0xff]
      %v3753 = vld [vmem:[#allocation4 + $0x260] sm:$0xff]
      %v3754 = vld [vmem:[#allocation4 + $0x268] sm:$0xff]
      %v3755 = vld [vmem:[#allocation4 + $0x270] sm:$0xff]
      %v3756 = vld [vmem:[#allocation4 + $0x278] sm:$0xff]
      %v3757 = vld [vmem:[%s6] sm:$0xf]
      %v3758 = vld [vmem:[%s6 + $0x4] sm:$0xf]
      %v3759 = vld [vmem:[%s6 + $0x8] sm:$0xf]
      %v3760 = vld [vmem:[%s6 + $0xc] sm:$0xf]
      %v3761 = vld [vmem:[%s6 + $0x10] sm:$0xf]
      %v3762 = vld [vmem:[%s6 + $0x14] sm:$0xf]
      %v3763 = vld [vmem:[%s6 + $0x18] sm:$0xf]
      %v3764 = vld [vmem:[%s6 + $0x1c] sm:$0xf]
      %v3765 = vld [vmem:[%s6 + $0x20] sm:$0xf]
      %v3766 = vld [vmem:[%s6 + $0x24] sm:$0xf]
      %v3767 = vld [vmem:[%s6 + $0x28] sm:$0xf]
      %v3768 = vld [vmem:[%s6 + $0x2c] sm:$0xf]
      %v3769 = vld [vmem:[%s6 + $0x30] sm:$0xf]
      %v3770 = vld [vmem:[%s6 + $0x34] sm:$0xf]
      %v3771 = vld [vmem:[%s6 + $0x38] sm:$0xf]
      %v3772 = vld [vmem:[%s6 + $0x3c] sm:$0xf]
      %v3773 = vld [vmem:[%s6 + $0x40] sm:$0xf]
      %v3774 = vld [vmem:[%s6 + $0x44] sm:$0xf]
      %v3775 = vld [vmem:[%s6 + $0x48] sm:$0xf]
      %v3776 = vld [vmem:[%s6 + $0x4c] sm:$0xf]
      %v3777 = vld [vmem:[%s6 + $0x50] sm:$0xf]
      %v3778 = vld [vmem:[%s6 + $0x54] sm:$0xf]
      %v3779 = vld [vmem:[%s6 + $0x58] sm:$0xf]
      %v3780 = vld [vmem:[%s6 + $0x5c] sm:$0xf]
      %v3781 = vld [vmem:[%s6 + $0x60] sm:$0xf]
      %v3782 = vld [vmem:[%s6 + $0x64] sm:$0xf]
      %v3783 = vld [vmem:[%s6 + $0x68] sm:$0xf]
      %v3784 = vld [vmem:[%s6 + $0x6c] sm:$0xf]
      %v3785 = vld [vmem:[%s6 + $0x70] sm:$0xf]
      %v3786 = vld [vmem:[%s6 + $0x74] sm:$0xf]
      %v3787 = vld [vmem:[%s6 + $0x78] sm:$0xf]
      %v3788 = vld [vmem:[%s6 + $0x7c] sm:$0xf]
      %v3789 = vld [vmem:[%s6 + $0x80] sm:$0xf]
      %v3790 = vld [vmem:[%s6 + $0x84] sm:$0xf]
      %v3791 = vld [vmem:[%s6 + $0x88] sm:$0xf]
      %v3792 = vld [vmem:[%s6 + $0x8c] sm:$0xf]
      %v3793 = vld [vmem:[%s6 + $0x90] sm:$0xf]
      %v3794 = vld [vmem:[%s6 + $0x94] sm:$0xf]
      %v3795 = vld [vmem:[%s6 + $0x98] sm:$0xf]
      %v3796 = vld [vmem:[%s6 + $0x9c] sm:$0xf]
      %v3797 = vld [vmem:[%s6 + $0xa0] sm:$0xf]
      %v3798 = vld [vmem:[%s6 + $0xa4] sm:$0xf]
      %v3799 = vld [vmem:[%s6 + $0xa8] sm:$0xf]
      %v3800 = vld [vmem:[%s6 + $0xac] sm:$0xf]
      %v3801 = vld [vmem:[%s6 + $0xb0] sm:$0xf]
      %v3802 = vld [vmem:[%s6 + $0xb4] sm:$0xf]
      %v3803 = vld [vmem:[%s6 + $0xb8] sm:$0xf]
      %v3804 = vld [vmem:[%s6 + $0xbc] sm:$0xf]
      %v3805 = vld [vmem:[%s6 + $0xc0] sm:$0xf]
      %v3806 = vld [vmem:[%s6 + $0xc4] sm:$0xf]
      %v3807 = vld [vmem:[%s6 + $0xc8] sm:$0xf]
      %v3808 = vld [vmem:[%s6 + $0xcc] sm:$0xf]
      %v3809 = vld [vmem:[%s6 + $0xd0] sm:$0xf]
      %v3810 = vld [vmem:[%s6 + $0xd4] sm:$0xf]
      %v3811 = vld [vmem:[%s6 + $0xd8] sm:$0xf]
      %v3812 = vld [vmem:[%s6 + $0xdc] sm:$0xf]
      %v3813 = vld [vmem:[%s6 + $0xe0] sm:$0xf]
      %v3814 = vld [vmem:[%s6 + $0xe4] sm:$0xf]
      %v3815 = vld [vmem:[%s6 + $0xe8] sm:$0xf]
      %v3816 = vld [vmem:[%s6 + $0xec] sm:$0xf]
      %v3817 = vld [vmem:[%s6 + $0xf0] sm:$0xf]
      %v3818 = vld [vmem:[%s6 + $0xf4] sm:$0xf]
      %v3819 = vld [vmem:[%s6 + $0xf8] sm:$0xf]
      %v3820 = vld [vmem:[%s6 + $0xfc] sm:$0xf]
      %v3821 = vld [vmem:[%s6 + $0x100] sm:$0xf]
      %v3822 = vld [vmem:[%s6 + $0x104] sm:$0xf]
      %v3823 = vld [vmem:[%s6 + $0x108] sm:$0xf]
      %v3824 = vld [vmem:[%s6 + $0x10c] sm:$0xf]
      %v3825 = vld [vmem:[%s6 + $0x110] sm:$0xf]
      %v3826 = vld [vmem:[%s6 + $0x114] sm:$0xf]
      %v3827 = vld [vmem:[%s6 + $0x118] sm:$0xf]
      %v3828 = vld [vmem:[%s6 + $0x11c] sm:$0xf]
      %v3829 = vld [vmem:[%s7] sm:$0x1]
      %v3831 = vlaneseq
      %v3832 = vshrl.u32 %v3831, 7
      %v3833 = vsub.s32 0, %v3832
      %v3834 = vrot.slane %v3829, %v3833
      %v3908 = vunpack.c.l.b16 %v3757
      %v3909 = vunpack.c.l.b16 %v3758
      %v3910 = vunpack.c.l.b16 %v3759
      %v3911 = vunpack.c.l.b16 %v3760
      %v3912 = vunpack.c.l.b16 %v3761
      %v3913 = vunpack.c.l.b16 %v3762
      %v3914 = vunpack.c.l.b16 %v3763
      %v3915 = vunpack.c.l.b16 %v3764
      %v3916 = vunpack.c.l.b16 %v3765
      %v3917 = vunpack.c.l.b16 %v3766
      %v3918 = vunpack.c.l.b16 %v3767
      %v3919 = vunpack.c.l.b16 %v3768
      %v3920 = vunpack.c.l.b16 %v3769
      %v3921 = vunpack.c.l.b16 %v3770
      %v3922 = vunpack.c.l.b16 %v3771
      %v3923 = vunpack.c.l.b16 %v3772
      %v3924 = vunpack.c.l.b16 %v3773
      %v3925 = vunpack.c.l.b16 %v3774
      %v3926 = vunpack.c.l.b16 %v3775
      %v3927 = vunpack.c.l.b16 %v3776
      %v3928 = vunpack.c.l.b16 %v3777
      %v3929 = vunpack.c.l.b16 %v3778
      %v3930 = vunpack.c.l.b16 %v3779
      %v3931 = vunpack.c.l.b16 %v3780
      %v3932 = vunpack.c.l.b16 %v3781
      %v3933 = vunpack.c.l.b16 %v3782
      %v3934 = vunpack.c.l.b16 %v3783
      %v3935 = vunpack.c.l.b16 %v3784
      %v3936 = vunpack.c.l.b16 %v3785
      %v3937 = vunpack.c.l.b16 %v3786
      %v3938 = vunpack.c.l.b16 %v3787
      %v3939 = vunpack.c.l.b16 %v3788
      %v3940 = vunpack.c.l.b16 %v3789
      %v3941 = vunpack.c.l.b16 %v3790
      %v3942 = vunpack.c.l.b16 %v3791
      %v3943 = vunpack.c.l.b16 %v3792
      %v3944 = vunpack.c.l.b16 %v3793
      %v3945 = vunpack.c.l.b16 %v3794
      %v3946 = vunpack.c.l.b16 %v3795
      %v3947 = vunpack.c.l.b16 %v3796
      %v3948 = vunpack.c.l.b16 %v3797
      %v3949 = vunpack.c.l.b16 %v3798
      %v3950 = vunpack.c.l.b16 %v3799
      %v3951 = vunpack.c.l.b16 %v3800
      %v3952 = vunpack.c.l.b16 %v3801
      %v3953 = vunpack.c.l.b16 %v3802
      %v3954 = vunpack.c.l.b16 %v3803
      %v3955 = vunpack.c.l.b16 %v3804
      %v3956 = vunpack.c.l.b16 %v3805
      %v3957 = vunpack.c.l.b16 %v3806
      %v3958 = vunpack.c.l.b16 %v3807
      %v3959 = vunpack.c.l.b16 %v3808
      %v3960 = vunpack.c.l.b16 %v3809
      %v3961 = vunpack.c.l.b16 %v3810
      %v3962 = vunpack.c.l.b16 %v3811
      %v3963 = vunpack.c.l.b16 %v3812
      %v3964 = vunpack.c.l.b16 %v3813
      %v3965 = vunpack.c.l.b16 %v3814
      %v3966 = vunpack.c.l.b16 %v3815
      %v3967 = vunpack.c.l.b16 %v3816
      %v3968 = vunpack.c.l.b16 %v3817
      %v3969 = vunpack.c.l.b16 %v3818
      %v3970 = vunpack.c.l.b16 %v3819
      %v3971 = vunpack.c.l.b16 %v3820
      %v3972 = vunpack.c.l.b16 %v3821
      %v3973 = vunpack.c.l.b16 %v3822
      %v3974 = vunpack.c.l.b16 %v3823
      %v3975 = vunpack.c.l.b16 %v3824
      %v3976 = vunpack.c.l.b16 %v3825
      %v3977 = vunpack.c.l.b16 %v3826
      %v3978 = vunpack.c.l.b16 %v3827
      %v3979 = vunpack.c.l.b16 %v3828
      %v3980 = vpack.c.b16 %v3909, %v3908
      %v3981 = vpack.c.b16 %v3911, %v3910
      %v3982 = vpack.c.b16 %v3913, %v3912
      %v3983 = vpack.c.b16 %v3915, %v3914
      %v3984 = vpack.c.b16 %v3917, %v3916
      %v3985 = vpack.c.b16 %v3919, %v3918
      %v3986 = vpack.c.b16 %v3921, %v3920
      %v3987 = vpack.c.b16 %v3923, %v3922
      %v3988 = vpack.c.b16 %v3925, %v3924
      %v3989 = vpack.c.b16 %v3927, %v3926
      %v3990 = vpack.c.b16 %v3929, %v3928
      %v3991 = vpack.c.b16 %v3931, %v3930
      %v3992 = vpack.c.b16 %v3933, %v3932
      %v3993 = vpack.c.b16 %v3935, %v3934
      %v3994 = vpack.c.b16 %v3937, %v3936
      %v3995 = vpack.c.b16 %v3939, %v3938
      %v3996 = vpack.c.b16 %v3941, %v3940
      %v3997 = vpack.c.b16 %v3943, %v3942
      %v3998 = vpack.c.b16 %v3945, %v3944
      %v3999 = vpack.c.b16 %v3947, %v3946
      %v4000 = vpack.c.b16 %v3949, %v3948
      %v4001 = vpack.c.b16 %v3951, %v3950
      %v4002 = vpack.c.b16 %v3953, %v3952
      %v4003 = vpack.c.b16 %v3955, %v3954
      %v4004 = vpack.c.b16 %v3957, %v3956
      %v4005 = vpack.c.b16 %v3959, %v3958
      %v4006 = vpack.c.b16 %v3961, %v3960
      %v4007 = vpack.c.b16 %v3963, %v3962
      %v4008 = vpack.c.b16 %v3965, %v3964
      %v4009 = vpack.c.b16 %v3967, %v3966
      %v4010 = vpack.c.b16 %v3969, %v3968
      %v4011 = vpack.c.b16 %v3971, %v3970
      %v4012 = vpack.c.b16 %v3973, %v3972
      %v4013 = vpack.c.b16 %v3975, %v3974
      %v4014 = vpack.c.b16 %v3977, %v3976
      %v4015 = vpack.c.b16 %v3979, %v3978
      %v4053 = vsel %vm1604, %v3681, 0
      %v4056 = vsel %vm1604, %v3686, 0
      %v4059 = vsel %vm1604, %v3691, 0
      %v4062 = vsel %vm1604, %v3696, 0
      %v4065 = vsel %vm1604, %v3701, 0
      %v4068 = vsel %vm1604, %v3706, 0
      %v4071 = vsel %vm1604, %v3711, 0
      %v4074 = vsel %vm1604, %v3716, 0
      %v4077 = vsel %vm1604, %v3721, 0
      %v4080 = vsel %vm1604, %v3726, 0
      %v4083 = vsel %vm1604, %v3731, 0
      %v4086 = vsel %vm1604, %v3736, 0
      %v4089 = vsel %vm1604, %v3741, 0
      %v4092 = vsel %vm1604, %v3746, 0
      %v4095 = vsel %vm1604, %v3751, 0
      %v4098 = vsel %vm1604, %v3756, 0
      %4100 = vmatprep.subr.bf16.mxu0 0
      %4101 = vmatpush1.bf16.msra.mxu0 %v3980
      %4102 = vmatprep.subr.bf16.mxu0 0
      %4103 = vmatpush1.bf16.msra.mxu0 %v3981
      %4104 = vmatprep.subr.bf16.mxu0 0
      %4105 = vmatpush1.bf16.msra.mxu0 %v3982
      %4106 = vmatprep.subr.bf16.mxu0 0
      %4107 = vmatpush1.bf16.msra.mxu0 %v3983
      %4108 = vmatprep.subr.bf16.mxu0 0
      %4109 = vmatpush1.bf16.msra.mxu0 %v3984
      %4110 = vmatprep.subr.bf16.mxu0 0
      %4111 = vmatpush1.bf16.msra.mxu0 %v3985
      %4112 = vmatprep.subr.bf16.mxu0 0
      %4113 = vmatpush1.bf16.msra.mxu0 %v3986
      %4114 = vmatprep.subr.bf16.mxu0 0
      %4115 = vmatpush1.bf16.msra.mxu0 %v3987
      %4116 = vmatprep.subr.bf16.mxu0 0
      %4117 = vmatpush1.bf16.msra.mxu0 %v3988
      %4118 = vmatprep.subr.bf16.mxu0 0
      %4119 = vmatpush1.bf16.msra.mxu0 %v3989
      %4120 = vmatprep.subr.bf16.mxu0 0
      %4121 = vmatpush1.bf16.msra.mxu0 %v3990
      %4122 = vmatprep.subr.bf16.mxu0 0
      %4123 = vmatpush1.bf16.msra.mxu0 %v3991
      %4124 = vmatprep.subr.bf16.mxu0 0
      %4125 = vmatpush1.bf16.msra.mxu0 %v3992
      %4126 = vmatprep.subr.bf16.mxu0 0
      %4127 = vmatpush1.bf16.msra.mxu0 %v3993
      %4128 = vmatprep.subr.bf16.mxu0 0
      %4129 = vmatpush1.bf16.msra.mxu0 %v3994
      %4130 = vmatprep.subr.bf16.mxu0 0
      %4131 = vmatpush1.bf16.msra.mxu0 %v3995
      %4132 = vmatprep.mubr.bf16.mxu0 %v3678
      %4133 = vmatmul.mubr.bf16.gmra.mrb[0].mxu0 %v3677
      %v4134 = vpop.f32.mrb[0].mxu0
      %v4135 = vadd.f32 %v3834, %v4134
      %v4136 = vpop.f32.mrb[0].mxu0
      %v4137 = vpop.f32.mrb[0].mxu0
      %v4138 = vadd.f32 %v3834, %v4137
      %v4139 = vpop.f32.mrb[0].mxu0
      %4140 = vmatprep.mubr.bf16.mxu0 %v3683
      %4141 = vmatmul.mubr.bf16.gmra.mrb[0].mxu0 %v3682
      %v4142 = vpop.f32.mrb[0].mxu0
      %v4143 = vadd.f32 %v3834, %v4142
      %v4144 = vpop.f32.mrb[0].mxu0
      %v4145 = vpop.f32.mrb[0].mxu0
      %v4146 = vadd.f32 %v3834, %v4145
      %v4147 = vpop.f32.mrb[0].mxu0
      %4148 = vmatprep.mubr.bf16.mxu0 %v3688
      %4149 = vmatmul.mubr.bf16.gmra.mrb[0].mxu0 %v3687
      %v4150 = vpop.f32.mrb[0].mxu0
      %v4151 = vadd.f32 %v3834, %v4150
      %v4152 = vpop.f32.mrb[0].mxu0
      %v4153 = vpop.f32.mrb[0].mxu0
      %v4154 = vadd.f32 %v3834, %v4153
      %v4155 = vpop.f32.mrb[0].mxu0
      %4156 = vmatprep.mubr.bf16.mxu0 %v3693
      %4157 = vmatmul.mubr.bf16.gmra.mrb[0].mxu0 %v3692
      %v4158 = vpop.f32.mrb[0].mxu0
      %v4159 = vadd.f32 %v3834, %v4158
      %v4160 = vpop.f32.mrb[0].mxu0
      %v4161 = vpop.f32.mrb[0].mxu0
      %v4162 = vadd.f32 %v3834, %v4161
      %v4163 = vpop.f32.mrb[0].mxu0
      %4164 = vmatprep.mubr.bf16.mxu0 %v3698
      %4165 = vmatmul.mubr.bf16.gmra.mrb[0].mxu0 %v3697
      %v4166 = vpop.f32.mrb[0].mxu0
      %v4167 = vadd.f32 %v3834, %v4166
      %v4168 = vpop.f32.mrb[0].mxu0
      %v4169 = vpop.f32.mrb[0].mxu0
      %v4170 = vadd.f32 %v3834, %v4169
      %v4171 = vpop.f32.mrb[0].mxu0
      %4172 = vmatprep.mubr.bf16.mxu0 %v3703
      %4173 = vmatmul.mubr.bf16.gmra.mrb[0].mxu0 %v3702
      %v4174 = vpop.f32.mrb[0].mxu0
      %v4175 = vadd.f32 %v3834, %v4174
      %v4176 = vpop.f32.mrb[0].mxu0
      %v4177 = vpop.f32.mrb[0].mxu0
      %v4178 = vadd.f32 %v3834, %v4177
      %v4179 = vpop.f32.mrb[0].mxu0
      %4180 = vmatprep.mubr.bf16.mxu0 %v3708
      %4181 = vmatmul.mubr.bf16.gmra.mrb[0].mxu0 %v3707
      %v4182 = vpop.f32.mrb[0].mxu0
      %v4183 = vadd.f32 %v3834, %v4182
      %v4184 = vpop.f32.mrb[0].mxu0
      %v4185 = vpop.f32.mrb[0].mxu0
      %v4186 = vadd.f32 %v3834, %v4185
      %v4187 = vpop.f32.mrb[0].mxu0
      %4188 = vmatprep.mubr.bf16.mxu0 %v3713
      %4189 = vmatmul.mubr.bf16.gmra.mrb[0].mxu0 %v3712
      %v4190 = vpop.f32.mrb[0].mxu0
      %v4191 = vadd.f32 %v3834, %v4190
      %v4192 = vpop.f32.mrb[0].mxu0
      %v4193 = vpop.f32.mrb[0].mxu0
      %v4194 = vadd.f32 %v3834, %v4193
      %v4195 = vpop.f32.mrb[0].mxu0
      %4196 = vmatprep.mubr.bf16.mxu0 %v3718
      %4197 = vmatmul.mubr.bf16.gmra.mrb[0].mxu0 %v3717
      %v4198 = vpop.f32.mrb[0].mxu0
      %v4199 = vadd.f32 %v3834, %v4198
      %v4200 = vpop.f32.mrb[0].mxu0
      %v4201 = vpop.f32.mrb[0].mxu0
      %v4202 = vadd.f32 %v3834, %v4201
      %v4203 = vpop.f32.mrb[0].mxu0
      %4204 = vmatprep.mubr.bf16.mxu0 %v3723
      %4205 = vmatmul.mubr.bf16.gmra.mrb[0].mxu0 %v3722
      %v4206 = vpop.f32.mrb[0].mxu0
      %v4207 = vadd.f32 %v3834, %v4206
      %v4208 = vpop.f32.mrb[0].mxu0
      %v4209 = vpop.f32.mrb[0].mxu0
      %v4210 = vadd.f32 %v3834, %v4209
      %v4211 = vpop.f32.mrb[0].mxu0
      %4212 = vmatprep.mubr.bf16.mxu0 %v3728
      %4213 = vmatmul.mubr.bf16.gmra.mrb[0].mxu0 %v3727
      %v4214 = vpop.f32.mrb[0].mxu0
      %v4215 = vadd.f32 %v3834, %v4214
      %v4216 = vpop.f32.mrb[0].mxu0
      %v4217 = vpop.f32.mrb[0].mxu0
      %v4218 = vadd.f32 %v3834, %v4217
      %v4219 = vpop.f32.mrb[0].mxu0
      %4220 = vmatprep.mubr.bf16.mxu0 %v3733
      %4221 = vmatmul.mubr.bf16.gmra.mrb[0].mxu0 %v3732
      %v4222 = vpop.f32.mrb[0].mxu0
      %v4223 = vadd.f32 %v3834, %v4222
      %v4224 = vpop.f32.mrb[0].mxu0
      %v4225 = vpop.f32.mrb[0].mxu0
      %v4226 = vadd.f32 %v3834, %v4225
      %v4227 = vpop.f32.mrb[0].mxu0
      %4228 = vmatprep.mubr.bf16.mxu0 %v3738
      %4229 = vmatmul.mubr.bf16.gmra.mrb[0].mxu0 %v3737
      %v4230 = vpop.f32.mrb[0].mxu0
      %v4231 = vadd.f32 %v3834, %v4230
      %v4232 = vpop.f32.mrb[0].mxu0
      %v4233 = vpop.f32.mrb[0].mxu0
      %v4234 = vadd.f32 %v3834, %v4233
      %v4235 = vpop.f32.mrb[0].mxu0
      %4236 = vmatprep.mubr.bf16.mxu0 %v3743
      %4237 = vmatmul.mubr.bf16.gmra.mrb[0].mxu0 %v3742
      %v4238 = vpop.f32.mrb[0].mxu0
      %v4239 = vadd.f32 %v3834, %v4238
      %v4240 = vpop.f32.mrb[0].mxu0
      %v4241 = vpop.f32.mrb[0].mxu0
      %v4242 = vadd.f32 %v3834, %v4241
      %v4243 = vpop.f32.mrb[0].mxu0
      %4244 = vmatprep.mubr.bf16.mxu0 %v3748
      %4245 = vmatmul.mubr.bf16.gmra.mrb[0].mxu0 %v3747
      %v4246 = vpop.f32.mrb[0].mxu0
      %v4247 = vadd.f32 %v3834, %v4246
      %v4248 = vpop.f32.mrb[0].mxu0
      %v4249 = vpop.f32.mrb[0].mxu0
      %v4250 = vadd.f32 %v3834, %v4249
      %v4251 = vpop.f32.mrb[0].mxu0
      %4252 = vmatprep.mubr.bf16.mxu0 %v3753
      %4253 = vmatmul.mubr.bf16.gmra.mrb[0].mxu0 %v3752
      %v4254 = vpop.f32.mrb[0].mxu0
      %v4255 = vadd.f32 %v3834, %v4254
      %v4256 = vpop.f32.mrb[0].mxu0
      %v4257 = vpop.f32.mrb[0].mxu0
      %v4258 = vadd.f32 %v3834, %v4257
      %v4259 = vpop.f32.mrb[0].mxu0
      %4260 = vdwg.mxu0
      %4261 = vmatprep.subr.bf16.mxu0 0
      %4262 = vmatpush1.bf16.msra.mxu0 %v3996
      %4263 = vmatprep.subr.bf16.mxu0 0
      %4264 = vmatpush1.bf16.msra.mxu0 %v3997
      %4265 = vmatprep.subr.bf16.mxu0 0
      %4266 = vmatpush1.bf16.msra.mxu0 %v3998
      %4267 = vmatprep.subr.bf16.mxu0 0
      %4268 = vmatpush1.bf16.msra.mxu0 %v3999
      %4269 = vmatprep.subr.bf16.mxu0 0
      %4270 = vmatpush1.bf16.msra.mxu0 %v4000
      %4271 = vmatprep.subr.bf16.mxu0 0
      %4272 = vmatpush1.bf16.msra.mxu0 %v4001
      %4273 = vmatprep.subr.bf16.mxu0 0
      %4274 = vmatpush1.bf16.msra.mxu0 %v4002
      %4275 = vmatprep.subr.bf16.mxu0 0
      %4276 = vmatpush1.bf16.msra.mxu0 %v4003
      %4277 = vmatprep.subr.bf16.mxu0 0
      %4278 = vmatpush1.bf16.msra.mxu0 %v4004
      %4279 = vmatprep.subr.bf16.mxu0 0
      %4280 = vmatpush1.bf16.msra.mxu0 %v4005
      %4281 = vmatprep.subr.bf16.mxu0 0
      %4282 = vmatpush1.bf16.msra.mxu0 %v4006
      %4283 = vmatprep.subr.bf16.mxu0 0
      %4284 = vmatpush1.bf16.msra.mxu0 %v4007
      %4285 = vmatprep.subr.bf16.mxu0 0
      %4286 = vmatpush1.bf16.msra.mxu0 %v4008
      %4287 = vmatprep.subr.bf16.mxu0 0
      %4288 = vmatpush1.bf16.msra.mxu0 %v4009
      %4289 = vmatprep.subr.bf16.mxu0 0
      %4290 = vmatpush1.bf16.msra.mxu0 %v4010
      %4291 = vmatprep.subr.bf16.mxu0 0
      %4292 = vmatpush1.bf16.msra.mxu0 %v4011
      %4293 = vmatprep.mubr.bf16.mxu0 %v3680
      %4294 = vmatmul.mubr.bf16.gmra.mrb[0].mxu0 %v3679
      %v4295 = vpop.f32.mrb[0].mxu0
      %v4296 = vadd.f32 %v4135, %v4295
      %v4297 = vpop.f32.mrb[0].mxu0
      %v4298 = vpop.f32.mrb[0].mxu0
      %v4299 = vadd.f32 %v4138, %v4298
      %v4300 = vpop.f32.mrb[0].mxu0
      %4301 = vmatprep.mubr.bf16.mxu0 %v3685
      %4302 = vmatmul.mubr.bf16.gmra.mrb[0].mxu0 %v3684
      %v4303 = vpop.f32.mrb[0].mxu0
      %v4304 = vadd.f32 %v4143, %v4303
      %v4305 = vpop.f32.mrb[0].mxu0
      %v4306 = vpop.f32.mrb[0].mxu0
      %v4307 = vadd.f32 %v4146, %v4306
      %v4308 = vpop.f32.mrb[0].mxu0
      %4309 = vmatprep.mubr.bf16.mxu0 %v3690
      %4310 = vmatmul.mubr.bf16.gmra.mrb[0].mxu0 %v3689
      %v4311 = vpop.f32.mrb[0].mxu0
      %v4312 = vadd.f32 %v4151, %v4311
      %v4313 = vpop.f32.mrb[0].mxu0
      %v4314 = vpop.f32.mrb[0].mxu0
      %v4315 = vadd.f32 %v4154, %v4314
      %v4316 = vpop.f32.mrb[0].mxu0
      %4317 = vmatprep.mubr.bf16.mxu0 %v3695
      %4318 = vmatmul.mubr.bf16.gmra.mrb[0].mxu0 %v3694
      %v4319 = vpop.f32.mrb[0].mxu0
      %v4320 = vadd.f32 %v4159, %v4319
      %v4321 = vpop.f32.mrb[0].mxu0
      %v4322 = vpop.f32.mrb[0].mxu0
      %v4323 = vadd.f32 %v4162, %v4322
      %v4324 = vpop.f32.mrb[0].mxu0
      %4325 = vmatprep.mubr.bf16.mxu0 %v3700
      %4326 = vmatmul.mubr.bf16.gmra.mrb[0].mxu0 %v3699
      %v4327 = vpop.f32.mrb[0].mxu0
      %v4328 = vadd.f32 %v4167, %v4327
      %v4329 = vpop.f32.mrb[0].mxu0
      %v4330 = vpop.f32.mrb[0].mxu0
      %v4331 = vadd.f32 %v4170, %v4330
      %v4332 = vpop.f32.mrb[0].mxu0
      %4333 = vmatprep.mubr.bf16.mxu0 %v3705
      %4334 = vmatmul.mubr.bf16.gmra.mrb[0].mxu0 %v3704
      %v4335 = vpop.f32.mrb[0].mxu0
      %v4336 = vadd.f32 %v4175, %v4335
      %v4337 = vpop.f32.mrb[0].mxu0
      %v4338 = vpop.f32.mrb[0].mxu0
      %v4339 = vadd.f32 %v4178, %v4338
      %v4340 = vpop.f32.mrb[0].mxu0
      %4341 = vmatprep.mubr.bf16.mxu0 %v3710
      %4342 = vmatmul.mubr.bf16.gmra.mrb[0].mxu0 %v3709
      %v4343 = vpop.f32.mrb[0].mxu0
      %v4344 = vadd.f32 %v4183, %v4343
      %v4345 = vpop.f32.mrb[0].mxu0
      %v4346 = vpop.f32.mrb[0].mxu0
      %v4347 = vadd.f32 %v4186, %v4346
      %v4348 = vpop.f32.mrb[0].mxu0
      %4349 = vmatprep.mubr.bf16.mxu0 %v3715
      %4350 = vmatmul.mubr.bf16.gmra.mrb[0].mxu0 %v3714
      %v4351 = vpop.f32.mrb[0].mxu0
      %v4352 = vadd.f32 %v4191, %v4351
      %v4353 = vpop.f32.mrb[0].mxu0
      %v4354 = vpop.f32.mrb[0].mxu0
      %v4355 = vadd.f32 %v4194, %v4354
      %v4356 = vpop.f32.mrb[0].mxu0
      %4357 = vmatprep.mubr.bf16.mxu0 %v3720
      %4358 = vmatmul.mubr.bf16.gmra.mrb[0].mxu0 %v3719
      %v4359 = vpop.f32.mrb[0].mxu0
      %v4360 = vadd.f32 %v4199, %v4359
      %v4361 = vpop.f32.mrb[0].mxu0
      %v4362 = vpop.f32.mrb[0].mxu0
      %v4363 = vadd.f32 %v4202, %v4362
      %v4364 = vpop.f32.mrb[0].mxu0
      %4365 = vmatprep.mubr.bf16.mxu0 %v3725
      %4366 = vmatmul.mubr.bf16.gmra.mrb[0].mxu0 %v3724
      %v4367 = vpop.f32.mrb[0].mxu0
      %v4368 = vadd.f32 %v4207, %v4367
      %v4369 = vpop.f32.mrb[0].mxu0
      %v4370 = vpop.f32.mrb[0].mxu0
      %v4371 = vadd.f32 %v4210, %v4370
      %v4372 = vpop.f32.mrb[0].mxu0
      %4373 = vmatprep.mubr.bf16.mxu0 %v3730
      %4374 = vmatmul.mubr.bf16.gmra.mrb[0].mxu0 %v3729
      %v4375 = vpop.f32.mrb[0].mxu0
      %v4376 = vadd.f32 %v4215, %v4375
      %v4377 = vpop.f32.mrb[0].mxu0
      %v4378 = vpop.f32.mrb[0].mxu0
      %v4379 = vadd.f32 %v4218, %v4378
      %v4380 = vpop.f32.mrb[0].mxu0
      %4381 = vmatprep.mubr.bf16.mxu0 %v3735
      %4382 = vmatmul.mubr.bf16.gmra.mrb[0].mxu0 %v3734
      %v4383 = vpop.f32.mrb[0].mxu0
      %v4384 = vadd.f32 %v4223, %v4383
      %v4385 = vpop.f32.mrb[0].mxu0
      %v4386 = vpop.f32.mrb[0].mxu0
      %v4387 = vadd.f32 %v4226, %v4386
      %v4388 = vpop.f32.mrb[0].mxu0
      %4389 = vmatprep.mubr.bf16.mxu0 %v3740
      %4390 = vmatmul.mubr.bf16.gmra.mrb[0].mxu0 %v3739
      %v4391 = vpop.f32.mrb[0].mxu0
      %v4392 = vadd.f32 %v4231, %v4391
      %v4393 = vpop.f32.mrb[0].mxu0
      %v4394 = vpop.f32.mrb[0].mxu0
      %v4395 = vadd.f32 %v4234, %v4394
      %v4396 = vpop.f32.mrb[0].mxu0
      %4397 = vmatprep.mubr.bf16.mxu0 %v3745
      %4398 = vmatmul.mubr.bf16.gmra.mrb[0].mxu0 %v3744
      %v4399 = vpop.f32.mrb[0].mxu0
      %v4400 = vadd.f32 %v4239, %v4399
      %v4401 = vpop.f32.mrb[0].mxu0
      %v4402 = vpop.f32.mrb[0].mxu0
      %v4403 = vadd.f32 %v4242, %v4402
      %v4404 = vpop.f32.mrb[0].mxu0
      %4405 = vmatprep.mubr.bf16.mxu0 %v3750
      %4406 = vmatmul.mubr.bf16.gmra.mrb[0].mxu0 %v3749
      %v4407 = vpop.f32.mrb[0].mxu0
      %v4408 = vadd.f32 %v4247, %v4407
      %v4409 = vpop.f32.mrb[0].mxu0
      %v4410 = vpop.f32.mrb[0].mxu0
      %v4411 = vadd.f32 %v4250, %v4410
      %v4412 = vpop.f32.mrb[0].mxu0
      %4413 = vmatprep.mubr.bf16.mxu0 %v3755
      %4414 = vmatmul.mubr.bf16.gmra.mrb[0].mxu0 %v3754
      %v4415 = vpop.f32.mrb[0].mxu0
      %v4416 = vadd.f32 %v4255, %v4415
      %v4417 = vpop.f32.mrb[0].mxu0
      %v4418 = vpop.f32.mrb[0].mxu0
      %v4419 = vadd.f32 %v4258, %v4418
      %v4420 = vpop.f32.mrb[0].mxu0
      %4421 = vdwg.mxu0
      %4422 = vmatprep.subr.bf16.mxu0 0
      %4423 = vmatpush1.bf16.msra.mxu0 %v4012
      %4424 = vmatprep.subr.bf16.mxu0 0
      %4425 = vmatpush1.bf16.msra.mxu0 %v4013
      %4426 = vmatprep.subr.bf16.mxu0 0
      %4427 = vmatpush1.bf16.msra.mxu0 %v4014
      %4428 = vmatprep.subr.bf16.mxu0 0
      %4429 = vmatpush1.bf16.msra.mxu0 %v4015
      %4430 = vmatprep.subr.bf16.mxu0 0
      %4431 = vmatpush1.bf16.msra.mxu0 0
      %4432 = vmatprep.subr.bf16.mxu0 0
      %4433 = vmatpush1.bf16.msra.mxu0 0
      %4434 = vmatprep.subr.bf16.mxu0 0
      %4435 = vmatpush1.bf16.msra.mxu0 0
      %4436 = vmatprep.subr.bf16.mxu0 0
      %4437 = vmatpush1.bf16.msra.mxu0 0
      %4438 = vmatprep.subr.bf16.mxu0 0
      %4439 = vmatpush1.bf16.msra.mxu0 0
      %4440 = vmatprep.subr.bf16.mxu0 0
      %4441 = vmatpush1.bf16.msra.mxu0 0
      %4442 = vmatprep.subr.bf16.mxu0 0
      %4443 = vmatpush1.bf16.msra.mxu0 0
      %4444 = vmatprep.subr.bf16.mxu0 0
      %4445 = vmatpush1.bf16.msra.mxu0 0
      %4446 = vmatprep.subr.bf16.mxu0 0
      %4447 = vmatpush1.bf16.msra.mxu0 0
      %4448 = vmatprep.subr.bf16.mxu0 0
      %4449 = vmatpush1.bf16.msra.mxu0 0
      %4450 = vmatprep.subr.bf16.mxu0 0
      %4451 = vmatpush1.bf16.msra.mxu0 0
      %4452 = vmatprep.subr.bf16.mxu0 0
      %4453 = vmatpush1.bf16.msra.mxu0 0
      %4454 = vmatprep.mubr.bf16.mxu0 0
      %4455 = vmatmul.mubr.bf16.gmra.mrb[0].mxu0 %v4053
      %v4456 = vpop.f32.mrb[0].mxu0
      %v4457 = vadd.f32 %v4296, %v4456
      %v4458 = vpop.f32.mrb[0].mxu0
      %v4459 = vpop.f32.mrb[0].mxu0
      %v4460 = vadd.f32 %v4299, %v4459
      %v4461 = vpop.f32.mrb[0].mxu0
      %4462 = vmatprep.mubr.bf16.mxu0 0
      %4463 = vmatmul.mubr.bf16.gmra.mrb[0].mxu0 %v4056
      %v4464 = vpop.f32.mrb[0].mxu0
      %v4465 = vadd.f32 %v4304, %v4464
      %v4466 = vpop.f32.mrb[0].mxu0
      %v4467 = vpop.f32.mrb[0].mxu0
      %v4468 = vadd.f32 %v4307, %v4467
      %v4469 = vpop.f32.mrb[0].mxu0
      %4470 = vmatprep.mubr.bf16.mxu0 0
      %4471 = vmatmul.mubr.bf16.gmra.mrb[0].mxu0 %v4059
      %v4472 = vpop.f32.mrb[0].mxu0
      %v4473 = vadd.f32 %v4312, %v4472
      %v4474 = vpop.f32.mrb[0].mxu0
      %v4475 = vpop.f32.mrb[0].mxu0
      %v4476 = vadd.f32 %v4315, %v4475
      %v4477 = vpop.f32.mrb[0].mxu0
      %4478 = vmatprep.mubr.bf16.mxu0 0
      %4479 = vmatmul.mubr.bf16.gmra.mrb[0].mxu0 %v4062
      %v4480 = vpop.f32.mrb[0].mxu0
      %v4481 = vadd.f32 %v4320, %v4480
      %v4482 = vpop.f32.mrb[0].mxu0
      %v4483 = vpop.f32.mrb[0].mxu0
      %v4484 = vadd.f32 %v4323, %v4483
      %v4485 = vpop.f32.mrb[0].mxu0
      %4486 = vmatprep.mubr.bf16.mxu0 0
      %4487 = vmatmul.mubr.bf16.gmra.mrb[0].mxu0 %v4065
      %v4488 = vpop.f32.mrb[0].mxu0
      %v4489 = vadd.f32 %v4328, %v4488
      %v4490 = vpop.f32.mrb[0].mxu0
      %v4491 = vpop.f32.mrb[0].mxu0
      %v4492 = vadd.f32 %v4331, %v4491
      %v4493 = vpop.f32.mrb[0].mxu0
      %4494 = vmatprep.mubr.bf16.mxu0 0
      %4495 = vmatmul.mubr.bf16.gmra.mrb[0].mxu0 %v4068
      %v4496 = vpop.f32.mrb[0].mxu0
      %v4497 = vadd.f32 %v4336, %v4496
      %v4498 = vpop.f32.mrb[0].mxu0
      %v4499 = vpop.f32.mrb[0].mxu0
      %v4500 = vadd.f32 %v4339, %v4499
      %v4501 = vpop.f32.mrb[0].mxu0
      %4502 = vmatprep.mubr.bf16.mxu0 0
      %4503 = vmatmul.mubr.bf16.gmra.mrb[0].mxu0 %v4071
      %v4504 = vpop.f32.mrb[0].mxu0
      %v4505 = vadd.f32 %v4344, %v4504
      %v4506 = vpop.f32.mrb[0].mxu0
      %v4507 = vpop.f32.mrb[0].mxu0
      %v4508 = vadd.f32 %v4347, %v4507
      %v4509 = vpop.f32.mrb[0].mxu0
      %4510 = vmatprep.mubr.bf16.mxu0 0
      %4511 = vmatmul.mubr.bf16.gmra.mrb[0].mxu0 %v4074
      %v4512 = vpop.f32.mrb[0].mxu0
      %v4513 = vadd.f32 %v4352, %v4512
      %v4514 = vpop.f32.mrb[0].mxu0
      %v4515 = vpop.f32.mrb[0].mxu0
      %v4516 = vadd.f32 %v4355, %v4515
      %v4517 = vpop.f32.mrb[0].mxu0
      %4518 = vmatprep.mubr.bf16.mxu0 0
      %4519 = vmatmul.mubr.bf16.gmra.mrb[0].mxu0 %v4077
      %v4520 = vpop.f32.mrb[0].mxu0
      %v4521 = vadd.f32 %v4360, %v4520
      %v4522 = vpop.f32.mrb[0].mxu0
      %v4523 = vpop.f32.mrb[0].mxu0
      %v4524 = vadd.f32 %v4363, %v4523
      %v4525 = vpop.f32.mrb[0].mxu0
      %4526 = vmatprep.mubr.bf16.mxu0 0
      %4527 = vmatmul.mubr.bf16.gmra.mrb[0].mxu0 %v4080
      %v4528 = vpop.f32.mrb[0].mxu0
      %v4529 = vadd.f32 %v4368, %v4528
      %v4530 = vpop.f32.mrb[0].mxu0
      %v4531 = vpop.f32.mrb[0].mxu0
      %v4532 = vadd.f32 %v4371, %v4531
      %v4533 = vpop.f32.mrb[0].mxu0
      %4534 = vmatprep.mubr.bf16.mxu0 0
      %4535 = vmatmul.mubr.bf16.gmra.mrb[0].mxu0 %v4083
      %v4536 = vpop.f32.mrb[0].mxu0
      %v4537 = vadd.f32 %v4376, %v4536
      %v4538 = vpop.f32.mrb[0].mxu0
      %v4539 = vpop.f32.mrb[0].mxu0
      %v4540 = vadd.f32 %v4379, %v4539
      %v4541 = vpop.f32.mrb[0].mxu0
      %4542 = vmatprep.mubr.bf16.mxu0 0
      %4543 = vmatmul.mubr.bf16.gmra.mrb[0].mxu0 %v4086
      %v4544 = vpop.f32.mrb[0].mxu0
      %v4545 = vadd.f32 %v4384, %v4544
      %v4546 = vpop.f32.mrb[0].mxu0
      %v4547 = vpop.f32.mrb[0].mxu0
      %v4548 = vadd.f32 %v4387, %v4547
      %v4549 = vpop.f32.mrb[0].mxu0
      %4550 = vmatprep.mubr.bf16.mxu0 0
      %4551 = vmatmul.mubr.bf16.gmra.mrb[0].mxu0 %v4089
      %v4552 = vpop.f32.mrb[0].mxu0
      %v4553 = vadd.f32 %v4392, %v4552
      %v4554 = vpop.f32.mrb[0].mxu0
      %v4555 = vpop.f32.mrb[0].mxu0
      %v4556 = vadd.f32 %v4395, %v4555
      %v4557 = vpop.f32.mrb[0].mxu0
      %4558 = vmatprep.mubr.bf16.mxu0 0
      %4559 = vmatmul.mubr.bf16.gmra.mrb[0].mxu0 %v4092
      %v4560 = vpop.f32.mrb[0].mxu0
      %v4561 = vadd.f32 %v4400, %v4560
      %v4562 = vpop.f32.mrb[0].mxu0
      %v4563 = vpop.f32.mrb[0].mxu0
      %v4564 = vadd.f32 %v4403, %v4563
      %v4565 = vpop.f32.mrb[0].mxu0
      %4566 = vmatprep.mubr.bf16.mxu0 0
      %4567 = vmatmul.mubr.bf16.gmra.mrb[0].mxu0 %v4095
      %v4568 = vpop.f32.mrb[0].mxu0
      %v4569 = vadd.f32 %v4408, %v4568
      %v4570 = vpop.f32.mrb[0].mxu0
      %v4571 = vpop.f32.mrb[0].mxu0
      %v4572 = vadd.f32 %v4411, %v4571
      %v4573 = vpop.f32.mrb[0].mxu0
      %4574 = vmatprep.mubr.bf16.mxu0 0
      %4575 = vmatmul.mubr.bf16.gmra.mrb[0].mxu0 %v4098
      %v4576 = vpop.f32.mrb[0].mxu0
      %v4577 = vadd.f32 %v4416, %v4576
      %v4578 = vpop.f32.mrb[0].mxu0
      %v4579 = vpop.f32.mrb[0].mxu0
      %v4580 = vadd.f32 %v4419, %v4579
      %v4581 = vpop.f32.mrb[0].mxu0
      %4582 = vdwg.mxu0
      %v4583 = vxor.u32 %v4457, 2147483648
      %v4584 = vxor.u32 %v4460, 2147483648
      %v4585 = vxor.u32 %v4465, 2147483648
      %v4586 = vxor.u32 %v4468, 2147483648
      %v4587 = vxor.u32 %v4473, 2147483648
      %v4588 = vxor.u32 %v4476, 2147483648
      %v4589 = vxor.u32 %v4481, 2147483648
      %v4590 = vxor.u32 %v4484, 2147483648
      %v4591 = vxor.u32 %v4489, 2147483648
      %v4592 = vxor.u32 %v4492, 2147483648
      %v4593 = vxor.u32 %v4497, 2147483648
      %v4594 = vxor.u32 %v4500, 2147483648
      %v4595 = vxor.u32 %v4505, 2147483648
      %v4596 = vxor.u32 %v4508, 2147483648
      %v4597 = vxor.u32 %v4513, 2147483648
      %v4598 = vxor.u32 %v4516, 2147483648
      %v4599 = vxor.u32 %v4521, 2147483648
      %v4600 = vxor.u32 %v4524, 2147483648
      %v4601 = vxor.u32 %v4529, 2147483648
      %v4602 = vxor.u32 %v4532, 2147483648
      %v4603 = vxor.u32 %v4537, 2147483648
      %v4604 = vxor.u32 %v4540, 2147483648
      %v4605 = vxor.u32 %v4545, 2147483648
      %v4606 = vxor.u32 %v4548, 2147483648
      %v4607 = vxor.u32 %v4553, 2147483648
      %v4608 = vxor.u32 %v4556, 2147483648
      %v4609 = vxor.u32 %v4561, 2147483648
      %v4610 = vxor.u32 %v4564, 2147483648
      %v4611 = vxor.u32 %v4569, 2147483648
      %v4612 = vxor.u32 %v4572, 2147483648
      %v4613 = vxor.u32 %v4577, 2147483648
      %v4614 = vxor.u32 %v4580, 2147483648
      %v4615 = vmul.f32 %v4583, 1.442695
      %v4616 = vpow.pop %v4615
      %v4617 = vmul.f32 %v4584, 1.442695
      %v4618 = vpow.pop %v4617
      %v4619 = vmul.f32 %v4585, 1.442695
      %v4620 = vpow.pop %v4619
      %v4621 = vmul.f32 %v4586, 1.442695
      %v4622 = vpow.pop %v4621
      %v4623 = vmul.f32 %v4587, 1.442695
      %v4624 = vpow.pop %v4623
      %v4625 = vmul.f32 %v4588, 1.442695
      %v4626 = vpow.pop %v4625
      %v4627 = vmul.f32 %v4589, 1.442695
      %v4628 = vpow.pop %v4627
      %v4629 = vmul.f32 %v4590, 1.442695
      %v4630 = vpow.pop %v4629
      %v4631 = vmul.f32 %v4591, 1.442695
      %v4632 = vpow.pop %v4631
      %v4633 = vmul.f32 %v4592, 1.442695
      %v4634 = vpow.pop %v4633
      %v4635 = vmul.f32 %v4593, 1.442695
      %v4636 = vpow.pop %v4635
      %v4637 = vmul.f32 %v4594, 1.442695
      %v4638 = vpow.pop %v4637
      %v4639 = vmul.f32 %v4595, 1.442695
      %v4640 = vpow.pop %v4639
      %v4641 = vmul.f32 %v4596, 1.442695
      %v4642 = vpow.pop %v4641
      %v4643 = vmul.f32 %v4597, 1.442695
      %v4644 = vpow.pop %v4643
      %v4645 = vmul.f32 %v4598, 1.442695
      %v4646 = vpow.pop %v4645
      %v4647 = vmul.f32 %v4599, 1.442695
      %v4648 = vpow.pop %v4647
      %v4649 = vmul.f32 %v4600, 1.442695
      %v4650 = vpow.pop %v4649
      %v4651 = vmul.f32 %v4601, 1.442695
      %v4652 = vpow.pop %v4651
      %v4653 = vmul.f32 %v4602, 1.442695
      %v4654 = vpow.pop %v4653
      %v4655 = vmul.f32 %v4603, 1.442695
      %v4656 = vpow.pop %v4655
      %v4657 = vmul.f32 %v4604, 1.442695
      %v4658 = vpow.pop %v4657
      %v4659 = vmul.f32 %v4605, 1.442695
      %v4660 = vpow.pop %v4659
      %v4661 = vmul.f32 %v4606, 1.442695
      %v4662 = vpow.pop %v4661
      %v4663 = vmul.f32 %v4607, 1.442695
      %v4664 = vpow.pop %v4663
      %v4665 = vmul.f32 %v4608, 1.442695
      %v4666 = vpow.pop %v4665
      %v4667 = vmul.f32 %v4609, 1.442695
      %v4668 = vpow.pop %v4667
      %v4669 = vmul.f32 %v4610, 1.442695
      %v4670 = vpow.pop %v4669
      %v4671 = vmul.f32 %v4611, 1.442695
      %v4672 = vpow.pop %v4671
      %v4673 = vmul.f32 %v4612, 1.442695
      %v4674 = vpow.pop %v4673
      %v4675 = vmul.f32 %v4613, 1.442695
      %v4676 = vpow.pop %v4675
      %v4677 = vmul.f32 %v4614, 1.442695
      %v4678 = vpow.pop %v4677
      %v4679 = vadd.f32 %v4616, 1.0
      %v4680 = vadd.f32 %v4618, 1.0
      %v4681 = vadd.f32 %v4620, 1.0
      %v4682 = vadd.f32 %v4622, 1.0
      %v4683 = vadd.f32 %v4624, 1.0
      %v4684 = vadd.f32 %v4626, 1.0
      %v4685 = vadd.f32 %v4628, 1.0
      %v4686 = vadd.f32 %v4630, 1.0
      %v4687 = vadd.f32 %v4632, 1.0
      %v4688 = vadd.f32 %v4634, 1.0
      %v4689 = vadd.f32 %v4636, 1.0
      %v4690 = vadd.f32 %v4638, 1.0
      %v4691 = vadd.f32 %v4640, 1.0
      %v4692 = vadd.f32 %v4642, 1.0
      %v4693 = vadd.f32 %v4644, 1.0
      %v4694 = vadd.f32 %v4646, 1.0
      %v4695 = vadd.f32 %v4648, 1.0
      %v4696 = vadd.f32 %v4650, 1.0
      %v4697 = vadd.f32 %v4652, 1.0
      %v4698 = vadd.f32 %v4654, 1.0
      %v4699 = vadd.f32 %v4656, 1.0
      %v4700 = vadd.f32 %v4658, 1.0
      %v4701 = vadd.f32 %v4660, 1.0
      %v4702 = vadd.f32 %v4662, 1.0
      %v4703 = vadd.f32 %v4664, 1.0
      %v4704 = vadd.f32 %v4666, 1.0
      %v4705 = vadd.f32 %v4668, 1.0
      %v4706 = vadd.f32 %v4670, 1.0
      %v4707 = vadd.f32 %v4672, 1.0
      %v4708 = vadd.f32 %v4674, 1.0
      %v4709 = vadd.f32 %v4676, 1.0
      %v4710 = vadd.f32 %v4678, 1.0
      %v4711 = vrcp.pop %v4679
      %v4712 = vmul.f32 1.0, %v4711
      %v4713 = vrcp.pop %v4680
      %v4714 = vmul.f32 1.0, %v4713
      %v4715 = vrcp.pop %v4681
      %v4716 = vmul.f32 1.0, %v4715
      %v4717 = vrcp.pop %v4682
      %v4718 = vmul.f32 1.0, %v4717
      %v4719 = vrcp.pop %v4683
      %v4720 = vmul.f32 1.0, %v4719
      %v4721 = vrcp.pop %v4684
      %v4722 = vmul.f32 1.0, %v4721
      %v4723 = vrcp.pop %v4685
      %v4724 = vmul.f32 1.0, %v4723
      %v4725 = vrcp.pop %v4686
      %v4726 = vmul.f32 1.0, %v4725
      %v4727 = vrcp.pop %v4687
      %v4728 = vmul.f32 1.0, %v4727
      %v4729 = vrcp.pop %v4688
      %v4730 = vmul.f32 1.0, %v4729
      %v4731 = vrcp.pop %v4689
      %v4732 = vmul.f32 1.0, %v4731
      %v4733 = vrcp.pop %v4690
      %v4734 = vmul.f32 1.0, %v4733
      %v4735 = vrcp.pop %v4691
      %v4736 = vmul.f32 1.0, %v4735
      %v4737 = vrcp.pop %v4692
      %v4738 = vmul.f32 1.0, %v4737
      %v4739 = vrcp.pop %v4693
      %v4740 = vmul.f32 1.0, %v4739
      %v4741 = vrcp.pop %v4694
      %v4742 = vmul.f32 1.0, %v4741
      %v4743 = vrcp.pop %v4695
      %v4744 = vmul.f32 1.0, %v4743
      %v4745 = vrcp.pop %v4696
      %v4746 = vmul.f32 1.0, %v4745
      %v4747 = vrcp.pop %v4697
      %v4748 = vmul.f32 1.0, %v4747
      %v4749 = vrcp.pop %v4698
      %v4750 = vmul.f32 1.0, %v4749
      %v4751 = vrcp.pop %v4699
      %v4752 = vmul.f32 1.0, %v4751
      %v4753 = vrcp.pop %v4700
      %v4754 = vmul.f32 1.0, %v4753
      %v4755 = vrcp.pop %v4701
      %v4756 = vmul.f32 1.0, %v4755
      %v4757 = vrcp.pop %v4702
      %v4758 = vmul.f32 1.0, %v4757
      %v4759 = vrcp.pop %v4703
      %v4760 = vmul.f32 1.0, %v4759
      %v4761 = vrcp.pop %v4704
      %v4762 = vmul.f32 1.0, %v4761
      %v4763 = vrcp.pop %v4705
      %v4764 = vmul.f32 1.0, %v4763
      %v4765 = vrcp.pop %v4706
      %v4766 = vmul.f32 1.0, %v4765
      %v4767 = vrcp.pop %v4707
      %v4768 = vmul.f32 1.0, %v4767
      %v4769 = vrcp.pop %v4708
      %v4770 = vmul.f32 1.0, %v4769
      %v4771 = vrcp.pop %v4709
      %v4772 = vmul.f32 1.0, %v4771
      %v4773 = vrcp.pop %v4710
      %v4774 = vmul.f32 1.0, %v4773
      %4807 = vrot.lane.b32.xlu0 %v4457, 64
      %v4808 = vpop.permute.xlu0 %4807
      %4809 = vrot.lane.b32.xlu0 %v4460, 64
      %v4810 = vpop.permute.xlu0 %4809
      %4811 = vrot.lane.b32.xlu0 %v4465, 64
      %v4812 = vpop.permute.xlu0 %4811
      %4813 = vrot.lane.b32.xlu0 %v4468, 64
      %v4814 = vpop.permute.xlu0 %4813
      %4815 = vrot.lane.b32.xlu0 %v4473, 64
      %v4816 = vpop.permute.xlu0 %4815
      %4817 = vrot.lane.b32.xlu0 %v4476, 64
      %v4818 = vpop.permute.xlu0 %4817
      %4819 = vrot.lane.b32.xlu0 %v4481, 64
      %v4820 = vpop.permute.xlu0 %4819
      %4821 = vrot.lane.b32.xlu0 %v4484, 64
      %v4822 = vpop.permute.xlu0 %4821
      %4823 = vrot.lane.b32.xlu0 %v4489, 64
      %v4824 = vpop.permute.xlu0 %4823
      %4825 = vrot.lane.b32.xlu0 %v4492, 64
      %v4826 = vpop.permute.xlu0 %4825
      %4827 = vrot.lane.b32.xlu0 %v4497, 64
      %v4828 = vpop.permute.xlu0 %4827
      %4829 = vrot.lane.b32.xlu0 %v4500, 64
      %v4830 = vpop.permute.xlu0 %4829
      %4831 = vrot.lane.b32.xlu0 %v4505, 64
      %v4832 = vpop.permute.xlu0 %4831
      %4833 = vrot.lane.b32.xlu0 %v4508, 64
      %v4834 = vpop.permute.xlu0 %4833
      %4835 = vrot.lane.b32.xlu0 %v4513, 64
      %v4836 = vpop.permute.xlu0 %4835
      %4837 = vrot.lane.b32.xlu0 %v4516, 64
      %v4838 = vpop.permute.xlu0 %4837
      %4839 = vrot.lane.b32.xlu0 %v4521, 64
      %v4840 = vpop.permute.xlu0 %4839
      %4841 = vrot.lane.b32.xlu0 %v4524, 64
      %v4842 = vpop.permute.xlu0 %4841
      %4843 = vrot.lane.b32.xlu0 %v4529, 64
      %v4844 = vpop.permute.xlu0 %4843
      %4845 = vrot.lane.b32.xlu0 %v4532, 64
      %v4846 = vpop.permute.xlu0 %4845
      %4847 = vrot.lane.b32.xlu0 %v4537, 64
      %v4848 = vpop.permute.xlu0 %4847
      %4849 = vrot.lane.b32.xlu0 %v4540, 64
      %v4850 = vpop.permute.xlu0 %4849
      %4851 = vrot.lane.b32.xlu0 %v4545, 64
      %v4852 = vpop.permute.xlu0 %4851
      %4853 = vrot.lane.b32.xlu0 %v4548, 64
      %v4854 = vpop.permute.xlu0 %4853
      %4855 = vrot.lane.b32.xlu0 %v4553, 64
      %v4856 = vpop.permute.xlu0 %4855
      %4857 = vrot.lane.b32.xlu0 %v4556, 64
      %v4858 = vpop.permute.xlu0 %4857
      %4859 = vrot.lane.b32.xlu0 %v4561, 64
      %v4860 = vpop.permute.xlu0 %4859
      %4861 = vrot.lane.b32.xlu0 %v4564, 64
      %v4862 = vpop.permute.xlu0 %4861
      %4863 = vrot.lane.b32.xlu0 %v4569, 64
      %v4864 = vpop.permute.xlu0 %4863
      %4865 = vrot.lane.b32.xlu0 %v4572, 64
      %v4866 = vpop.permute.xlu0 %4865
      %4867 = vrot.lane.b32.xlu0 %v4577, 64
      %v4868 = vpop.permute.xlu0 %4867
      %4869 = vrot.lane.b32.xlu0 %v4580, 64
      %v4870 = vpop.permute.xlu0 %4869
      %v4903 = vmul.f32 %v4712, %v4808
      %v4904 = vmul.f32 %v4714, %v4810
      %v4905 = vmul.f32 %v4716, %v4812
      %v4906 = vmul.f32 %v4718, %v4814
      %v4907 = vmul.f32 %v4720, %v4816
      %v4908 = vmul.f32 %v4722, %v4818
      %v4909 = vmul.f32 %v4724, %v4820
      %v4910 = vmul.f32 %v4726, %v4822
      %v4911 = vmul.f32 %v4728, %v4824
      %v4912 = vmul.f32 %v4730, %v4826
      %v4913 = vmul.f32 %v4732, %v4828
      %v4914 = vmul.f32 %v4734, %v4830
      %v4915 = vmul.f32 %v4736, %v4832
      %v4916 = vmul.f32 %v4738, %v4834
      %v4917 = vmul.f32 %v4740, %v4836
      %v4918 = vmul.f32 %v4742, %v4838
      %v4919 = vmul.f32 %v4744, %v4840
      %v4920 = vmul.f32 %v4746, %v4842
      %v4921 = vmul.f32 %v4748, %v4844
      %v4922 = vmul.f32 %v4750, %v4846
      %v4923 = vmul.f32 %v4752, %v4848
      %v4924 = vmul.f32 %v4754, %v4850
      %v4925 = vmul.f32 %v4756, %v4852
      %v4926 = vmul.f32 %v4758, %v4854
      %v4927 = vmul.f32 %v4760, %v4856
      %v4928 = vmul.f32 %v4762, %v4858
      %v4929 = vmul.f32 %v4764, %v4860
      %v4930 = vmul.f32 %v4766, %v4862
      %v4931 = vmul.f32 %v4768, %v4864
      %v4932 = vmul.f32 %v4770, %v4866
      %v4933 = vmul.f32 %v4772, %v4868
      %v4934 = vmul.f32 %v4774, %v4870
      %4967 = vrot.lane.b32.xlu0 %v4903, 32
      %v4968 = vpop.permute.xlu0 %4967
      %4969 = vrot.lane.b32.xlu0 %v4904, 32
      %v4970 = vpop.permute.xlu0 %4969
      %4971 = vrot.lane.b32.xlu0 %v4905, 32
      %v4972 = vpop.permute.xlu0 %4971
      %4973 = vrot.lane.b32.xlu0 %v4906, 32
      %v4974 = vpop.permute.xlu0 %4973
      %4975 = vrot.lane.b32.xlu0 %v4907, 32
      %v4976 = vpop.permute.xlu0 %4975
      %4977 = vrot.lane.b32.xlu0 %v4908, 32
      %v4978 = vpop.permute.xlu0 %4977
      %4979 = vrot.lane.b32.xlu0 %v4909, 32
      %v4980 = vpop.permute.xlu0 %4979
      %4981 = vrot.lane.b32.xlu0 %v4910, 32
      %v4982 = vpop.permute.xlu0 %4981
      %4983 = vrot.lane.b32.xlu0 %v4911, 32
      %v4984 = vpop.permute.xlu0 %4983
      %4985 = vrot.lane.b32.xlu0 %v4912, 32
      %v4986 = vpop.permute.xlu0 %4985
      %4987 = vrot.lane.b32.xlu0 %v4913, 32
      %v4988 = vpop.permute.xlu0 %4987
      %4989 = vrot.lane.b32.xlu0 %v4914, 32
      %v4990 = vpop.permute.xlu0 %4989
      %4991 = vrot.lane.b32.xlu0 %v4915, 32
      %v4992 = vpop.permute.xlu0 %4991
      %4993 = vrot.lane.b32.xlu0 %v4916, 32
      %v4994 = vpop.permute.xlu0 %4993
      %4995 = vrot.lane.b32.xlu0 %v4917, 32
      %v4996 = vpop.permute.xlu0 %4995
      %4997 = vrot.lane.b32.xlu0 %v4918, 32
      %v4998 = vpop.permute.xlu0 %4997
      %4999 = vrot.lane.b32.xlu0 %v4919, 32
      %v5000 = vpop.permute.xlu0 %4999
      %5001 = vrot.lane.b32.xlu0 %v4920, 32
      %v5002 = vpop.permute.xlu0 %5001
      %5003 = vrot.lane.b32.xlu0 %v4921, 32
      %v5004 = vpop.permute.xlu0 %5003
      %5005 = vrot.lane.b32.xlu0 %v4922, 32
      %v5006 = vpop.permute.xlu0 %5005
      %5007 = vrot.lane.b32.xlu0 %v4923, 32
      %v5008 = vpop.permute.xlu0 %5007
      %5009 = vrot.lane.b32.xlu0 %v4924, 32
      %v5010 = vpop.permute.xlu0 %5009
      %5011 = vrot.lane.b32.xlu0 %v4925, 32
      %v5012 = vpop.permute.xlu0 %5011
      %5013 = vrot.lane.b32.xlu0 %v4926, 32
      %v5014 = vpop.permute.xlu0 %5013
      %5015 = vrot.lane.b32.xlu0 %v4927, 32
      %v5016 = vpop.permute.xlu0 %5015
      %5017 = vrot.lane.b32.xlu0 %v4928, 32
      %v5018 = vpop.permute.xlu0 %5017
      %5019 = vrot.lane.b32.xlu0 %v4929, 32
      %v5020 = vpop.permute.xlu0 %5019
      %5021 = vrot.lane.b32.xlu0 %v4930, 32
      %v5022 = vpop.permute.xlu0 %5021
      %5023 = vrot.lane.b32.xlu0 %v4931, 32
      %v5024 = vpop.permute.xlu0 %5023
      %5025 = vrot.lane.b32.xlu0 %v4932, 32
      %v5026 = vpop.permute.xlu0 %5025
      %5027 = vrot.lane.b32.xlu0 %v4933, 32
      %v5028 = vpop.permute.xlu0 %5027
      %5029 = vrot.lane.b32.xlu0 %v4934, 32
      %v5030 = vpop.permute.xlu0 %5029
      %v5063 = vadd.f32 %v4457, %v4968
      %v5064 = vadd.f32 %v4460, %v4970
      %v5065 = vadd.f32 %v4465, %v4972
      %v5066 = vadd.f32 %v4468, %v4974
      %v5067 = vadd.f32 %v4473, %v4976
      %v5068 = vadd.f32 %v4476, %v4978
      %v5069 = vadd.f32 %v4481, %v4980
      %v5070 = vadd.f32 %v4484, %v4982
      %v5071 = vadd.f32 %v4489, %v4984
      %v5072 = vadd.f32 %v4492, %v4986
      %v5073 = vadd.f32 %v4497, %v4988
      %v5074 = vadd.f32 %v4500, %v4990
      %v5075 = vadd.f32 %v4505, %v4992
      %v5076 = vadd.f32 %v4508, %v4994
      %v5077 = vadd.f32 %v4513, %v4996
      %v5078 = vadd.f32 %v4516, %v4998
      %v5079 = vadd.f32 %v4521, %v5000
      %v5080 = vadd.f32 %v4524, %v5002
      %v5081 = vadd.f32 %v4529, %v5004
      %v5082 = vadd.f32 %v4532, %v5006
      %v5083 = vadd.f32 %v4537, %v5008
      %v5084 = vadd.f32 %v4540, %v5010
      %v5085 = vadd.f32 %v4545, %v5012
      %v5086 = vadd.f32 %v4548, %v5014
      %v5087 = vadd.f32 %v4553, %v5016
      %v5088 = vadd.f32 %v4556, %v5018
      %v5089 = vadd.f32 %v4561, %v5020
      %v5090 = vadd.f32 %v4564, %v5022
      %v5091 = vadd.f32 %v4569, %v5024
      %v5092 = vadd.f32 %v4572, %v5026
      %v5093 = vadd.f32 %v4577, %v5028
      %v5094 = vadd.f32 %v4580, %v5030
      %v5095 = vtanh.pop %v5063
      %v5096 = vtanh.pop %v5064
      %v5097 = vtanh.pop %v5065
      %v5098 = vtanh.pop %v5066
      %v5099 = vtanh.pop %v5067
      %v5100 = vtanh.pop %v5068
      %v5101 = vtanh.pop %v5069
      %v5102 = vtanh.pop %v5070
      %v5103 = vtanh.pop %v5071
      %v5104 = vtanh.pop %v5072
      %v5105 = vtanh.pop %v5073
      %v5106 = vtanh.pop %v5074
      %v5107 = vtanh.pop %v5075
      %v5108 = vtanh.pop %v5076
      %v5109 = vtanh.pop %v5077
      %v5110 = vtanh.pop %v5078
      %v5111 = vtanh.pop %v5079
      %v5112 = vtanh.pop %v5080
      %v5113 = vtanh.pop %v5081
      %v5114 = vtanh.pop %v5082
      %v5115 = vtanh.pop %v5083
      %v5116 = vtanh.pop %v5084
      %v5117 = vtanh.pop %v5085
      %v5118 = vtanh.pop %v5086
      %v5119 = vtanh.pop %v5087
      %v5120 = vtanh.pop %v5088
      %v5121 = vtanh.pop %v5089
      %v5122 = vtanh.pop %v5090
      %v5123 = vtanh.pop %v5091
      %v5124 = vtanh.pop %v5092
      %v5125 = vtanh.pop %v5093
      %v5126 = vtanh.pop %v5094
      %v5127 = vsub.f32 1.0, %v4712
      %v5128 = vsub.f32 1.0, %v4714
      %v5129 = vsub.f32 1.0, %v4716
      %v5130 = vsub.f32 1.0, %v4718
      %v5131 = vsub.f32 1.0, %v4720
      %v5132 = vsub.f32 1.0, %v4722
      %v5133 = vsub.f32 1.0, %v4724
      %v5134 = vsub.f32 1.0, %v4726
      %v5135 = vsub.f32 1.0, %v4728
      %v5136 = vsub.f32 1.0, %v4730
      %v5137 = vsub.f32 1.0, %v4732
      %v5138 = vsub.f32 1.0, %v4734
      %v5139 = vsub.f32 1.0, %v4736
      %v5140 = vsub.f32 1.0, %v4738
      %v5141 = vsub.f32 1.0, %v4740
      %v5142 = vsub.f32 1.0, %v4742
      %v5143 = vsub.f32 1.0, %v4744
      %v5144 = vsub.f32 1.0, %v4746
      %v5145 = vsub.f32 1.0, %v4748
      %v5146 = vsub.f32 1.0, %v4750
      %v5147 = vsub.f32 1.0, %v4752
      %v5148 = vsub.f32 1.0, %v4754
      %v5149 = vsub.f32 1.0, %v4756
      %v5150 = vsub.f32 1.0, %v4758
      %v5151 = vsub.f32 1.0, %v4760
      %v5152 = vsub.f32 1.0, %v4762
      %v5153 = vsub.f32 1.0, %v4764
      %v5154 = vsub.f32 1.0, %v4766
      %v5155 = vsub.f32 1.0, %v4768
      %v5156 = vsub.f32 1.0, %v4770
      %v5157 = vsub.f32 1.0, %v4772
      %v5158 = vsub.f32 1.0, %v4774
      %5191 = vrot.lane.b32.xlu0 %v5095, 64
      %v5192 = vpop.permute.xlu0 %5191
      %5193 = vrot.lane.b32.xlu0 %v5096, 64
      %v5194 = vpop.permute.xlu0 %5193
      %5195 = vrot.lane.b32.xlu0 %v5097, 64
      %v5196 = vpop.permute.xlu0 %5195
      %5197 = vrot.lane.b32.xlu0 %v5098, 64
      %v5198 = vpop.permute.xlu0 %5197
      %5199 = vrot.lane.b32.xlu0 %v5099, 64
      %v5200 = vpop.permute.xlu0 %5199
      %5201 = vrot.lane.b32.xlu0 %v5100, 64
      %v5202 = vpop.permute.xlu0 %5201
      %5203 = vrot.lane.b32.xlu0 %v5101, 64
      %v5204 = vpop.permute.xlu0 %5203
      %5205 = vrot.lane.b32.xlu0 %v5102, 64
      %v5206 = vpop.permute.xlu0 %5205
      %5207 = vrot.lane.b32.xlu0 %v5103, 64
      %v5208 = vpop.permute.xlu0 %5207
      %5209 = vrot.lane.b32.xlu0 %v5104, 64
      %v5210 = vpop.permute.xlu0 %5209
      %5211 = vrot.lane.b32.xlu0 %v5105, 64
      %v5212 = vpop.permute.xlu0 %5211
      %5213 = vrot.lane.b32.xlu0 %v5106, 64
      %v5214 = vpop.permute.xlu0 %5213
      %5215 = vrot.lane.b32.xlu0 %v5107, 64
      %v5216 = vpop.permute.xlu0 %5215
      %5217 = vrot.lane.b32.xlu0 %v5108, 64
      %v5218 = vpop.permute.xlu0 %5217
      %5219 = vrot.lane.b32.xlu0 %v5109, 64
      %v5220 = vpop.permute.xlu0 %5219
      %5221 = vrot.lane.b32.xlu0 %v5110, 64
      %v5222 = vpop.permute.xlu0 %5221
      %5223 = vrot.lane.b32.xlu0 %v5111, 64
      %v5224 = vpop.permute.xlu0 %5223
      %5225 = vrot.lane.b32.xlu0 %v5112, 64
      %v5226 = vpop.permute.xlu0 %5225
      %5227 = vrot.lane.b32.xlu0 %v5113, 64
      %v5228 = vpop.permute.xlu0 %5227
      %5229 = vrot.lane.b32.xlu0 %v5114, 64
      %v5230 = vpop.permute.xlu0 %5229
      %5231 = vrot.lane.b32.xlu0 %v5115, 64
      %v5232 = vpop.permute.xlu0 %5231
      %5233 = vrot.lane.b32.xlu0 %v5116, 64
      %v5234 = vpop.permute.xlu0 %5233
      %5235 = vrot.lane.b32.xlu0 %v5117, 64
      %v5236 = vpop.permute.xlu0 %5235
      %5237 = vrot.lane.b32.xlu0 %v5118, 64
      %v5238 = vpop.permute.xlu0 %5237
      %5239 = vrot.lane.b32.xlu0 %v5119, 64
      %v5240 = vpop.permute.xlu0 %5239
      %5241 = vrot.lane.b32.xlu0 %v5120, 64
      %v5242 = vpop.permute.xlu0 %5241
      %5243 = vrot.lane.b32.xlu0 %v5121, 64
      %v5244 = vpop.permute.xlu0 %5243
      %5245 = vrot.lane.b32.xlu0 %v5122, 64
      %v5246 = vpop.permute.xlu0 %5245
      %5247 = vrot.lane.b32.xlu0 %v5123, 64
      %v5248 = vpop.permute.xlu0 %5247
      %5249 = vrot.lane.b32.xlu0 %v5124, 64
      %v5250 = vpop.permute.xlu0 %5249
      %5251 = vrot.lane.b32.xlu0 %v5125, 64
      %v5252 = vpop.permute.xlu0 %5251
      %5253 = vrot.lane.b32.xlu0 %v5126, 64
      %v5254 = vpop.permute.xlu0 %5253
      %v5287 = vmul.f32 %v5127, %v5192
      %v5288 = vmul.f32 %v5128, %v5194
      %v5289 = vmul.f32 %v5129, %v5196
      %v5290 = vmul.f32 %v5130, %v5198
      %v5291 = vmul.f32 %v5131, %v5200
      %v5292 = vmul.f32 %v5132, %v5202
      %v5293 = vmul.f32 %v5133, %v5204
      %v5294 = vmul.f32 %v5134, %v5206
      %v5295 = vmul.f32 %v5135, %v5208
      %v5296 = vmul.f32 %v5136, %v5210
      %v5297 = vmul.f32 %v5137, %v5212
      %v5298 = vmul.f32 %v5138, %v5214
      %v5299 = vmul.f32 %v5139, %v5216
      %v5300 = vmul.f32 %v5140, %v5218
      %v5301 = vmul.f32 %v5141, %v5220
      %v5302 = vmul.f32 %v5142, %v5222
      %v5303 = vmul.f32 %v5143, %v5224
      %v5304 = vmul.f32 %v5144, %v5226
      %v5305 = vmul.f32 %v5145, %v5228
      %v5306 = vmul.f32 %v5146, %v5230
      %v5307 = vmul.f32 %v5147, %v5232
      %v5308 = vmul.f32 %v5148, %v5234
      %v5309 = vmul.f32 %v5149, %v5236
      %v5310 = vmul.f32 %v5150, %v5238
      %v5311 = vmul.f32 %v5151, %v5240
      %v5312 = vmul.f32 %v5152, %v5242
      %v5313 = vmul.f32 %v5153, %v5244
      %v5314 = vmul.f32 %v5154, %v5246
      %v5315 = vmul.f32 %v5155, %v5248
      %v5316 = vmul.f32 %v5156, %v5250
      %v5317 = vmul.f32 %v5157, %v5252
      %v5318 = vmul.f32 %v5158, %v5254
      %v5319 = vmul.f32 %v4712, %v2448
      %v5320 = vmul.f32 %v4714, %v2449
      %v5321 = vmul.f32 %v4716, %v2450
      %v5322 = vmul.f32 %v4718, %v2451
      %v5323 = vmul.f32 %v4720, %v2452
      %v5324 = vmul.f32 %v4722, %v2453
      %v5325 = vmul.f32 %v4724, %v2454
      %v5326 = vmul.f32 %v4726, %v2455
      %v5327 = vmul.f32 %v4728, %v2456
      %v5328 = vmul.f32 %v4730, %v2457
      %v5329 = vmul.f32 %v4732, %v2458
      %v5330 = vmul.f32 %v4734, %v2459
      %v5331 = vmul.f32 %v4736, %v2460
      %v5332 = vmul.f32 %v4738, %v2461
      %v5333 = vmul.f32 %v4740, %v2462
      %v5334 = vmul.f32 %v4742, %v2463
      %v5335 = vmul.f32 %v4744, %v2464
      %v5336 = vmul.f32 %v4746, %v2465
      %v5337 = vmul.f32 %v4748, %v2466
      %v5338 = vmul.f32 %v4750, %v2467
      %v5339 = vmul.f32 %v4752, %v2468
      %v5340 = vmul.f32 %v4754, %v2469
      %v5341 = vmul.f32 %v4756, %v2470
      %v5342 = vmul.f32 %v4758, %v2471
      %v5343 = vmul.f32 %v4760, %v2472
      %v5344 = vmul.f32 %v4762, %v2473
      %v5345 = vmul.f32 %v4764, %v2474
      %v5346 = vmul.f32 %v4766, %v2475
      %v5347 = vmul.f32 %v4768, %v2476
      %v5348 = vmul.f32 %v4770, %v2477
      %v5349 = vmul.f32 %v4772, %v2478
      %v5350 = vmul.f32 %v4774, %v2479
      %v5351 = vadd.f32 %v5287, %v5319
      %v5352 = vadd.f32 %v5288, %v5320
      %v5353 = vadd.f32 %v5289, %v5321
      %v5354 = vadd.f32 %v5290, %v5322
      %v5355 = vadd.f32 %v5291, %v5323
      %v5356 = vadd.f32 %v5292, %v5324
      %v5357 = vadd.f32 %v5293, %v5325
      %v5358 = vadd.f32 %v5294, %v5326
      %v5359 = vadd.f32 %v5295, %v5327
      %v5360 = vadd.f32 %v5296, %v5328
      %v5361 = vadd.f32 %v5297, %v5329
      %v5362 = vadd.f32 %v5298, %v5330
      %v5363 = vadd.f32 %v5299, %v5331
      %v5364 = vadd.f32 %v5300, %v5332
      %v5365 = vadd.f32 %v5301, %v5333
      %v5366 = vadd.f32 %v5302, %v5334
      %v5367 = vadd.f32 %v5303, %v5335
      %v5368 = vadd.f32 %v5304, %v5336
      %v5369 = vadd.f32 %v5305, %v5337
      %v5370 = vadd.f32 %v5306, %v5338
      %v5371 = vadd.f32 %v5307, %v5339
      %v5372 = vadd.f32 %v5308, %v5340
      %v5373 = vadd.f32 %v5309, %v5341
      %v5374 = vadd.f32 %v5310, %v5342
      %v5375 = vadd.f32 %v5311, %v5343
      %v5376 = vadd.f32 %v5312, %v5344
      %v5377 = vadd.f32 %v5313, %v5345
      %v5378 = vadd.f32 %v5314, %v5346
      %v5379 = vadd.f32 %v5315, %v5347
      %v5380 = vadd.f32 %v5316, %v5348
      %v5381 = vadd.f32 %v5317, %v5349
      %v5382 = vadd.f32 %v5318, %v5350
      %5383 = vst.msk [vmem:[%s325] sm:$0xff] %vm1555, %v5351
      %5384 = vst.msk [vmem:[%s325 + $0x8] sm:$0xff] %vm1555, %v5352
      %5385 = vst.msk [vmem:[%s325 + $0x10] sm:$0xff] %vm1555, %v5353
      %5386 = vst.msk [vmem:[%s325 + $0x18] sm:$0xff] %vm1555, %v5354
      %5387 = vst.msk [vmem:[%s325 + $0x20] sm:$0xff] %vm1555, %v5355
      %5388 = vst.msk [vmem:[%s325 + $0x28] sm:$0xff] %vm1555, %v5356
      %5389 = vst.msk [vmem:[%s325 + $0x30] sm:$0xff] %vm1555, %v5357
      %5390 = vst.msk [vmem:[%s325 + $0x38] sm:$0xff] %vm1555, %v5358
      %5391 = vst.msk [vmem:[%s325 + $0x40] sm:$0xff] %vm1555, %v5359
      %5392 = vst.msk [vmem:[%s325 + $0x48] sm:$0xff] %vm1555, %v5360
      %5393 = vst.msk [vmem:[%s325 + $0x50] sm:$0xff] %vm1555, %v5361
      %5394 = vst.msk [vmem:[%s325 + $0x58] sm:$0xff] %vm1555, %v5362
      %5395 = vst.msk [vmem:[%s325 + $0x60] sm:$0xff] %vm1555, %v5363
      %5396 = vst.msk [vmem:[%s325 + $0x68] sm:$0xff] %vm1555, %v5364
      %5397 = vst.msk [vmem:[%s325 + $0x70] sm:$0xff] %vm1555, %v5365
      %5398 = vst.msk [vmem:[%s325 + $0x78] sm:$0xff] %vm1555, %v5366
      %5399 = vst.msk [vmem:[%s325 + $0x80] sm:$0xff] %vm1555, %v5367
      %5400 = vst.msk [vmem:[%s325 + $0x88] sm:$0xff] %vm1555, %v5368
      %5401 = vst.msk [vmem:[%s325 + $0x90] sm:$0xff] %vm1555, %v5369
      %5402 = vst.msk [vmem:[%s325 + $0x98] sm:$0xff] %vm1555, %v5370
      %5403 = vst.msk [vmem:[%s325 + $0xa0] sm:$0xff] %vm1555, %v5371
      %5404 = vst.msk [vmem:[%s325 + $0xa8] sm:$0xff] %vm1555, %v5372
      %5405 = vst.msk [vmem:[%s325 + $0xb0] sm:$0xff] %vm1555, %v5373
      %5406 = vst.msk [vmem:[%s325 + $0xb8] sm:$0xff] %vm1555, %v5374
      %5407 = vst.msk [vmem:[%s325 + $0xc0] sm:$0xff] %vm1555, %v5375
      %5408 = vst.msk [vmem:[%s325 + $0xc8] sm:$0xff] %vm1555, %v5376
      %5409 = vst.msk [vmem:[%s325 + $0xd0] sm:$0xff] %vm1555, %v5377
      %5410 = vst.msk [vmem:[%s325 + $0xd8] sm:$0xff] %vm1555, %v5378
      %5411 = vst.msk [vmem:[%s325 + $0xe0] sm:$0xff] %vm1555, %v5379
      %5412 = vst.msk [vmem:[%s325 + $0xe8] sm:$0xff] %vm1555, %v5380
      %5413 = vst.msk [vmem:[%s325 + $0xf0] sm:$0xff] %vm1555, %v5381
      %5414 = vst.msk [vmem:[%s325 + $0xf8] sm:$0xff] %vm1555, %v5382
      %p5415 = scmp.lt.s32.totalorder %s19, 1
      %s5416 = scalar_select %p5415, %s19, 1
      %s5417 = smul.addr %s5416, 32
      %s5418 = smul.addr %s5417, 8
      %s5419 = scalar_lea.vmem %s8, %s5418
      // Predicated region
      $region53: #{conv_rnn_stack_forward.1} parent=51 // pred_check
        %p5420 = pneg %p215
      $region54: #{conv_rnn_stack_forward.1} parent=51 // pred_check_branch
        %5422 = sbr.rel (%p5420) target = $region56
      $region55: #{conv_rnn_stack_forward.1} parent=51 // pred_region
        _
      $region56: #{conv_rnn_stack_forward.1} parent=51 // pred_fallthru
        _
    $region52: #{conv_rnn_stack_forward.1} parent=5 // pred_fallthru
      _
    %p5423 = scmp.le.s32.totalorder 2, %s14
    // Predicated region
    $region57: #{conv_rnn_stack_forward.1} parent=5 // pred_check
      %p5424 = pneg %p5423
    $region58: #{conv_rnn_stack_forward.1} parent=5 // pred_check_branch
      %5426 = sbr.rel (%p5424) target = $region60
    $region59: #{conv_rnn_stack_forward.1} parent=5 // pred_region
      %s5427 = ssub.s32 %s14, 2
      // Predicated region
      $region61: #{conv_rnn_stack_forward.1} parent=59 // pred_check
        %p5428 = pneg %p221
      $region62: #{conv_rnn_stack_forward.1} parent=59 // pred_check_branch
        %5430 = sbr.rel (%p5428) target = $region64
      $region63: #{conv_rnn_stack_forward.1} parent=59 // pred_region
        %p5431 = scmp.lt.s32.totalorder %s20, 1
        %s5432 = scalar_select %p5431, %s20, 1
        %s5433 = smul.addr %s5432, 32
        %s5434 = smul.addr %s5433, 8
        %s5435 = scalar_lea.vmem %s8, %s5434
      $region64: #{conv_rnn_stack_forward.1} parent=59 // pred_fallthru
        _
    $region60: #{conv_rnn_stack_forward.1} parent=5 // pred_fallthru
      _
  $region6: #{conv_rnn_stack_forward.1} parent=0 // loop_footer
    %s18 = sadd.s32 1, %s14
  $region7: #{conv_rnn_stack_forward.1} parent=0 // loop_footer_branch
    %13 = sbr.rel target = $region3
  $region8: #{conv_rnn_stack_forward.1} parent=0 // loop_exit
    _

</llo_original>
